<compile_context>
chip_gen: v5e
topology: v5e:2x2
jax: 0.10.0
libtpu: 0.0.40
codegen_flags: <defaults>
</compile_context>

<pallas_src>
import functools

import jax
import jax.numpy as jnp
from jax.experimental import pallas as pl
from jax.experimental.pallas import tpu as pltpu

GEMM_DTYPE = jnp.bfloat16            # MXU-native; accumulation stays f32


def _cdiv(a, b):
    return -(-a // b)


def _round_up(x, m):
    return _cdiv(x, m) * m


def _vmem_limit_bytes():
    # ~48 MiB on v7x (64 MiB physical), 96 MiB on v5e/v6e (128 MiB physical).
    try:
        info = pltpu.get_tpu_info()
        cap = getattr(info, "vmem_capacity_bytes", None)
        if cap:
            return int(min(96 * 1024 * 1024, cap * 3 // 4))
    except Exception:
        pass
    return 48 * 1024 * 1024


VMEM_LIMIT = _vmem_limit_bytes()


# ----------------------------- Pallas kernels --------------------------------

def _gemm_kernel(a_ref, b_ref, o_ref, *, epilogue):
    acc = jnp.dot(a_ref[...], b_ref[...], preferred_element_type=jnp.float32)
    if epilogue == "tanh":
        acc = jnp.tanh(acc)
    o_ref[...] = acc.astype(o_ref.dtype)


def _gemm_affine_kernel(a_ref, b_ref, scale_ref, shift_ref, o_ref, *,
                        relu, epilogue):
    # Fused BN-affine (+ReLU) prologue on the A tile, then MXU dot.
    a = a_ref[...].astype(jnp.float32) * scale_ref[...] + shift_ref[...]
    if relu:
        a = jnp.maximum(a, 0.0)
    acc = jnp.dot(a.astype(GEMM_DTYPE), b_ref[...],
                  preferred_element_type=jnp.float32)
    if epilogue == "tanh":
        acc = jnp.tanh(acc)
    o_ref[...] = acc.astype(o_ref.dtype)


def pallas_gemm(a, b, scale_row=None, shift_row=None, relu=False,
                epilogue=None, out_dtype=jnp.float32, tm_max=1024, tn_max=512):
    """(M, K) @ (K, C) with optional fused affine(+ReLU) prologue on A and a
    fused tanh epilogue.  Output columns padded to a multiple of 128 for
    lane-dense stores; padding sliced off in the wrapper."""
    M, K = a.shape
    Kb, C = b.shape
    assert K == Kb

    gm = _cdiv(M, tm_max)
    tm = _round_up(_cdiv(M, gm), 16)
    Mp = tm * gm
    Cp0 = _round_up(C, 128)
    gn = _cdiv(Cp0, tn_max)
    tn = _round_up(_cdiv(Cp0, gn), 128)
    Cp = tn * gn

    if Mp != M:
        a = jnp.pad(a, ((0, Mp - M), (0, 0)))
    if Cp != C:
        b = jnp.pad(b, ((0, 0), (0, Cp - C)))
    a = a.astype(GEMM_DTYPE)
    b = b.astype(GEMM_DTYPE)

    if scale_row is not None:
        kernel = functools.partial(_gemm_affine_kernel, relu=relu,
                                   epilogue=epilogue)
        in_specs = [pl.BlockSpec((tm, K), lambda i, j: (i, 0)),
                    pl.BlockSpec((K, tn), lambda i, j: (0, j)),
                    pl.BlockSpec((1, K), lambda i, j: (0, 0)),
                    pl.BlockSpec((1, K), lambda i, j: (0, 0))]
        args = (a, b, scale_row.astype(jnp.float32),
                shift_row.astype(jnp.float32))
    else:
        kernel = functools.partial(_gemm_kernel, epilogue=epilogue)
        in_specs = [pl.BlockSpec((tm, K), lambda i, j: (i, 0)),
                    pl.BlockSpec((K, tn), lambda i, j: (0, j))]
        args = (a, b)

    out = pl.pallas_call(
        kernel,
        out_shape=jax.ShapeDtypeStruct((Mp, Cp), out_dtype),
        grid_spec=pltpu.PrefetchScalarGridSpec(
            num_scalar_prefetch=0,
            grid=(Mp // tm, Cp // tn),
            in_specs=in_specs,
            out_specs=pl.BlockSpec((tm, tn), lambda i, j: (i, j))),
        compiler_params=pltpu.CompilerParams(
            dimension_semantics=("parallel", "parallel"),
            vmem_limit_bytes=VMEM_LIMIT),
    )(*args)
    return out[:M, :C]


def _colsums_kernel(x_ref, sum_ref, sq_ref, acc_s, acc_q):
    @pl.when(pl.program_id(0) == 0)
    def _():
        acc_s[...] = jnp.zeros_like(acc_s)
        acc_q[...] = jnp.zeros_like(acc_q)

    x = x_ref[...].astype(jnp.float32)
    tr, L = x.shape
    xs = x.reshape(tr // 8, 8, L)          # split of the sublane-major dim: free
    acc_s[...] += jnp.sum(xs, axis=0)      # per-sublane partials, VPU adds only
    acc_q[...] += jnp.sum(xs * xs, axis=0)

    @pl.when(pl.program_id(0) == pl.num_programs(0) - 1)
    def _():
        sum_ref[...] = jnp.sum(acc_s[...], axis=0, keepdims=True)
        sq_ref[...] = jnp.sum(acc_q[...], axis=0, keepdims=True)


def pallas_col_sums(x2, tr_max=1024):
    """Column-wise sum and sum-of-squares of an (R, L) matrix, tiled over R."""
    R, L = x2.shape
    gr = _cdiv(R, tr_max)
    tr = _round_up(_cdiv(R, gr), 8)
    Rp = tr * gr
    if Rp != R:
        x2 = jnp.pad(x2, ((0, Rp - R), (0, 0)))   # zero rows: neutral for sums
    s, sq = pl.pallas_call(
        _colsums_kernel,
        out_shape=(jax.ShapeDtypeStruct((1, L), jnp.float32),
                   jax.ShapeDtypeStruct((1, L), jnp.float32)),
        grid_spec=pltpu.PrefetchScalarGridSpec(
            num_scalar_prefetch=0,
            grid=(gr,),
            in_specs=[pl.BlockSpec((tr, L), lambda i: (i, 0))],
            out_specs=(pl.BlockSpec((1, L), lambda i: (0, 0)),
                       pl.BlockSpec((1, L), lambda i: (0, 0))),
            scratch_shapes=[pltpu.VMEM((8, L), jnp.float32),
                            pltpu.VMEM((8, L), jnp.float32)]),
        compiler_params=pltpu.CompilerParams(
            dimension_semantics=("arbitrary",),
            vmem_limit_bytes=VMEM_LIMIT),
    )(x2)
    return s, sq


# --------------------- sub-pixel ConvTranspose lowering -----------------------
# For stride=2, pad=1, K=4:  y[n, 2q_h+p_h, 2q_w+p_w, co] =
#   sum_{dh,dw,ci} x_pad[n, q_h+p_h+dh, q_w+p_w+dw, ci] * w[ci, co, 3-p_h-2dh, 3-p_w-2dw]
# i.e. a single GEMM over a 2x2 im2col (contraction 4*CI) with output columns
# (p_h, p_w, co), followed by a 4-slice pixel shuffle.

def _pixel_shuffle(cols, N, H, W, CO):
    c = cols.reshape(N, H + 1, W + 1, 2, 2, CO)
    rows = []
    for ph in (0, 1):
        phase_w = []
        for pw in (0, 1):
            phase_w.append(c[:, ph:ph + H, pw:pw + W, ph, pw, :])  # (N,H,W,CO)
        rows.append(jnp.stack(phase_w, axis=3))                    # (N,H,W,2,CO)
    y = jnp.stack(rows, axis=2)                                    # (N,H,2,W,2,CO)
    return y.reshape(N, 2 * H, 2 * W, CO)


def subpixel_convT_fused(y_prev, scale, shift, B, *, epilogue=None,
                         out_dtype=GEMM_DTYPE):
    """Fused  relu(scale*y_prev + shift)  ->  ConvTranspose2d(K=4, s=2, p=1).
    y_prev: (N, H, W, CI) pre-BN activation (bf16); B: (4*CI, 4*CO)."""
    N, H, W, CI = y_prev.shape
    CO = B.shape[1] // 4
    # Neutral pad value: affine+ReLU of it is exactly 0, matching the implicit
    # zero extension of the post-activation conv input at the border.
    neutral = jnp.where(scale == 0.0, 0.0,
                        -shift / jnp.where(scale == 0.0, 1.0, scale))
    xp = jnp.broadcast_to(neutral.astype(y_prev.dtype)[None, None, None, :],
                          (N, H + 2, W + 2, CI))
    xp = xp.at[:, 1:H + 1, 1:W + 1, :].set(y_prev)
    # 2x2 im2col over the (H+1, W+1) window-start grid; columns (dh, dw, ci).
    slabs = [xp[:, dh:dh + H + 1, dw:dw + W + 1, :]
             for dh in (0, 1) for dw in (0, 1)]
    A = jnp.concatenate(slabs, axis=-1).reshape(N * (H + 1) * (W + 1), 4 * CI)
    scale_row = jnp.tile(scale, 4)[None, :]
    shift_row = jnp.tile(shift, 4)[None, :]
    cols = pallas_gemm(A, B, scale_row=scale_row, shift_row=shift_row,
                       relu=True, epilogue=epilogue, out_dtype=out_dtype)
    return _pixel_shuffle(cols, N, H, W, CO)


def bn_scale_shift(y, gamma, beta, eps=1e-5):
    """Training-mode BatchNorm2d batch statistics (biased var) on NHWC y."""
    N, OH, OW, CO = y.shape
    y2 = y.reshape(N * OH, OW * CO)          # lane-dense view, free reshape
    s, sq = pallas_col_sums(y2)              # (1, OW*CO) each, f32
    cnt = float(N * OH * OW)
    s = s.reshape(OW, CO).sum(axis=0)
    sq = sq.reshape(OW, CO).sum(axis=0)
    mean = s / cnt
    var = jnp.maximum(sq / cnt - mean * mean, 0.0)
    scale = gamma * jax.lax.rsqrt(var + eps)
    shift = beta - mean * scale
    return scale, shift


# --------------------------- weight pre-packing --------------------------------

def torch_convT_weight_to_full_B(w):
    """(CI, CO, K, K) -> (CI, K*K*CO) for the stride-1, pad-0, 1x1-input layer."""
    CI, CO, K, _ = w.shape
    return w.transpose(0, 2, 3, 1).reshape(CI, K * K * CO)


def torch_convT_weight_to_subpixel_B(w):
    """(CI, CO, 4, 4) -> (4*CI, 4*CO) sub-pixel GEMM weight for stride=2, pad=1."""
    CI, CO = w.shape[0], w.shape[1]
    wrev = w[:, :, ::-1, ::-1].reshape(CI, CO, 2, 2, 2, 2)  # (ci,co,dh,ph,dw,pw)
    return wrev.transpose(2, 4, 0, 3, 5, 1).reshape(4 * CI, 4 * CO)


def init_params(key, in_channels, out_channels, hidden):
    keys = jax.random.split(key, 5)
    chans = [in_channels] + list(hidden)
    raw_ws = []
    blocks = []
    for i in range(4):
        w = 0.02 * jax.random.normal(keys[i], (chans[i], chans[i + 1], 4, 4),
                                     jnp.float32)
        raw_ws.append(w)
        B = (torch_convT_weight_to_full_B(w) if i == 0
             else torch_convT_weight_to_subpixel_B(w)).astype(GEMM_DTYPE)
        blocks.append({"B": B,
                       "gamma": jnp.ones((chans[i + 1],), jnp.float32),
                       "beta": jnp.zeros((chans[i + 1],), jnp.float32)})
    w_out = 0.02 * jax.random.normal(keys[4], (hidden[3], out_channels, 4, 4),
                                     jnp.float32)
    return {"blocks": blocks,
            "B_out": torch_convT_weight_to_subpixel_B(w_out).astype(GEMM_DTYPE),
            "raw": {"ws": raw_ws, "w_out": w_out}}   # f32 torch-layout, reference only


# ------------------------------- Generator ------------------------------------

def generator_forward(z, params):
    # PyTorch boundary: z is (N, CI, 1, 1).
    N, CI = z.shape[0], z.shape[1]
    blk0 = params["blocks"][0]
    h0 = blk0["gamma"].shape[0]

    # Layer 0: ConvTranspose2d(CI, h0, 4, 1, 0) on a 1x1 input == pure GEMM.
    y = pallas_gemm(z.reshape(N, CI).astype(GEMM_DTYPE), blk0["B"],
                    out_dtype=GEMM_DTYPE).reshape(N, 4, 4, h0)
    scale, shift = bn_scale_shift(y, blk0["gamma"], blk0["beta"])

    # Blocks 1..3: fused BN-affine+ReLU prologue -> sub-pixel ConvTranspose GEMM.
    for blk in params["blocks"][1:]:
        y = subpixel_convT_fused(y, scale, shift, blk["B"], out_dtype=GEMM_DTYPE)
        scale, shift = bn_scale_shift(y, blk["gamma"], blk["beta"])

    # Final ConvTranspose2d(h3, out_channels, 4, 2, 1) + fused Tanh epilogue.
    y = subpixel_convT_fused(y, scale, shift, params["B_out"],
                             epilogue="tanh", out_dtype=jnp.float32)
    return jnp.transpose(y, (0, 3, 1, 2))            # back to NCHW at boundary


# --------------------- pure-JAX f32 reference (testing only) -------------------

def _ref_conv_transpose2d_nhwc(x, w, stride, pad):
    N, H, W, CI = x.shape
    CO, K = w.shape[1], w.shape[2]
    B = w.transpose(0, 2, 3, 1).reshape(CI, K * K * CO)
    cols = (x.reshape(N * H * W, CI) @ B).reshape(N, H, W, K, K, CO)
    OH = (H - 1) * stride - 2 * pad + K
    OW = (W - 1) * stride - 2 * pad + K
    if H == 1 and W == 1 and stride == 1 and pad == 0:
        return cols.reshape(N, K, K, CO)
    zero = jnp.array(0.0, cols.dtype)
    out = None
    for kh in range(K):
        for kw in range(K):
            cfg = ((0, 0, 0), (kh, K - 1 - kh, stride - 1),
                   (kw, K - 1 - kw, stride - 1), (0, 0, 0))
            piece = jax.lax.pad(cols[:, :, :, kh, kw, :], zero, cfg)
            out = piece if out is None else out + piece
    return out[:, pad:pad + OH, pad:pad + OW, :]


def _ref_bn_relu_nhwc(y, gamma, beta, eps=1e-5):
    mean = y.mean(axis=(0, 1, 2))
    var = y.var(axis=(0, 1, 2))
    yn = (y - mean) * jax.lax.rsqrt(var + eps)
    return jnp.maximum(yn * gamma + beta, 0.0)


def ref_forward(z, raw):
    N, CI = z.shape[0], z.shape[1]
    x = z.reshape(N, 1, 1, CI).astype(jnp.float32)
    for w, blk, (s, p) in zip(raw["ws"],
                              [(1, 0), (2, 1), (2, 1), (2, 1)],
                              [(1, 0), (2, 1), (2, 1), (2, 1)]):
        x = _ref_conv_transpose2d_nhwc(x, w, blk[0], blk[1])
        x = _ref_bn_relu_nhwc(x, jnp.ones((x.shape[-1],)), jnp.zeros((x.shape[-1],)))
    y = jnp.tanh(_ref_conv_transpose2d_nhwc(x, raw["w_out"], 2, 1))
    return jnp.transpose(y, (0, 3, 1, 2))


if __name__ == "__main__":
    config = {"in_channels": 4, "out_channels": 3, "hidden_dims": [32, 16, 16, 8]}
    key = jax.random.PRNGKey(0)
    kz, kp = jax.random.split(key)
    # DCGAN latent: (N, in_channels, 1, 1)
    z = jax.random.normal(kz, (2, config["in_channels"], 1, 1), jnp.float32)
    params = init_params(kp, config["in_channels"], config["out_channels"],
                         config["hidden_dims"])

    fwd = jax.jit(generator_forward)
    out = jax.block_until_ready(fwd(z, params))
    assert out.shape == (2, config["out_channels"], 64, 64), out.shape
    assert bool(jnp.all(jnp.isfinite(out)))
    assert bool(jnp.all(jnp.abs(out) <= 1.0 + 1e-6))

    # Cross-check against an independent pure-JAX f32 direct lowering
    # (generous tolerance: activations/weights are bf16 on the Pallas path).
    ref = ref_forward(z, params["raw"])
    assert ref.shape == out.shape
    max_diff = float(jnp.max(jnp.abs(out.astype(jnp.float32) - ref)))
    assert max_diff < 0.2, max_diff

    print("KERNEL_OK")
</pallas_src>

<mosaic_0001>
module attributes {stable_mosaic.version = 11 : i64} {
  func.func @_gemm_kernel(%arg0: i32, %arg1: i32, %arg2: memref<16x4xbf16, #tpu.memory_space<vmem>>, %arg3: memref<4x512xbf16, #tpu.memory_space<vmem>>, %arg4: memref<16x512xbf16, #tpu.memory_space<vmem>>) attributes {dimension_semantics = [#tpu.dimension_semantics<parallel>, #tpu.dimension_semantics<parallel>], iteration_bounds = array<i64: 1, 1>, scalar_prefetch = 0 : i64, scratch_operands = 0 : i64, tpu.core_type = #tpu.core_type<tc>, window_params = [{transform_indices = @transform_0, window_bounds = array<i64: 16, 4>}, {transform_indices = @transform_1, window_bounds = array<i64: 4, 512>}, {transform_indices = @transform_2, window_bounds = array<i64: 16, 512>}]} {
    %c0 = arith.constant 0 : index
    %c0_0 = arith.constant 0 : index
    %0 = vector.load %arg2[%c0, %c0_0] : memref<16x4xbf16, #tpu.memory_space<vmem>>, vector<16x4xbf16>
    %c0_1 = arith.constant 0 : index
    %c0_2 = arith.constant 0 : index
    %1 = vector.load %arg3[%c0_1, %c0_2] : memref<4x512xbf16, #tpu.memory_space<vmem>>, vector<4x512xbf16>
    %cst = arith.constant dense<0.000000e+00> : vector<16x512xf32>
    %2 = tpu.matmul %0, %1, %cst {dimension_numbers = #tpu.dot_dimension_numbers<[1], [0], [0], [1], [0, 0, 1, 1], [], []>} : vector<16x4xbf16>, vector<4x512xbf16>, vector<16x512xf32> -> vector<16x512xf32>
    %3 = arith.truncf %2 : vector<16x512xf32> to vector<16x512xbf16>
    %c0_3 = arith.constant 0 : index
    %c0_4 = arith.constant 0 : index
    %4 = vector.load %arg4[%c0_3, %c0_4] : memref<16x512xbf16, #tpu.memory_space<vmem>>, vector<16x512xbf16>
    tpu.vector_store %arg4[%c0_3, %c0_4], %3 {strides = array<i32>} : memref<16x512xbf16, #tpu.memory_space<vmem>>, vector<16x512xbf16>,
    return
  }
  func.func @transform_0(%arg0: i32, %arg1: i32) -> (i32, i32) {
    %c0_i32 = arith.constant 0 : i32
    %c0_i32_0 = arith.constant 0 : i32
    return %arg0, %c0_i32 : i32, i32
  }
  func.func @transform_1(%arg0: i32, %arg1: i32) -> (i32, i32) {
    %c0_i32 = arith.constant 0 : i32
    %c0_i32_0 = arith.constant 0 : i32
    return %c0_i32, %arg1 : i32, i32
  }
  func.func @transform_2(%arg0: i32, %arg1: i32) -> (i32, i32) {
    %c0_i32 = arith.constant 0 : i32
    return %arg0, %arg1 : i32, i32
  }
}

module attributes {stable_mosaic.version = 11 : i64} {
  func.func @_colsums_kernel(%arg0: i32, %arg1: memref<8x128xbf16, #tpu.memory_space<vmem>>, %arg2: memref<1x128xf32, #tpu.memory_space<vmem>>, %arg3: memref<1x128xf32, #tpu.memory_space<vmem>>, %arg4: memref<8x128xf32, #tpu.memory_space<vmem>>, %arg5: memref<8x128xf32, #tpu.memory_space<vmem>>) attributes {dimension_semantics = [#tpu.dimension_semantics<arbitrary>], iteration_bounds = array<i64: 1>, scalar_prefetch = 0 : i64, scratch_operands = 2 : i64, tpu.core_type = #tpu.core_type<tc>, window_params = [{transform_indices = @transform_0, window_bounds = array<i64: 8, 128>}, {pipeline_mode = #tpu.pipeline_mode<synchronous>, transform_indices = @transform_1, window_bounds = array<i64: 1, 128>}, {pipeline_mode = #tpu.pipeline_mode<synchronous>, transform_indices = @transform_2, window_bounds = array<i64: 1, 128>}]} {
    %c0_i32 = arith.constant 0 : i32
    %0 = arith.cmpi eq, %arg0, %c0_i32 : i32
    %1 = arith.extui %0 : i1 to i32
    %c0_i32_0 = arith.constant 0 : i32
    %2 = arith.cmpi ne, %1, %c0_i32_0 : i32
    scf.if %2 {
      %cst_13 = arith.constant 0.000000e+00 : f32
      %18 = vector.broadcast %cst_13 : f32 to vector<8x128xf32>
      %c0_14 = arith.constant 0 : index
      %c0_15 = arith.constant 0 : index
      %19 = vector.load %arg4[%c0_14, %c0_15] : memref<8x128xf32, #tpu.memory_space<vmem>>, vector<8x128xf32>
      tpu.vector_store %arg4[%c0_14, %c0_15], %18 {strides = array<i32>} : memref<8x128xf32, #tpu.memory_space<vmem>>, vector<8x128xf32>,
      %cst_16 = arith.constant 0.000000e+00 : f32
      %20 = vector.broadcast %cst_16 : f32 to vector<8x128xf32>
      %c0_17 = arith.constant 0 : index
      %c0_18 = arith.constant 0 : index
      %21 = vector.load %arg5[%c0_17, %c0_18] : memref<8x128xf32, #tpu.memory_space<vmem>>, vector<8x128xf32>
      tpu.vector_store %arg5[%c0_17, %c0_18], %20 {strides = array<i32>} : memref<8x128xf32, #tpu.memory_space<vmem>>, vector<8x128xf32>,
    } else {
    }
    %c0 = arith.constant 0 : index
    %c0_1 = arith.constant 0 : index
    %3 = vector.load %arg1[%c0, %c0_1] : memref<8x128xbf16, #tpu.memory_space<vmem>>, vector<8x128xbf16>
    %4 = arith.extf %3 : vector<8x128xbf16> to vector<8x128xf32>
    %5 = vector.shape_cast %4 : vector<8x128xf32> to vector<1x8x128xf32>
    %c0_2 = arith.constant 0 : index
    %c0_3 = arith.constant 0 : index
    %6 = vector.load %arg4[%c0_2, %c0_3] : memref<8x128xf32, #tpu.memory_space<vmem>>, vector<8x128xf32>
    %cst = arith.constant dense<0.000000e+00> : vector<8x128xf32>
    %7 = vector.multi_reduction <add>, %5, %cst [0] : vector<1x8x128xf32> to vector<8x128xf32>
    %8 = arith.addf %6, %7 : vector<8x128xf32>
    %c0_4 = arith.constant 0 : index
    %c0_5 = arith.constant 0 : index
    %9 = vector.load %arg4[%c0_4, %c0_5] : memref<8x128xf32, #tpu.memory_space<vmem>>, vector<8x128xf32>
    tpu.vector_store %arg4[%c0_4, %c0_5], %8 {strides = array<i32>} : memref<8x128xf32, #tpu.memory_space<vmem>>, vector<8x128xf32>,
    %c0_6 = arith.constant 0 : index
    %c0_7 = arith.constant 0 : index
    %10 = vector.load %arg5[%c0_6, %c0_7] : memref<8x128xf32, #tpu.memory_space<vmem>>, vector<8x128xf32>
    %11 = arith.mulf %5, %5 : vector<1x8x128xf32>
    %cst_8 = arith.constant dense<0.000000e+00> : vector<8x128xf32>
    %12 = vector.multi_reduction <add>, %11, %cst_8 [0] : vector<1x8x128xf32> to vector<8x128xf32>
    %13 = arith.addf %10, %12 : vector<8x128xf32>
    %c0_9 = arith.constant 0 : index
    %c0_10 = arith.constant 0 : index
    %14 = vector.load %arg5[%c0_9, %c0_10] : memref<8x128xf32, #tpu.memory_space<vmem>>, vector<8x128xf32>
    tpu.vector_store %arg5[%c0_9, %c0_10], %13 {strides = array<i32>} : memref<8x128xf32, #tpu.memory_space<vmem>>, vector<8x128xf32>,
    %c0_i32_11 = arith.constant 0 : i32
    %15 = arith.cmpi eq, %arg0, %c0_i32_11 : i32
    %16 = arith.extui %15 : i1 to i32
    %c0_i32_12 = arith.constant 0 : i32
    %17 = arith.cmpi ne, %16, %c0_i32_12 : i32
    scf.if %17 {
      %c0_13 = arith.constant 0 : index
      %c0_14 = arith.constant 0 : index
      %18 = vector.load %arg4[%c0_13, %c0_14] : memref<8x128xf32, #tpu.memory_space<vmem>>, vector<8x128xf32>
      %cst_15 = arith.constant dense<0.000000e+00> : vector<128xf32>
      %19 = vector.multi_reduction <add>, %18, %cst_15 [0] : vector<8x128xf32> to vector<128xf32>
      %20 = vector.shape_cast %19 : vector<128xf32> to vector<1x128xf32>
      %c0_16 = arith.constant 0 : index
      %c0_17 = arith.constant 0 : index
      %21 = vector.load %arg2[%c0_16, %c0_17] : memref<1x128xf32, #tpu.memory_space<vmem>>, vector<1x128xf32>
      tpu.vector_store %arg2[%c0_16, %c0_17], %20 {strides = array<i32>} : memref<1x128xf32, #tpu.memory_space<vmem>>, vector<1x128xf32>,
      %c0_18 = arith.constant 0 : index
      %c0_19 = arith.constant 0 : index
      %22 = vector.load %arg5[%c0_18, %c0_19] : memref<8x128xf32, #tpu.memory_space<vmem>>, vector<8x128xf32>
      %cst_20 = arith.constant dense<0.000000e+00> : vector<128xf32>
      %23 = vector.multi_reduction <add>, %22, %cst_20 [0] : vector<8x128xf32> to vector<128xf32>
      %24 = vector.shape_cast %23 : vector<128xf32> to vector<1x128xf32>
      %c0_21 = arith.constant 0 : index
      %c0_22 = arith.constant 0 : index
      %25 = vector.load %arg3[%c0_21, %c0_22] : memref<1x128xf32, #tpu.memory_space<vmem>>, vector<1x128xf32>
      tpu.vector_store %arg3[%c0_21, %c0_22], %24 {strides = array<i32>} : memref<1x128xf32, #tpu.memory_space<vmem>>, vector<1x128xf32>,
    } else {
    }
    return
  }
  func.func @transform_0(%arg0: i32) -> (i32, i32) {
    %c0_i32 = arith.constant 0 : i32
    %c0_i32_0 = arith.constant 0 : i32
    return %arg0, %c0_i32 : i32, i32
  }
  func.func @transform_1(%arg0: i32) -> (i32, i32) {
    %c0_i32 = arith.constant 0 : i32
    %c0_i32_0 = arith.constant 0 : i32
    %c0_i32_1 = arith.constant 0 : i32
    return %c0_i32, %c0_i32_0 : i32, i32
  }
  func.func @transform_2(%arg0: i32) -> (i32, i32) {
    %c0_i32 = arith.constant 0 : i32
    %c0_i32_0 = arith.constant 0 : i32
    %c0_i32_1 = arith.constant 0 : i32
    return %c0_i32, %c0_i32_0 : i32, i32
  }
}

module attributes {stable_mosaic.version = 11 : i64} {
  func.func @_gemm_affine_kernel(%arg0: i32, %arg1: i32, %arg2: memref<64x128xbf16, #tpu.memory_space<vmem>>, %arg3: memref<128x128xbf16, #tpu.memory_space<vmem>>, %arg4: memref<1x128xf32, #tpu.memory_space<vmem>>, %arg5: memref<1x128xf32, #tpu.memory_space<vmem>>, %arg6: memref<64x128xbf16, #tpu.memory_space<vmem>>) attributes {dimension_semantics = [#tpu.dimension_semantics<parallel>, #tpu.dimension_semantics<parallel>], iteration_bounds = array<i64: 1, 1>, scalar_prefetch = 0 : i64, scratch_operands = 0 : i64, tpu.core_type = #tpu.core_type<tc>, window_params = [{transform_indices = @transform_0, window_bounds = array<i64: 64, 128>}, {transform_indices = @transform_1, window_bounds = array<i64: 128, 128>}, {pipeline_mode = #tpu.pipeline_mode<synchronous>, transform_indices = @transform_2, window_bounds = array<i64: 1, 128>}, {pipeline_mode = #tpu.pipeline_mode<synchronous>, transform_indices = @transform_3, window_bounds = array<i64: 1, 128>}, {transform_indices = @transform_4, window_bounds = array<i64: 64, 128>}]} {
    %c0 = arith.constant 0 : index
    %c0_0 = arith.constant 0 : index
    %0 = vector.load %arg2[%c0, %c0_0] : memref<64x128xbf16, #tpu.memory_space<vmem>>, vector<64x128xbf16>
    %1 = arith.extf %0 : vector<64x128xbf16> to vector<64x128xf32>
    %c0_1 = arith.constant 0 : index
    %c0_2 = arith.constant 0 : index
    %2 = vector.load %arg4[%c0_1, %c0_2] : memref<1x128xf32, #tpu.memory_space<vmem>>, vector<1x128xf32>
    %3 = vector.broadcast %2 : vector<1x128xf32> to vector<64x128xf32>
    %4 = arith.mulf %1, %3 : vector<64x128xf32>
    %c0_3 = arith.constant 0 : index
    %c0_4 = arith.constant 0 : index
    %5 = vector.load %arg5[%c0_3, %c0_4] : memref<1x128xf32, #tpu.memory_space<vmem>>, vector<1x128xf32>
    %6 = vector.broadcast %5 : vector<1x128xf32> to vector<64x128xf32>
    %7 = arith.addf %4, %6 : vector<64x128xf32>
    %cst = arith.constant 0.000000e+00 : f32
    %8 = vector.broadcast %cst : f32 to vector<64x128xf32>
    %9 = arith.maximumf %7, %8 : vector<64x128xf32>
    %10 = arith.truncf %9 : vector<64x128xf32> to vector<64x128xbf16>
    %c0_5 = arith.constant 0 : index
    %c0_6 = arith.constant 0 : index
    %11 = vector.load %arg3[%c0_5, %c0_6] : memref<128x128xbf16, #tpu.memory_space<vmem>>, vector<128x128xbf16>
    %cst_7 = arith.constant dense<0.000000e+00> : vector<64x128xf32>
    %12 = tpu.matmul %10, %11, %cst_7 {dimension_numbers = #tpu.dot_dimension_numbers<[1], [0], [0], [1], [0, 0, 1, 1], [], []>} : vector<64x128xbf16>, vector<128x128xbf16>, vector<64x128xf32> -> vector<64x128xf32>
    %13 = arith.truncf %12 : vector<64x128xf32> to vector<64x128xbf16>
    %c0_8 = arith.constant 0 : index
    %c0_9 = arith.constant 0 : index
    %14 = vector.load %arg6[%c0_8, %c0_9] : memref<64x128xbf16, #tpu.memory_space<vmem>>, vector<64x128xbf16>
    tpu.vector_store %arg6[%c0_8, %c0_9], %13 {strides = array<i32>} : memref<64x128xbf16, #tpu.memory_space<vmem>>, vector<64x128xbf16>,
    return
  }
  func.func @transform_0(%arg0: i32, %arg1: i32) -> (i32, i32) {
    %c0_i32 = arith.constant 0 : i32
    %c0_i32_0 = arith.constant 0 : i32
    return %arg0, %c0_i32 : i32, i32
  }
  func.func @transform_1(%arg0: i32, %arg1: i32) -> (i32, i32) {
    %c0_i32 = arith.constant 0 : i32
    %c0_i32_0 = arith.constant 0 : i32
    return %c0_i32, %arg1 : i32, i32
  }
  func.func @transform_2(%arg0: i32, %arg1: i32) -> (i32, i32) {
    %c0_i32 = arith.constant 0 : i32
    %c0_i32_0 = arith.constant 0 : i32
    %c0_i32_1 = arith.constant 0 : i32
    return %c0_i32, %c0_i32_0 : i32, i32
  }
  func.func @transform_3(%arg0: i32, %arg1: i32) -> (i32, i32) {
    %c0_i32 = arith.constant 0 : i32
    %c0_i32_0 = arith.constant 0 : i32
    %c0_i32_1 = arith.constant 0 : i32
    return %c0_i32, %c0_i32_0 : i32, i32
  }
  func.func @transform_4(%arg0: i32, %arg1: i32) -> (i32, i32) {
    %c0_i32 = arith.constant 0 : i32
    return %arg0, %arg1 : i32, i32
  }
}

module attributes {stable_mosaic.version = 11 : i64} {
  func.func @_colsums_kernel(%arg0: i32, %arg1: memref<16x128xbf16, #tpu.memory_space<vmem>>, %arg2: memref<1x128xf32, #tpu.memory_space<vmem>>, %arg3: memref<1x128xf32, #tpu.memory_space<vmem>>, %arg4: memref<8x128xf32, #tpu.memory_space<vmem>>, %arg5: memref<8x128xf32, #tpu.memory_space<vmem>>) attributes {dimension_semantics = [#tpu.dimension_semantics<arbitrary>], iteration_bounds = array<i64: 1>, scalar_prefetch = 0 : i64, scratch_operands = 2 : i64, tpu.core_type = #tpu.core_type<tc>, window_params = [{transform_indices = @transform_0, window_bounds = array<i64: 16, 128>}, {pipeline_mode = #tpu.pipeline_mode<synchronous>, transform_indices = @transform_1, window_bounds = array<i64: 1, 128>}, {pipeline_mode = #tpu.pipeline_mode<synchronous>, transform_indices = @transform_2, window_bounds = array<i64: 1, 128>}]} {
    %c0_i32 = arith.constant 0 : i32
    %0 = arith.cmpi eq, %arg0, %c0_i32 : i32
    %1 = arith.extui %0 : i1 to i32
    %c0_i32_0 = arith.constant 0 : i32
    %2 = arith.cmpi ne, %1, %c0_i32_0 : i32
    scf.if %2 {
      %cst_13 = arith.constant 0.000000e+00 : f32
      %18 = vector.broadcast %cst_13 : f32 to vector<8x128xf32>
      %c0_14 = arith.constant 0 : index
      %c0_15 = arith.constant 0 : index
      %19 = vector.load %arg4[%c0_14, %c0_15] : memref<8x128xf32, #tpu.memory_space<vmem>>, vector<8x128xf32>
      tpu.vector_store %arg4[%c0_14, %c0_15], %18 {strides = array<i32>} : memref<8x128xf32, #tpu.memory_space<vmem>>, vector<8x128xf32>,
      %cst_16 = arith.constant 0.000000e+00 : f32
      %20 = vector.broadcast %cst_16 : f32 to vector<8x128xf32>
      %c0_17 = arith.constant 0 : index
      %c0_18 = arith.constant 0 : index
      %21 = vector.load %arg5[%c0_17, %c0_18] : memref<8x128xf32, #tpu.memory_space<vmem>>, vector<8x128xf32>
      tpu.vector_store %arg5[%c0_17, %c0_18], %20 {strides = array<i32>} : memref<8x128xf32, #tpu.memory_space<vmem>>, vector<8x128xf32>,
    } else {
    }
    %c0 = arith.constant 0 : index
    %c0_1 = arith.constant 0 : index
    %3 = vector.load %arg1[%c0, %c0_1] : memref<16x128xbf16, #tpu.memory_space<vmem>>, vector<16x128xbf16>
    %4 = arith.extf %3 : vector<16x128xbf16> to vector<16x128xf32>
    %5 = vector.shape_cast %4 : vector<16x128xf32> to vector<2x8x128xf32>
    %c0_2 = arith.constant 0 : index
    %c0_3 = arith.constant 0 : index
    %6 = vector.load %arg4[%c0_2, %c0_3] : memref<8x128xf32, #tpu.memory_space<vmem>>, vector<8x128xf32>
    %cst = arith.constant dense<0.000000e+00> : vector<8x128xf32>
    %7 = vector.multi_reduction <add>, %5, %cst [0] : vector<2x8x128xf32> to vector<8x128xf32>
    %8 = arith.addf %6, %7 : vector<8x128xf32>
    %c0_4 = arith.constant 0 : index
    %c0_5 = arith.constant 0 : index
    %9 = vector.load %arg4[%c0_4, %c0_5] : memref<8x128xf32, #tpu.memory_space<vmem>>, vector<8x128xf32>
    tpu.vector_store %arg4[%c0_4, %c0_5], %8 {strides = array<i32>} : memref<8x128xf32, #tpu.memory_space<vmem>>, vector<8x128xf32>,
    %c0_6 = arith.constant 0 : index
    %c0_7 = arith.constant 0 : index
    %10 = vector.load %arg5[%c0_6, %c0_7] : memref<8x128xf32, #tpu.memory_space<vmem>>, vector<8x128xf32>
    %11 = arith.mulf %5, %5 : vector<2x8x128xf32>
    %cst_8 = arith.constant dense<0.000000e+00> : vector<8x128xf32>
    %12 = vector.multi_reduction <add>, %11, %cst_8 [0] : vector<2x8x128xf32> to vector<8x128xf32>
    %13 = arith.addf %10, %12 : vector<8x128xf32>
    %c0_9 = arith.constant 0 : index
    %c0_10 = arith.constant 0 : index
    %14 = vector.load %arg5[%c0_9, %c0_10] : memref<8x128xf32, #tpu.memory_space<vmem>>, vector<8x128xf32>
    tpu.vector_store %arg5[%c0_9, %c0_10], %13 {strides = array<i32>} : memref<8x128xf32, #tpu.memory_space<vmem>>, vector<8x128xf32>,
    %c0_i32_11 = arith.constant 0 : i32
    %15 = arith.cmpi eq, %arg0, %c0_i32_11 : i32
    %16 = arith.extui %15 : i1 to i32
    %c0_i32_12 = arith.constant 0 : i32
    %17 = arith.cmpi ne, %16, %c0_i32_12 : i32
    scf.if %17 {
      %c0_13 = arith.constant 0 : index
      %c0_14 = arith.constant 0 : index
      %18 = vector.load %arg4[%c0_13, %c0_14] : memref<8x128xf32, #tpu.memory_space<vmem>>, vector<8x128xf32>
      %cst_15 = arith.constant dense<0.000000e+00> : vector<128xf32>
      %19 = vector.multi_reduction <add>, %18, %cst_15 [0] : vector<8x128xf32> to vector<128xf32>
      %20 = vector.shape_cast %19 : vector<128xf32> to vector<1x128xf32>
      %c0_16 = arith.constant 0 : index
      %c0_17 = arith.constant 0 : index
      %21 = vector.load %arg2[%c0_16, %c0_17] : memref<1x128xf32, #tpu.memory_space<vmem>>, vector<1x128xf32>
      tpu.vector_store %arg2[%c0_16, %c0_17], %20 {strides = array<i32>} : memref<1x128xf32, #tpu.memory_space<vmem>>, vector<1x128xf32>,
      %c0_18 = arith.constant 0 : index
      %c0_19 = arith.constant 0 : index
      %22 = vector.load %arg5[%c0_18, %c0_19] : memref<8x128xf32, #tpu.memory_space<vmem>>, vector<8x128xf32>
      %cst_20 = arith.constant dense<0.000000e+00> : vector<128xf32>
      %23 = vector.multi_reduction <add>, %22, %cst_20 [0] : vector<8x128xf32> to vector<128xf32>
      %24 = vector.shape_cast %23 : vector<128xf32> to vector<1x128xf32>
      %c0_21 = arith.constant 0 : index
      %c0_22 = arith.constant 0 : index
      %25 = vector.load %arg3[%c0_21, %c0_22] : memref<1x128xf32, #tpu.memory_space<vmem>>, vector<1x128xf32>
      tpu.vector_store %arg3[%c0_21, %c0_22], %24 {strides = array<i32>} : memref<1x128xf32, #tpu.memory_space<vmem>>, vector<1x128xf32>,
    } else {
    }
    return
  }
  func.func @transform_0(%arg0: i32) -> (i32, i32) {
    %c0_i32 = arith.constant 0 : i32
    %c0_i32_0 = arith.constant 0 : i32
    return %arg0, %c0_i32 : i32, i32
  }
  func.func @transform_1(%arg0: i32) -> (i32, i32) {
    %c0_i32 = arith.constant 0 : i32
    %c0_i32_0 = arith.constant 0 : i32
    %c0_i32_1 = arith.constant 0 : i32
    return %c0_i32, %c0_i32_0 : i32, i32
  }
  func.func @transform_2(%arg0: i32) -> (i32, i32) {
    %c0_i32 = arith.constant 0 : i32
    %c0_i32_0 = arith.constant 0 : i32
    %c0_i32_1 = arith.constant 0 : i32
    return %c0_i32, %c0_i32_0 : i32, i32
  }
}

module attributes {stable_mosaic.version = 11 : i64} {
  func.func @_gemm_affine_kernel(%arg0: i32, %arg1: i32, %arg2: memref<176x64xbf16, #tpu.memory_space<vmem>>, %arg3: memref<64x128xbf16, #tpu.memory_space<vmem>>, %arg4: memref<1x64xf32, #tpu.memory_space<vmem>>, %arg5: memref<1x64xf32, #tpu.memory_space<vmem>>, %arg6: memref<176x128xbf16, #tpu.memory_space<vmem>>) attributes {dimension_semantics = [#tpu.dimension_semantics<parallel>, #tpu.dimension_semantics<parallel>], iteration_bounds = array<i64: 1, 1>, scalar_prefetch = 0 : i64, scratch_operands = 0 : i64, tpu.core_type = #tpu.core_type<tc>, window_params = [{transform_indices = @transform_0, window_bounds = array<i64: 176, 64>}, {transform_indices = @transform_1, window_bounds = array<i64: 64, 128>}, {pipeline_mode = #tpu.pipeline_mode<synchronous>, transform_indices = @transform_2, window_bounds = array<i64: 1, 64>}, {pipeline_mode = #tpu.pipeline_mode<synchronous>, transform_indices = @transform_3, window_bounds = array<i64: 1, 64>}, {transform_indices = @transform_4, window_bounds = array<i64: 176, 128>}]} {
    %c0 = arith.constant 0 : index
    %c0_0 = arith.constant 0 : index
    %0 = vector.load %arg2[%c0, %c0_0] : memref<176x64xbf16, #tpu.memory_space<vmem>>, vector<176x64xbf16>
    %1 = arith.extf %0 : vector<176x64xbf16> to vector<176x64xf32>
    %c0_1 = arith.constant 0 : index
    %c0_2 = arith.constant 0 : index
    %2 = vector.load %arg4[%c0_1, %c0_2] : memref<1x64xf32, #tpu.memory_space<vmem>>, vector<1x64xf32>
    %3 = vector.broadcast %2 : vector<1x64xf32> to vector<176x64xf32>
    %4 = arith.mulf %1, %3 : vector<176x64xf32>
    %c0_3 = arith.constant 0 : index
    %c0_4 = arith.constant 0 : index
    %5 = vector.load %arg5[%c0_3, %c0_4] : memref<1x64xf32, #tpu.memory_space<vmem>>, vector<1x64xf32>
    %6 = vector.broadcast %5 : vector<1x64xf32> to vector<176x64xf32>
    %7 = arith.addf %4, %6 : vector<176x64xf32>
    %cst = arith.constant 0.000000e+00 : f32
    %8 = vector.broadcast %cst : f32 to vector<176x64xf32>
    %9 = arith.maximumf %7, %8 : vector<176x64xf32>
    %10 = arith.truncf %9 : vector<176x64xf32> to vector<176x64xbf16>
    %c0_5 = arith.constant 0 : index
    %c0_6 = arith.constant 0 : index
    %11 = vector.load %arg3[%c0_5, %c0_6] : memref<64x128xbf16, #tpu.memory_space<vmem>>, vector<64x128xbf16>
    %cst_7 = arith.constant dense<0.000000e+00> : vector<176x128xf32>
    %12 = tpu.matmul %10, %11, %cst_7 {dimension_numbers = #tpu.dot_dimension_numbers<[1], [0], [0], [1], [0, 0, 1, 1], [], []>} : vector<176x64xbf16>, vector<64x128xbf16>, vector<176x128xf32> -> vector<176x128xf32>
    %13 = arith.truncf %12 : vector<176x128xf32> to vector<176x128xbf16>
    %c0_8 = arith.constant 0 : index
    %c0_9 = arith.constant 0 : index
    %14 = vector.load %arg6[%c0_8, %c0_9] : memref<176x128xbf16, #tpu.memory_space<vmem>>, vector<176x128xbf16>
    tpu.vector_store %arg6[%c0_8, %c0_9], %13 {strides = array<i32>} : memref<176x128xbf16, #tpu.memory_space<vmem>>, vector<176x128xbf16>,
    return
  }
  func.func @transform_0(%arg0: i32, %arg1: i32) -> (i32, i32) {
    %c0_i32 = arith.constant 0 : i32
    %c0_i32_0 = arith.constant 0 : i32
    return %arg0, %c0_i32 : i32, i32
  }
  func.func @transform_1(%arg0: i32, %arg1: i32) -> (i32, i32) {
    %c0_i32 = arith.constant 0 : i32
    %c0_i32_0 = arith.constant 0 : i32
    return %c0_i32, %arg1 : i32, i32
  }
  func.func @transform_2(%arg0: i32, %arg1: i32) -> (i32, i32) {
    %c0_i32 = arith.constant 0 : i32
    %c0_i32_0 = arith.constant 0 : i32
    %c0_i32_1 = arith.constant 0 : i32
    return %c0_i32, %c0_i32_0 : i32, i32
  }
  func.func @transform_3(%arg0: i32, %arg1: i32) -> (i32, i32) {
    %c0_i32 = arith.constant 0 : i32
    %c0_i32_0 = arith.constant 0 : i32
    %c0_i32_1 = arith.constant 0 : i32
    return %c0_i32, %c0_i32_0 : i32, i32
  }
  func.func @transform_4(%arg0: i32, %arg1: i32) -> (i32, i32) {
    %c0_i32 = arith.constant 0 : i32
    return %arg0, %arg1 : i32, i32
  }
}

module attributes {stable_mosaic.version = 11 : i64} {
  func.func @_colsums_kernel(%arg0: i32, %arg1: memref<32x256xbf16, #tpu.memory_space<vmem>>, %arg2: memref<1x256xf32, #tpu.memory_space<vmem>>, %arg3: memref<1x256xf32, #tpu.memory_space<vmem>>, %arg4: memref<8x256xf32, #tpu.memory_space<vmem>>, %arg5: memref<8x256xf32, #tpu.memory_space<vmem>>) attributes {dimension_semantics = [#tpu.dimension_semantics<arbitrary>], iteration_bounds = array<i64: 1>, scalar_prefetch = 0 : i64, scratch_operands = 2 : i64, tpu.core_type = #tpu.core_type<tc>, window_params = [{transform_indices = @transform_0, window_bounds = array<i64: 32, 256>}, {pipeline_mode = #tpu.pipeline_mode<synchronous>, transform_indices = @transform_1, window_bounds = array<i64: 1, 256>}, {pipeline_mode = #tpu.pipeline_mode<synchronous>, transform_indices = @transform_2, window_bounds = array<i64: 1, 256>}]} {
    %c0_i32 = arith.constant 0 : i32
    %0 = arith.cmpi eq, %arg0, %c0_i32 : i32
    %1 = arith.extui %0 : i1 to i32
    %c0_i32_0 = arith.constant 0 : i32
    %2 = arith.cmpi ne, %1, %c0_i32_0 : i32
    scf.if %2 {
      %cst_13 = arith.constant 0.000000e+00 : f32
      %18 = vector.broadcast %cst_13 : f32 to vector<8x256xf32>
      %c0_14 = arith.constant 0 : index
      %c0_15 = arith.constant 0 : index
      %19 = vector.load %arg4[%c0_14, %c0_15] : memref<8x256xf32, #tpu.memory_space<vmem>>, vector<8x256xf32>
      tpu.vector_store %arg4[%c0_14, %c0_15], %18 {strides = array<i32>} : memref<8x256xf32, #tpu.memory_space<vmem>>, vector<8x256xf32>,
      %cst_16 = arith.constant 0.000000e+00 : f32
      %20 = vector.broadcast %cst_16 : f32 to vector<8x256xf32>
      %c0_17 = arith.constant 0 : index
      %c0_18 = arith.constant 0 : index
      %21 = vector.load %arg5[%c0_17, %c0_18] : memref<8x256xf32, #tpu.memory_space<vmem>>, vector<8x256xf32>
      tpu.vector_store %arg5[%c0_17, %c0_18], %20 {strides = array<i32>} : memref<8x256xf32, #tpu.memory_space<vmem>>, vector<8x256xf32>,
    } else {
    }
    %c0 = arith.constant 0 : index
    %c0_1 = arith.constant 0 : index
    %3 = vector.load %arg1[%c0, %c0_1] : memref<32x256xbf16, #tpu.memory_space<vmem>>, vector<32x256xbf16>
    %4 = arith.extf %3 : vector<32x256xbf16> to vector<32x256xf32>
    %5 = vector.shape_cast %4 : vector<32x256xf32> to vector<4x8x256xf32>
    %c0_2 = arith.constant 0 : index
    %c0_3 = arith.constant 0 : index
    %6 = vector.load %arg4[%c0_2, %c0_3] : memref<8x256xf32, #tpu.memory_space<vmem>>, vector<8x256xf32>
    %cst = arith.constant dense<0.000000e+00> : vector<8x256xf32>
    %7 = vector.multi_reduction <add>, %5, %cst [0] : vector<4x8x256xf32> to vector<8x256xf32>
    %8 = arith.addf %6, %7 : vector<8x256xf32>
    %c0_4 = arith.constant 0 : index
    %c0_5 = arith.constant 0 : index
    %9 = vector.load %arg4[%c0_4, %c0_5] : memref<8x256xf32, #tpu.memory_space<vmem>>, vector<8x256xf32>
    tpu.vector_store %arg4[%c0_4, %c0_5], %8 {strides = array<i32>} : memref<8x256xf32, #tpu.memory_space<vmem>>, vector<8x256xf32>,
    %c0_6 = arith.constant 0 : index
    %c0_7 = arith.constant 0 : index
    %10 = vector.load %arg5[%c0_6, %c0_7] : memref<8x256xf32, #tpu.memory_space<vmem>>, vector<8x256xf32>
    %11 = arith.mulf %5, %5 : vector<4x8x256xf32>
    %cst_8 = arith.constant dense<0.000000e+00> : vector<8x256xf32>
    %12 = vector.multi_reduction <add>, %11, %cst_8 [0] : vector<4x8x256xf32> to vector<8x256xf32>
    %13 = arith.addf %10, %12 : vector<8x256xf32>
    %c0_9 = arith.constant 0 : index
    %c0_10 = arith.constant 0 : index
    %14 = vector.load %arg5[%c0_9, %c0_10] : memref<8x256xf32, #tpu.memory_space<vmem>>, vector<8x256xf32>
    tpu.vector_store %arg5[%c0_9, %c0_10], %13 {strides = array<i32>} : memref<8x256xf32, #tpu.memory_space<vmem>>, vector<8x256xf32>,
    %c0_i32_11 = arith.constant 0 : i32
    %15 = arith.cmpi eq, %arg0, %c0_i32_11 : i32
    %16 = arith.extui %15 : i1 to i32
    %c0_i32_12 = arith.constant 0 : i32
    %17 = arith.cmpi ne, %16, %c0_i32_12 : i32
    scf.if %17 {
      %c0_13 = arith.constant 0 : index
      %c0_14 = arith.constant 0 : index
      %18 = vector.load %arg4[%c0_13, %c0_14] : memref<8x256xf32, #tpu.memory_space<vmem>>, vector<8x256xf32>
      %cst_15 = arith.constant dense<0.000000e+00> : vector<256xf32>
      %19 = vector.multi_reduction <add>, %18, %cst_15 [0] : vector<8x256xf32> to vector<256xf32>
      %20 = vector.shape_cast %19 : vector<256xf32> to vector<1x256xf32>
      %c0_16 = arith.constant 0 : index
      %c0_17 = arith.constant 0 : index
      %21 = vector.load %arg2[%c0_16, %c0_17] : memref<1x256xf32, #tpu.memory_space<vmem>>, vector<1x256xf32>
      tpu.vector_store %arg2[%c0_16, %c0_17], %20 {strides = array<i32>} : memref<1x256xf32, #tpu.memory_space<vmem>>, vector<1x256xf32>,
      %c0_18 = arith.constant 0 : index
      %c0_19 = arith.constant 0 : index
      %22 = vector.load %arg5[%c0_18, %c0_19] : memref<8x256xf32, #tpu.memory_space<vmem>>, vector<8x256xf32>
      %cst_20 = arith.constant dense<0.000000e+00> : vector<256xf32>
      %23 = vector.multi_reduction <add>, %22, %cst_20 [0] : vector<8x256xf32> to vector<256xf32>
      %24 = vector.shape_cast %23 : vector<256xf32> to vector<1x256xf32>
      %c0_21 = arith.constant 0 : index
      %c0_22 = arith.constant 0 : index
      %25 = vector.load %arg3[%c0_21, %c0_22] : memref<1x256xf32, #tpu.memory_space<vmem>>, vector<1x256xf32>
      tpu.vector_store %arg3[%c0_21, %c0_22], %24 {strides = array<i32>} : memref<1x256xf32, #tpu.memory_space<vmem>>, vector<1x256xf32>,
    } else {
    }
    return
  }
  func.func @transform_0(%arg0: i32) -> (i32, i32) {
    %c0_i32 = arith.constant 0 : i32
    %c0_i32_0 = arith.constant 0 : i32
    return %arg0, %c0_i32 : i32, i32
  }
  func.func @transform_1(%arg0: i32) -> (i32, i32) {
    %c0_i32 = arith.constant 0 : i32
    %c0_i32_0 = arith.constant 0 : i32
    %c0_i32_1 = arith.constant 0 : i32
    return %c0_i32, %c0_i32_0 : i32, i32
  }
  func.func @transform_2(%arg0: i32) -> (i32, i32) {
    %c0_i32 = arith.constant 0 : i32
    %c0_i32_0 = arith.constant 0 : i32
    %c0_i32_1 = arith.constant 0 : i32
    return %c0_i32, %c0_i32_0 : i32, i32
  }
}

module attributes {stable_mosaic.version = 11 : i64} {
  func.func @_gemm_affine_kernel(%arg0: i32, %arg1: i32, %arg2: memref<592x64xbf16, #tpu.memory_space<vmem>>, %arg3: memref<64x128xbf16, #tpu.memory_space<vmem>>, %arg4: memref<1x64xf32, #tpu.memory_space<vmem>>, %arg5: memref<1x64xf32, #tpu.memory_space<vmem>>, %arg6: memref<592x128xbf16, #tpu.memory_space<vmem>>) attributes {dimension_semantics = [#tpu.dimension_semantics<parallel>, #tpu.dimension_semantics<parallel>], iteration_bounds = array<i64: 1, 1>, scalar_prefetch = 0 : i64, scratch_operands = 0 : i64, tpu.core_type = #tpu.core_type<tc>, window_params = [{transform_indices = @transform_0, window_bounds = array<i64: 592, 64>}, {transform_indices = @transform_1, window_bounds = array<i64: 64, 128>}, {pipeline_mode = #tpu.pipeline_mode<synchronous>, transform_indices = @transform_2, window_bounds = array<i64: 1, 64>}, {pipeline_mode = #tpu.pipeline_mode<synchronous>, transform_indices = @transform_3, window_bounds = array<i64: 1, 64>}, {transform_indices = @transform_4, window_bounds = array<i64: 592, 128>}]} {
    %c0 = arith.constant 0 : index
    %c0_0 = arith.constant 0 : index
    %0 = vector.load %arg2[%c0, %c0_0] : memref<592x64xbf16, #tpu.memory_space<vmem>>, vector<592x64xbf16>
    %1 = arith.extf %0 : vector<592x64xbf16> to vector<592x64xf32>
    %c0_1 = arith.constant 0 : index
    %c0_2 = arith.constant 0 : index
    %2 = vector.load %arg4[%c0_1, %c0_2] : memref<1x64xf32, #tpu.memory_space<vmem>>, vector<1x64xf32>
    %3 = vector.broadcast %2 : vector<1x64xf32> to vector<592x64xf32>
    %4 = arith.mulf %1, %3 : vector<592x64xf32>
    %c0_3 = arith.constant 0 : index
    %c0_4 = arith.constant 0 : index
    %5 = vector.load %arg5[%c0_3, %c0_4] : memref<1x64xf32, #tpu.memory_space<vmem>>, vector<1x64xf32>
    %6 = vector.broadcast %5 : vector<1x64xf32> to vector<592x64xf32>
    %7 = arith.addf %4, %6 : vector<592x64xf32>
    %cst = arith.constant 0.000000e+00 : f32
    %8 = vector.broadcast %cst : f32 to vector<592x64xf32>
    %9 = arith.maximumf %7, %8 : vector<592x64xf32>
    %10 = arith.truncf %9 : vector<592x64xf32> to vector<592x64xbf16>
    %c0_5 = arith.constant 0 : index
    %c0_6 = arith.constant 0 : index
    %11 = vector.load %arg3[%c0_5, %c0_6] : memref<64x128xbf16, #tpu.memory_space<vmem>>, vector<64x128xbf16>
    %cst_7 = arith.constant dense<0.000000e+00> : vector<592x128xf32>
    %12 = tpu.matmul %10, %11, %cst_7 {dimension_numbers = #tpu.dot_dimension_numbers<[1], [0], [0], [1], [0, 0, 1, 1], [], []>} : vector<592x64xbf16>, vector<64x128xbf16>, vector<592x128xf32> -> vector<592x128xf32>
    %13 = arith.truncf %12 : vector<592x128xf32> to vector<592x128xbf16>
    %c0_8 = arith.constant 0 : index
    %c0_9 = arith.constant 0 : index
    %14 = vector.load %arg6[%c0_8, %c0_9] : memref<592x128xbf16, #tpu.memory_space<vmem>>, vector<592x128xbf16>
    tpu.vector_store %arg6[%c0_8, %c0_9], %13 {strides = array<i32>} : memref<592x128xbf16, #tpu.memory_space<vmem>>, vector<592x128xbf16>,
    return
  }
  func.func @transform_0(%arg0: i32, %arg1: i32) -> (i32, i32) {
    %c0_i32 = arith.constant 0 : i32
    %c0_i32_0 = arith.constant 0 : i32
    return %arg0, %c0_i32 : i32, i32
  }
  func.func @transform_1(%arg0: i32, %arg1: i32) -> (i32, i32) {
    %c0_i32 = arith.constant 0 : i32
    %c0_i32_0 = arith.constant 0 : i32
    return %c0_i32, %arg1 : i32, i32
  }
  func.func @transform_2(%arg0: i32, %arg1: i32) -> (i32, i32) {
    %c0_i32 = arith.constant 0 : i32
    %c0_i32_0 = arith.constant 0 : i32
    %c0_i32_1 = arith.constant 0 : i32
    return %c0_i32, %c0_i32_0 : i32, i32
  }
  func.func @transform_3(%arg0: i32, %arg1: i32) -> (i32, i32) {
    %c0_i32 = arith.constant 0 : i32
    %c0_i32_0 = arith.constant 0 : i32
    %c0_i32_1 = arith.constant 0 : i32
    return %c0_i32, %c0_i32_0 : i32, i32
  }
  func.func @transform_4(%arg0: i32, %arg1: i32) -> (i32, i32) {
    %c0_i32 = arith.constant 0 : i32
    return %arg0, %arg1 : i32, i32
  }
}

module attributes {stable_mosaic.version = 11 : i64} {
  func.func @_colsums_kernel(%arg0: i32, %arg1: memref<64x256xbf16, #tpu.memory_space<vmem>>, %arg2: memref<1x256xf32, #tpu.memory_space<vmem>>, %arg3: memref<1x256xf32, #tpu.memory_space<vmem>>, %arg4: memref<8x256xf32, #tpu.memory_space<vmem>>, %arg5: memref<8x256xf32, #tpu.memory_space<vmem>>) attributes {dimension_semantics = [#tpu.dimension_semantics<arbitrary>], iteration_bounds = array<i64: 1>, scalar_prefetch = 0 : i64, scratch_operands = 2 : i64, tpu.core_type = #tpu.core_type<tc>, window_params = [{transform_indices = @transform_0, window_bounds = array<i64: 64, 256>}, {pipeline_mode = #tpu.pipeline_mode<synchronous>, transform_indices = @transform_1, window_bounds = array<i64: 1, 256>}, {pipeline_mode = #tpu.pipeline_mode<synchronous>, transform_indices = @transform_2, window_bounds = array<i64: 1, 256>}]} {
    %c0_i32 = arith.constant 0 : i32
    %0 = arith.cmpi eq, %arg0, %c0_i32 : i32
    %1 = arith.extui %0 : i1 to i32
    %c0_i32_0 = arith.constant 0 : i32
    %2 = arith.cmpi ne, %1, %c0_i32_0 : i32
    scf.if %2 {
      %cst_13 = arith.constant 0.000000e+00 : f32
      %18 = vector.broadcast %cst_13 : f32 to vector<8x256xf32>
      %c0_14 = arith.constant 0 : index
      %c0_15 = arith.constant 0 : index
      %19 = vector.load %arg4[%c0_14, %c0_15] : memref<8x256xf32, #tpu.memory_space<vmem>>, vector<8x256xf32>
      tpu.vector_store %arg4[%c0_14, %c0_15], %18 {strides = array<i32>} : memref<8x256xf32, #tpu.memory_space<vmem>>, vector<8x256xf32>,
      %cst_16 = arith.constant 0.000000e+00 : f32
      %20 = vector.broadcast %cst_16 : f32 to vector<8x256xf32>
      %c0_17 = arith.constant 0 : index
      %c0_18 = arith.constant 0 : index
      %21 = vector.load %arg5[%c0_17, %c0_18] : memref<8x256xf32, #tpu.memory_space<vmem>>, vector<8x256xf32>
      tpu.vector_store %arg5[%c0_17, %c0_18], %20 {strides = array<i32>} : memref<8x256xf32, #tpu.memory_space<vmem>>, vector<8x256xf32>,
    } else {
    }
    %c0 = arith.constant 0 : index
    %c0_1 = arith.constant 0 : index
    %3 = vector.load %arg1[%c0, %c0_1] : memref<64x256xbf16, #tpu.memory_space<vmem>>, vector<64x256xbf16>
    %4 = arith.extf %3 : vector<64x256xbf16> to vector<64x256xf32>
    %5 = vector.shape_cast %4 : vector<64x256xf32> to vector<8x8x256xf32>
    %c0_2 = arith.constant 0 : index
    %c0_3 = arith.constant 0 : index
    %6 = vector.load %arg4[%c0_2, %c0_3] : memref<8x256xf32, #tpu.memory_space<vmem>>, vector<8x256xf32>
    %cst = arith.constant dense<0.000000e+00> : vector<8x256xf32>
    %7 = vector.multi_reduction <add>, %5, %cst [0] : vector<8x8x256xf32> to vector<8x256xf32>
    %8 = arith.addf %6, %7 : vector<8x256xf32>
    %c0_4 = arith.constant 0 : index
    %c0_5 = arith.constant 0 : index
    %9 = vector.load %arg4[%c0_4, %c0_5] : memref<8x256xf32, #tpu.memory_space<vmem>>, vector<8x256xf32>
    tpu.vector_store %arg4[%c0_4, %c0_5], %8 {strides = array<i32>} : memref<8x256xf32, #tpu.memory_space<vmem>>, vector<8x256xf32>,
    %c0_6 = arith.constant 0 : index
    %c0_7 = arith.constant 0 : index
    %10 = vector.load %arg5[%c0_6, %c0_7] : memref<8x256xf32, #tpu.memory_space<vmem>>, vector<8x256xf32>
    %11 = arith.mulf %5, %5 : vector<8x8x256xf32>
    %cst_8 = arith.constant dense<0.000000e+00> : vector<8x256xf32>
    %12 = vector.multi_reduction <add>, %11, %cst_8 [0] : vector<8x8x256xf32> to vector<8x256xf32>
    %13 = arith.addf %10, %12 : vector<8x256xf32>
    %c0_9 = arith.constant 0 : index
    %c0_10 = arith.constant 0 : index
    %14 = vector.load %arg5[%c0_9, %c0_10] : memref<8x256xf32, #tpu.memory_space<vmem>>, vector<8x256xf32>
    tpu.vector_store %arg5[%c0_9, %c0_10], %13 {strides = array<i32>} : memref<8x256xf32, #tpu.memory_space<vmem>>, vector<8x256xf32>,
    %c0_i32_11 = arith.constant 0 : i32
    %15 = arith.cmpi eq, %arg0, %c0_i32_11 : i32
    %16 = arith.extui %15 : i1 to i32
    %c0_i32_12 = arith.constant 0 : i32
    %17 = arith.cmpi ne, %16, %c0_i32_12 : i32
    scf.if %17 {
      %c0_13 = arith.constant 0 : index
      %c0_14 = arith.constant 0 : index
      %18 = vector.load %arg4[%c0_13, %c0_14] : memref<8x256xf32, #tpu.memory_space<vmem>>, vector<8x256xf32>
      %cst_15 = arith.constant dense<0.000000e+00> : vector<256xf32>
      %19 = vector.multi_reduction <add>, %18, %cst_15 [0] : vector<8x256xf32> to vector<256xf32>
      %20 = vector.shape_cast %19 : vector<256xf32> to vector<1x256xf32>
      %c0_16 = arith.constant 0 : index
      %c0_17 = arith.constant 0 : index
      %21 = vector.load %arg2[%c0_16, %c0_17] : memref<1x256xf32, #tpu.memory_space<vmem>>, vector<1x256xf32>
      tpu.vector_store %arg2[%c0_16, %c0_17], %20 {strides = array<i32>} : memref<1x256xf32, #tpu.memory_space<vmem>>, vector<1x256xf32>,
      %c0_18 = arith.constant 0 : index
      %c0_19 = arith.constant 0 : index
      %22 = vector.load %arg5[%c0_18, %c0_19] : memref<8x256xf32, #tpu.memory_space<vmem>>, vector<8x256xf32>
      %cst_20 = arith.constant dense<0.000000e+00> : vector<256xf32>
      %23 = vector.multi_reduction <add>, %22, %cst_20 [0] : vector<8x256xf32> to vector<256xf32>
      %24 = vector.shape_cast %23 : vector<256xf32> to vector<1x256xf32>
      %c0_21 = arith.constant 0 : index
      %c0_22 = arith.constant 0 : index
      %25 = vector.load %arg3[%c0_21, %c0_22] : memref<1x256xf32, #tpu.memory_space<vmem>>, vector<1x256xf32>
      tpu.vector_store %arg3[%c0_21, %c0_22], %24 {strides = array<i32>} : memref<1x256xf32, #tpu.memory_space<vmem>>, vector<1x256xf32>,
    } else {
    }
    return
  }
  func.func @transform_0(%arg0: i32) -> (i32, i32) {
    %c0_i32 = arith.constant 0 : i32
    %c0_i32_0 = arith.constant 0 : i32
    return %arg0, %c0_i32 : i32, i32
  }
  func.func @transform_1(%arg0: i32) -> (i32, i32) {
    %c0_i32 = arith.constant 0 : i32
    %c0_i32_0 = arith.constant 0 : i32
    %c0_i32_1 = arith.constant 0 : i32
    return %c0_i32, %c0_i32_0 : i32, i32
  }
  func.func @transform_2(%arg0: i32) -> (i32, i32) {
    %c0_i32 = arith.constant 0 : i32
    %c0_i32_0 = arith.constant 0 : i32
    %c0_i32_1 = arith.constant 0 : i32
    return %c0_i32, %c0_i32_0 : i32, i32
  }
}

module attributes {stable_mosaic.version = 11 : i64} {
  func.func @_gemm_affine_kernel(%arg0: i32, %arg1: i32, %arg2: memref<736x32xbf16, #tpu.memory_space<vmem>>, %arg3: memref<32x128xbf16, #tpu.memory_space<vmem>>, %arg4: memref<1x32xf32, #tpu.memory_space<vmem>>, %arg5: memref<1x32xf32, #tpu.memory_space<vmem>>, %arg6: memref<736x128xf32, #tpu.memory_space<vmem>>) attributes {dimension_semantics = [#tpu.dimension_semantics<parallel>, #tpu.dimension_semantics<parallel>], iteration_bounds = array<i64: 3, 1>, scalar_prefetch = 0 : i64, scratch_operands = 0 : i64, tpu.core_type = #tpu.core_type<tc>, window_params = [{transform_indices = @transform_0, window_bounds = array<i64: 736, 32>}, {transform_indices = @transform_1, window_bounds = array<i64: 32, 128>}, {pipeline_mode = #tpu.pipeline_mode<synchronous>, transform_indices = @transform_2, window_bounds = array<i64: 1, 32>}, {pipeline_mode = #tpu.pipeline_mode<synchronous>, transform_indices = @transform_3, window_bounds = array<i64: 1, 32>}, {transform_indices = @transform_4, window_bounds = array<i64: 736, 128>}]} {
    %c0 = arith.constant 0 : index
    %c0_0 = arith.constant 0 : index
    %0 = vector.load %arg2[%c0, %c0_0] : memref<736x32xbf16, #tpu.memory_space<vmem>>, vector<736x32xbf16>
    %1 = arith.extf %0 : vector<736x32xbf16> to vector<736x32xf32>
    %c0_1 = arith.constant 0 : index
    %c0_2 = arith.constant 0 : index
    %2 = vector.load %arg4[%c0_1, %c0_2] : memref<1x32xf32, #tpu.memory_space<vmem>>, vector<1x32xf32>
    %3 = vector.broadcast %2 : vector<1x32xf32> to vector<736x32xf32>
    %4 = arith.mulf %1, %3 : vector<736x32xf32>
    %c0_3 = arith.constant 0 : index
    %c0_4 = arith.constant 0 : index
    %5 = vector.load %arg5[%c0_3, %c0_4] : memref<1x32xf32, #tpu.memory_space<vmem>>, vector<1x32xf32>
    %6 = vector.broadcast %5 : vector<1x32xf32> to vector<736x32xf32>
    %7 = arith.addf %4, %6 : vector<736x32xf32>
    %cst = arith.constant 0.000000e+00 : f32
    %8 = vector.broadcast %cst : f32 to vector<736x32xf32>
    %9 = arith.maximumf %7, %8 : vector<736x32xf32>
    %10 = arith.truncf %9 : vector<736x32xf32> to vector<736x32xbf16>
    %c0_5 = arith.constant 0 : index
    %c0_6 = arith.constant 0 : index
    %11 = vector.load %arg3[%c0_5, %c0_6] : memref<32x128xbf16, #tpu.memory_space<vmem>>, vector<32x128xbf16>
    %cst_7 = arith.constant dense<0.000000e+00> : vector<736x128xf32>
    %12 = tpu.matmul %10, %11, %cst_7 {dimension_numbers = #tpu.dot_dimension_numbers<[1], [0], [0], [1], [0, 0, 1, 1], [], []>} : vector<736x32xbf16>, vector<32x128xbf16>, vector<736x128xf32> -> vector<736x128xf32>
    %13 = math.tanh %12 : vector<736x128xf32>
    %c0_8 = arith.constant 0 : index
    %c0_9 = arith.constant 0 : index
    %14 = vector.load %arg6[%c0_8, %c0_9] : memref<736x128xf32, #tpu.memory_space<vmem>>, vector<736x128xf32>
    tpu.vector_store %arg6[%c0_8, %c0_9], %13 {strides = array<i32>} : memref<736x128xf32, #tpu.memory_space<vmem>>, vector<736x128xf32>,
    return
  }
  func.func @transform_0(%arg0: i32, %arg1: i32) -> (i32, i32) {
    %c0_i32 = arith.constant 0 : i32
    %c0_i32_0 = arith.constant 0 : i32
    return %arg0, %c0_i32 : i32, i32
  }
  func.func @transform_1(%arg0: i32, %arg1: i32) -> (i32, i32) {
    %c0_i32 = arith.constant 0 : i32
    %c0_i32_0 = arith.constant 0 : i32
    return %c0_i32, %arg1 : i32, i32
  }
  func.func @transform_2(%arg0: i32, %arg1: i32) -> (i32, i32) {
    %c0_i32 = arith.constant 0 : i32
    %c0_i32_0 = arith.constant 0 : i32
    %c0_i32_1 = arith.constant 0 : i32
    return %c0_i32, %c0_i32_0 : i32, i32
  }
  func.func @transform_3(%arg0: i32, %arg1: i32) -> (i32, i32) {
    %c0_i32 = arith.constant 0 : i32
    %c0_i32_0 = arith.constant 0 : i32
    %c0_i32_1 = arith.constant 0 : i32
    return %c0_i32, %c0_i32_0 : i32, i32
  }
  func.func @transform_4(%arg0: i32, %arg1: i32) -> (i32, i32) {
    %c0_i32 = arith.constant 0 : i32
    return %arg0, %arg1 : i32, i32
  }
}

</mosaic_0001>

<llo_original>
// kernel: tile.48
$region0: #{tile.48}
  #allocation0 [shape = 's32[1]{0}', space=sflag, size = 0x4, scoped, tag = 'scoped memory for tile.48']
  %s0 = inlined_call_operand.vmem [shape: f32[32], index: 0, kind: input, shape index: {}]
  %s1 = inlined_call_operand.vmem [shape: f32[4,32], index: 1, kind: output, shape index: {}]
  // Predicated region
  $region2: #{tile.48} parent=0 // pred_check
    _
  $region3: #{tile.48} parent=0 // pred_check_branch
    %3 = sbr.rel (0) target = $region5
  $region4: #{tile.48} parent=0 // pred_region
    _
  $region5: #{tile.48} parent=0 // pred_fallthru
    _
  %v4 = vld [vmem:[%s0] ss:$0 sm:$0xff]
  %5 = vst [vmem:[%s1] sm:$0xf] %v4

// kernel: tile.49
$region0: #{tile.49}
  %s0 = inlined_call_operand.vmem [shape: f32[4,32], index: 0, kind: input, shape index: {}]
  %s1 = inlined_call_operand.vmem [shape: f32[1,128], index: 1, kind: output, shape index: {}]
  $region1: #{tile.49} parent=0
    #allocation0 [shape = 'u8[4096]{0}', space=vmem, size = 0x1000, scoped, tag = 'scoped mem for output reshape']
    #allocation1 [shape = 'u8[4096]{0}', space=vmem, size = 0x1000, scoped, tag = 'scoped mem for input reshape']
    %s3 = ssub.s32 16, 1
    %v4 = vld [vmem:[%s0] sm:%s3]
    %5 = vst [vmem:[#allocation1] sm:%s3] %v4
    %v6 = vld [vmem:[#allocation1] sm:$0x1]
    %vm7 = vcmask 261120
    %8 = vst.msk [vmem:[#allocation0] sm:$0x1] %vm7, %v6
    %s9 = scalar_lea.vmem [#allocation1], 3
    %v10 = vld [vmem:[%s9] sm:$0x1]
    %11 = vrot.lane.b32.xlu0 %v10, 96
    %v12 = vpop.permute.xlu0 %11
    %vm13 = vcmask 1048320
    %14 = vst.msk [vmem:[#allocation0] sm:$0x1] %vm13, %v12
    %s15 = scalar_lea.vmem [#allocation1], 2
    %v16 = vld [vmem:[%s15] sm:$0x1]
    %17 = vrot.lane.b32.xlu0 %v16, 64
    %v18 = vpop.permute.xlu0 %17
    %vm19 = vcmask 785920
    %20 = vst.msk [vmem:[#allocation0] sm:$0x1] %vm19, %v18
    %s21 = scalar_lea.vmem [#allocation1], 1
    %v22 = vld [vmem:[%s21] sm:$0x1]
    %23 = vrot.lane.b32.xlu0 %v22, 32
    %v24 = vpop.permute.xlu0 %23
    %vm25 = vcmask 523520
    %26 = vst.msk [vmem:[#allocation0] sm:$0x1] %vm25, %v24
    %s28 = ssub.s32 2, 1
    %v29 = vld [vmem:[#allocation0] sm:%s28]
    %s31 = ssub.s32 2, 1
    %32 = vst [vmem:[%s1] sm:%s31] %v29

// kernel: generator_forward.10
$region0: #{generator_forward.10}
  #allocation0 [shape = 'u32[]', space=smem, size = 0x4, offset = 0x4, fixed_abs, tag = 'smem constant byte address 0x4 - core index']
  #allocation1 [shape = 'u32[72,128]{1,0:T(1,128)}', space=vmem, size = 0x9000, scoped, tag = 'internal scratch']
  #allocation2 [shape = 'f32[8,128]{1,0:T(8,128)}', space=vmem, size = 0x1000, scoped, tag = 'scratch operand']
  #allocation3 [shape = 'f32[8,128]{1,0:T(8,128)}', space=vmem, size = 0x1000, scoped, tag = 'scratch operand']
  %s0 = inlined_call_operand.vmem [shape: bf16[8,128], index: 0, kind: input, shape index: {}]
  %s1 = inlined_call_operand.vmem [shape: f32[1,128], index: 1, kind: output, shape index: {0}]
  %s2 = inlined_call_operand.vmem [shape: f32[1,128], index: 2, kind: output, shape index: {1}]
  %3 = xla_tuple %s1, %s2
  %s4 = sld [smem:[#allocation0]]
  $region30: #{generator_forward.10} parent=0
    _
  %s6 = ssub.s32 1, %s4
  %s7 = scalar_select 0, %s6, %s4
  // Predicated region
  $region2: #{generator_forward.10} parent=0 // pred_check
    _
  $region3: #{generator_forward.10} parent=0 // pred_check_branch
    %9 = sbr.rel (0) target = $region5
  $region4: #{generator_forward.10} parent=0 // pred_region
    _
  $region5: #{generator_forward.10} parent=0 // pred_fallthru
    _
  %p10 = scmp.eq.s32.totalorder 0, 0
  // Predicated region
  $region6: #{generator_forward.10} parent=0 // pred_check
    %p11 = pneg %p10
  $region7: #{generator_forward.10} parent=0 // pred_check_branch
    %13 = sbr.rel (%p11) target = $region9
  $region8: #{generator_forward.10} parent=0 // pred_region
    %14 = vst [vmem:[#allocation2] sm:$0xff] 0.0
    %15 = vst [vmem:[#allocation3] sm:$0xff] 0.0
  $region9: #{generator_forward.10} parent=0 // pred_fallthru
    _
  %v16 = vld [vmem:[%s0] sm:$0xf]
  %v17 = vunpack.c.l.bf16 %v16
  %v18 = vld [vmem:[#allocation2] sm:$0xff]
  %v19 = vadd.f32 %v17, 0.0
  %v20 = vadd.f32 %v18, %v19
  %21 = vst [vmem:[#allocation2] sm:$0xff] %v20
  %v22 = vld [vmem:[#allocation3] sm:$0xff]
  %v23 = vmul.f32 %v17, %v17
  %v24 = vadd.f32 %v23, 0.0
  %v25 = vadd.f32 %v22, %v24
  %26 = vst [vmem:[#allocation3] sm:$0xff] %v25
  // Predicated region
  $region10: #{generator_forward.10} parent=0 // pred_check
    %p27 = pneg %p10
  $region11: #{generator_forward.10} parent=0 // pred_check_branch
    %29 = sbr.rel (%p27) target = $region13
  $region12: #{generator_forward.10} parent=0 // pred_region
    %v30 = vld [vmem:[#allocation2] sm:$0xff]
    %v31 = vrot.slane %v30, 4
    %v32 = vadd.f32 %v30, %v31
    %v33 = vrot.slane %v32, 2
    %v34 = vadd.f32 %v32, %v33
    %v35 = vrot.slane %v34, 1
    %v36 = vadd.f32 %v34, %v35
    %37 = vst [vmem:[%s1] sm:$0x1] %v36
    %v38 = vld [vmem:[#allocation3] sm:$0xff]
    %v39 = vrot.slane %v38, 4
    %v40 = vadd.f32 %v38, %v39
    %v41 = vrot.slane %v40, 2
    %v42 = vadd.f32 %v40, %v41
    %v43 = vrot.slane %v42, 1
    %v44 = vadd.f32 %v42, %v43
    %45 = vst [vmem:[%s2] sm:$0x1] %v44
  $region13: #{generator_forward.10} parent=0 // pred_fallthru
    _
  // Predicated region
  $region14: #{generator_forward.10} parent=0 // pred_check
    _
  $region15: #{generator_forward.10} parent=0 // pred_check_branch
    %47 = sbr.rel (0) target = $region17
  $region16: #{generator_forward.10} parent=0 // pred_region
    _
  $region17: #{generator_forward.10} parent=0 // pred_fallthru
    _
  // Predicated region
  $region18: #{generator_forward.10} parent=0 // pred_check
    _
  $region19: #{generator_forward.10} parent=0 // pred_check_branch
    %49 = sbr.rel (0) target = $region21
  $region20: #{generator_forward.10} parent=0 // pred_region
    _
  $region21: #{generator_forward.10} parent=0 // pred_fallthru
    _
  // Predicated region
  $region22: #{generator_forward.10} parent=0 // pred_check
    _
  $region23: #{generator_forward.10} parent=0 // pred_check_branch
    %51 = sbr.rel (0) target = $region25
  $region24: #{generator_forward.10} parent=0 // pred_region
    _
  $region25: #{generator_forward.10} parent=0 // pred_fallthru
    _
  // Predicated region
  $region26: #{generator_forward.10} parent=0 // pred_check
    _
  $region27: #{generator_forward.10} parent=0 // pred_check_branch
    %53 = sbr.rel (0) target = $region29
  $region28: #{generator_forward.10} parent=0 // pred_region
    _
  $region29: #{generator_forward.10} parent=0 // pred_fallthru
    _

// kernel: generator_forward.9
$region0: #{generator_forward.9}
  #allocation0 [shape = 'u32[]', space=smem, size = 0x4, offset = 0x4, fixed_abs, tag = 'smem constant byte address 0x4 - core index']
  #allocation1 [shape = 'u32[72,128]{1,0:T(1,128)}', space=vmem, size = 0x9000, scoped, tag = 'internal scratch']
  %s0 = inlined_call_operand.vmem [shape: bf16[16,4], index: 0, kind: input, shape index: {}]
  %s1 = inlined_call_operand.hbm [shape: bf16[4,512], index: 1, kind: input, shape index: {}]
  %s2 = inlined_call_operand.vmem [shape: bf16[16,512], index: 2, kind: output, shape index: {}]
  %s3 = sld [smem:[#allocation0]]
  $region22: #{generator_forward.9} parent=0
    _
  %s5 = ssub.s32 1, %s3
  %s6 = scalar_select 0, %s5, %s3
  $region1: #{generator_forward.9} parent=0
    #allocation2 [shape = 'u8[4096]{0}', space=vmem, size = 0x1000, scoped, tag = 'input window, operand 1, single buffered']
    #allocation3 [shape = 's32[1]{0}', space=sflag, size = 0x4, scoped, tag = 'scoped memory for generator_forward.9']
    %7 = vsyncpa [#allocation3], 0
    // Predicated region
    $region2: #{generator_forward.9} parent=1 // pred_check
      _
    $region3: #{generator_forward.9} parent=1 // pred_check_branch
      %9 = sbr.rel (0) target = $region5
    $region4: #{generator_forward.9} parent=1 // pred_region
      _
    $region5: #{generator_forward.9} parent=1 // pred_fallthru
      _
    // Predicated region
    $region6: #{generator_forward.9} parent=1 // pred_check
      _
    $region7: #{generator_forward.9} parent=1 // pred_check_branch
      %11 = sbr.rel (0) target = $region9
    $region8: #{generator_forward.9} parent=1 // pred_region
      %13 = vsyncadd [#allocation3], 0
      %s15 = sshll.u32 %s1, 4
      %s16 = int_to_ptr.hbm [resolvable:$true] %s15
      %s17 = sshll.u32 [#allocation2], 4
      %s18 = int_to_ptr.vmem [resolvable:$true] %s17
      %20 = dma.hbm_to_vmem [thread:$0]  %s16, 128, %s18, [#allocation3]
    $region9: #{generator_forward.9} parent=1 // pred_fallthru
      _
    // Predicated region
    $region10: #{generator_forward.9} parent=1 // pred_check
      _
    $region11: #{generator_forward.9} parent=1 // pred_check_branch
      %22 = sbr.rel (0) target = $region13
    $region12: #{generator_forward.9} parent=1 // pred_region
      %24 = dma.done [#allocation3], 128
    $region13: #{generator_forward.9} parent=1 // pred_fallthru
      _
    %v26 = vld [vmem:[%s0] sm:$0xf]
    %v27 = vld [vmem:[%s0 + $0x4] sm:$0xf]
    %v28 = vld [vmem:[#allocation2] sm:$0xff]
    %v31 = vunpack.c.l.b16 %v26
    %v32 = vunpack.c.l.b16 %v27
    %v33 = vpack.c.b16 %v32, %v31
    %35 = vst [vmem:[#allocation1] ss:$4 sm:$0xff] %v28
    %v36 = vld.sshfl [vmem:[#allocation1] sm:$0xff pattern:$0x73625140]
    %v37 = vld.sshfl [vmem:[#allocation1 + $0x8] sm:$0xff pattern:$0x73625140]
    %v38 = vld.sshfl [vmem:[#allocation1 + $0x10] sm:$0xff pattern:$0x73625140]
    %v39 = vld.sshfl [vmem:[#allocation1 + $0x18] sm:$0xff pattern:$0x73625140]
    %vm40 = vcmask 31744
    %v42 = vsel %vm40, %v33, 0
    %vm44 = vcmask 1041408
    %v45 = vsel %vm44, %v36, 0
    %v47 = vsel %vm44, %v37, 0
    %v49 = vsel %vm44, %v38, 0
    %v51 = vsel %vm44, %v39, 0
    %53 = vmatpush.bf16.msra.mxu0 0
    %54 = vmatpush.bf16.msra.mxu0 0
    %55 = vmatpush.bf16.msra.mxu0 0
    %56 = vmatpush.bf16.msra.mxu0 0
    %57 = vmatpush.bf16.msra.mxu0 0
    %58 = vmatpush.bf16.msra.mxu0 0
    %59 = vmatpush.bf16.msra.mxu0 0
    %60 = vmatpush.bf16.msra.mxu0 %v45
    %61 = vmatmul.bf16.gmra.mxu0 %v42
    %v62 = vpop.f32.mrf.mxu0
    %v63 = vadd.f32 0.0, %v62
    %v64 = vpop.f32.mrf.mxu0
    %v65 = vadd.f32 0.0, %v64
    %66 = vdwg.mxu0
    %67 = vmatpush.bf16.msra.mxu0 0
    %68 = vmatpush.bf16.msra.mxu0 0
    %69 = vmatpush.bf16.msra.mxu0 0
    %70 = vmatpush.bf16.msra.mxu0 0
    %71 = vmatpush.bf16.msra.mxu0 0
    %72 = vmatpush.bf16.msra.mxu0 0
    %73 = vmatpush.bf16.msra.mxu0 0
    %74 = vmatpush.bf16.msra.mxu0 %v47
    %75 = vmatmul.bf16.gmra.mxu0 %v42
    %v76 = vpop.f32.mrf.mxu0
    %v77 = vadd.f32 0.0, %v76
    %v78 = vpop.f32.mrf.mxu0
    %v79 = vadd.f32 0.0, %v78
    %80 = vdwg.mxu0
    %81 = vmatpush.bf16.msra.mxu0 0
    %82 = vmatpush.bf16.msra.mxu0 0
    %83 = vmatpush.bf16.msra.mxu0 0
    %84 = vmatpush.bf16.msra.mxu0 0
    %85 = vmatpush.bf16.msra.mxu0 0
    %86 = vmatpush.bf16.msra.mxu0 0
    %87 = vmatpush.bf16.msra.mxu0 0
    %88 = vmatpush.bf16.msra.mxu0 %v49
    %89 = vmatmul.bf16.gmra.mxu0 %v42
    %v90 = vpop.f32.mrf.mxu0
    %v91 = vadd.f32 0.0, %v90
    %v92 = vpop.f32.mrf.mxu0
    %v93 = vadd.f32 0.0, %v92
    %94 = vdwg.mxu0
    %95 = vmatpush.bf16.msra.mxu0 0
    %96 = vmatpush.bf16.msra.mxu0 0
    %97 = vmatpush.bf16.msra.mxu0 0
    %98 = vmatpush.bf16.msra.mxu0 0
    %99 = vmatpush.bf16.msra.mxu0 0
    %100 = vmatpush.bf16.msra.mxu0 0
    %101 = vmatpush.bf16.msra.mxu0 0
    %102 = vmatpush.bf16.msra.mxu0 %v51
    %103 = vmatmul.bf16.gmra.mxu0 %v42
    %v104 = vpop.f32.mrf.mxu0
    %v105 = vadd.f32 0.0, %v104
    %v106 = vpop.f32.mrf.mxu0
    %v107 = vadd.f32 0.0, %v106
    %108 = vdwg.mxu0
    %v109 = vpack.c.bf16 %v77, %v63
    %v110 = vpack.c.bf16 %v105, %v91
    %v111 = vpack.c.bf16 %v79, %v65
    %v112 = vpack.c.bf16 %v107, %v93
    %113 = vst [vmem:[%s2] sm:$0xff] %v109
    %114 = vst [vmem:[%s2 + $0x8] sm:$0xff] %v110
    %115 = vst [vmem:[%s2 + $0x10] sm:$0xff] %v111
    %116 = vst [vmem:[%s2 + $0x18] sm:$0xff] %v112
    // Predicated region
    $region14: #{generator_forward.9} parent=1 // pred_check
      _
    $region15: #{generator_forward.9} parent=1 // pred_check_branch
      %118 = sbr.rel (0) target = $region17
    $region16: #{generator_forward.9} parent=1 // pred_region
      _
    $region17: #{generator_forward.9} parent=1 // pred_fallthru
      _
    // Predicated region
    $region18: #{generator_forward.9} parent=1 // pred_check
      _
    $region19: #{generator_forward.9} parent=1 // pred_check_branch
      %120 = sbr.rel (0) target = $region21
    $region20: #{generator_forward.9} parent=1 // pred_region
      _
    $region21: #{generator_forward.9} parent=1 // pred_fallthru
      _
    %121 = vsyncpa [#allocation3], 1

// kernel: generator_forward.11
$region0: #{generator_forward.11}
  #allocation0 [shape = 'u32[]', space=smem, size = 0x4, offset = 0x4, fixed_abs, tag = 'smem constant byte address 0x4 - core index']
  #allocation1 [shape = 'u32[72,128]{1,0:T(1,128)}', space=vmem, size = 0x9000, scoped, tag = 'internal scratch']
  %s0 = inlined_call_operand.vmem [shape: bf16[64,128], index: 0, kind: input, shape index: {}]
  %s1 = inlined_call_operand.vmem [shape: bf16[128,128], index: 1, kind: input, shape index: {}]
  %s2 = inlined_call_operand.vmem [shape: f32[1,128], index: 2, kind: input, shape index: {}]
  %s3 = inlined_call_operand.vmem [shape: f32[1,128], index: 3, kind: input, shape index: {}]
  %s4 = inlined_call_operand.vmem [shape: bf16[64,128], index: 4, kind: output, shape index: {}]
  %s5 = sld [smem:[#allocation0]]
  $region26: #{generator_forward.11} parent=0
    _
  %s7 = ssub.s32 1, %s5
  %s8 = scalar_select 0, %s7, %s5
  // Predicated region
  $region2: #{generator_forward.11} parent=0 // pred_check
    _
  $region3: #{generator_forward.11} parent=0 // pred_check_branch
    %10 = sbr.rel (0) target = $region5
  $region4: #{generator_forward.11} parent=0 // pred_region
    _
  $region5: #{generator_forward.11} parent=0 // pred_fallthru
    _
  // Predicated region
  $region6: #{generator_forward.11} parent=0 // pred_check
    _
  $region7: #{generator_forward.11} parent=0 // pred_check_branch
    %12 = sbr.rel (0) target = $region9
  $region8: #{generator_forward.11} parent=0 // pred_region
    _
  $region9: #{generator_forward.11} parent=0 // pred_fallthru
    _
  // Predicated region
  $region10: #{generator_forward.11} parent=0 // pred_check
    _
  $region11: #{generator_forward.11} parent=0 // pred_check_branch
    %14 = sbr.rel (0) target = $region13
  $region12: #{generator_forward.11} parent=0 // pred_region
    _
  $region13: #{generator_forward.11} parent=0 // pred_fallthru
    _
  // Predicated region
  $region14: #{generator_forward.11} parent=0 // pred_check
    _
  $region15: #{generator_forward.11} parent=0 // pred_check_branch
    %16 = sbr.rel (0) target = $region17
  $region16: #{generator_forward.11} parent=0 // pred_region
    _
  $region17: #{generator_forward.11} parent=0 // pred_fallthru
    _
  %v17 = vld [vmem:[%s0] sm:$0xf]
  %v18 = vld [vmem:[%s0 + $0x4] sm:$0xf]
  %v19 = vld [vmem:[%s0 + $0x8] sm:$0xf]
  %v20 = vld [vmem:[%s0 + $0xc] sm:$0xf]
  %v21 = vld [vmem:[%s0 + $0x10] sm:$0xf]
  %v22 = vld [vmem:[%s0 + $0x14] sm:$0xf]
  %v23 = vld [vmem:[%s0 + $0x18] sm:$0xf]
  %v24 = vld [vmem:[%s0 + $0x1c] sm:$0xf]
  %v25 = vunpack.c.l.bf16 %v17
  %v26 = vunpack.c.l.bf16 %v18
  %v27 = vunpack.c.l.bf16 %v19
  %v28 = vunpack.c.l.bf16 %v20
  %v29 = vunpack.c.l.bf16 %v21
  %v30 = vunpack.c.l.bf16 %v22
  %v31 = vunpack.c.l.bf16 %v23
  %v32 = vunpack.c.l.bf16 %v24
  %v33 = vld [vmem:[%s2] sm:$0x1]
  %v35 = vperm.slane %v33, 0
  %v37 = vmul.f32 %v25, %v35
  %v38 = vmul.f32 %v26, %v35
  %v39 = vmul.f32 %v27, %v35
  %v40 = vmul.f32 %v28, %v35
  %v41 = vmul.f32 %v29, %v35
  %v42 = vmul.f32 %v30, %v35
  %v43 = vmul.f32 %v31, %v35
  %v44 = vmul.f32 %v32, %v35
  %v45 = vld [vmem:[%s3] sm:$0x1]
  %v47 = vperm.slane %v45, 0
  %v49 = vadd.f32 %v37, %v47
  %v50 = vadd.f32 %v38, %v47
  %v51 = vadd.f32 %v39, %v47
  %v52 = vadd.f32 %v40, %v47
  %v53 = vadd.f32 %v41, %v47
  %v54 = vadd.f32 %v42, %v47
  %v55 = vadd.f32 %v43, %v47
  %v56 = vadd.f32 %v44, %v47
  %v57 = vmax.f32 %v49, 0.0
  %v58 = vmax.f32 %v50, 0.0
  %v59 = vmax.f32 %v51, 0.0
  %v60 = vmax.f32 %v52, 0.0
  %v61 = vmax.f32 %v53, 0.0
  %v62 = vmax.f32 %v54, 0.0
  %v63 = vmax.f32 %v55, 0.0
  %v64 = vmax.f32 %v56, 0.0
  %v65 = vpack.c.bf16 %v58, %v57
  %v66 = vpack.c.bf16 %v60, %v59
  %v67 = vpack.c.bf16 %v62, %v61
  %v68 = vpack.c.bf16 %v64, %v63
  %v69 = vld [vmem:[%s1] sm:$0xf]
  %v70 = vld [vmem:[%s1 + $0x4] sm:$0xf]
  %v71 = vld [vmem:[%s1 + $0x8] sm:$0xf]
  %v72 = vld [vmem:[%s1 + $0xc] sm:$0xf]
  %v73 = vld [vmem:[%s1 + $0x10] sm:$0xf]
  %v74 = vld [vmem:[%s1 + $0x14] sm:$0xf]
  %v75 = vld [vmem:[%s1 + $0x18] sm:$0xf]
  %v76 = vld [vmem:[%s1 + $0x1c] sm:$0xf]
  %v77 = vld [vmem:[%s1 + $0x20] sm:$0xf]
  %v78 = vld [vmem:[%s1 + $0x24] sm:$0xf]
  %v79 = vld [vmem:[%s1 + $0x28] sm:$0xf]
  %v80 = vld [vmem:[%s1 + $0x2c] sm:$0xf]
  %v81 = vld [vmem:[%s1 + $0x30] sm:$0xf]
  %v82 = vld [vmem:[%s1 + $0x34] sm:$0xf]
  %v83 = vld [vmem:[%s1 + $0x38] sm:$0xf]
  %v84 = vld [vmem:[%s1 + $0x3c] sm:$0xf]
  %v101 = vunpack.c.l.b16 %v69
  %v102 = vunpack.c.l.b16 %v70
  %v103 = vunpack.c.l.b16 %v71
  %v104 = vunpack.c.l.b16 %v72
  %v105 = vunpack.c.l.b16 %v73
  %v106 = vunpack.c.l.b16 %v74
  %v107 = vunpack.c.l.b16 %v75
  %v108 = vunpack.c.l.b16 %v76
  %v109 = vunpack.c.l.b16 %v77
  %v110 = vunpack.c.l.b16 %v78
  %v111 = vunpack.c.l.b16 %v79
  %v112 = vunpack.c.l.b16 %v80
  %v113 = vunpack.c.l.b16 %v81
  %v114 = vunpack.c.l.b16 %v82
  %v115 = vunpack.c.l.b16 %v83
  %v116 = vunpack.c.l.b16 %v84
  %v117 = vpack.c.b16 %v102, %v101
  %v118 = vpack.c.b16 %v104, %v103
  %v119 = vpack.c.b16 %v106, %v105
  %v120 = vpack.c.b16 %v108, %v107
  %v121 = vpack.c.b16 %v110, %v109
  %v122 = vpack.c.b16 %v112, %v111
  %v123 = vpack.c.b16 %v114, %v113
  %v124 = vpack.c.b16 %v116, %v115
  %133 = vmatpush.bf16.msra.mxu0 %v124
  %134 = vmatpush.bf16.msra.mxu0 %v123
  %135 = vmatpush.bf16.msra.mxu0 %v122
  %136 = vmatpush.bf16.msra.mxu0 %v121
  %137 = vmatpush.bf16.msra.mxu0 %v120
  %138 = vmatpush.bf16.msra.mxu0 %v119
  %139 = vmatpush.bf16.msra.mxu0 %v118
  %140 = vmatpush.bf16.msra.mxu0 %v117
  %141 = vmatmul.bf16.gmra.mxu0 %v65
  %v142 = vpop.f32.mrf.mxu0
  %v143 = vadd.f32 0.0, %v142
  %v144 = vpop.f32.mrf.mxu0
  %v145 = vadd.f32 0.0, %v144
  %146 = vmatmul.bf16.gmra.mxu0 %v66
  %v147 = vpop.f32.mrf.mxu0
  %v148 = vadd.f32 0.0, %v147
  %v149 = vpop.f32.mrf.mxu0
  %v150 = vadd.f32 0.0, %v149
  %151 = vmatmul.bf16.gmra.mxu0 %v67
  %v152 = vpop.f32.mrf.mxu0
  %v153 = vadd.f32 0.0, %v152
  %v154 = vpop.f32.mrf.mxu0
  %v155 = vadd.f32 0.0, %v154
  %156 = vmatmul.bf16.gmra.mxu0 %v68
  %v157 = vpop.f32.mrf.mxu0
  %v158 = vadd.f32 0.0, %v157
  %v159 = vpop.f32.mrf.mxu0
  %v160 = vadd.f32 0.0, %v159
  %161 = vdwg.mxu0
  %v162 = vpack.c.bf16 %v143, %v143
  %v163 = vpack.c.bf16 %v145, %v145
  %v164 = vpack.c.bf16 %v148, %v148
  %v165 = vpack.c.bf16 %v150, %v150
  %v166 = vpack.c.bf16 %v153, %v153
  %v167 = vpack.c.bf16 %v155, %v155
  %v168 = vpack.c.bf16 %v158, %v158
  %v169 = vpack.c.bf16 %v160, %v160
  %170 = vst [vmem:[%s4] sm:$0xf] %v162
  %171 = vst [vmem:[%s4 + $0x4] sm:$0xf] %v163
  %172 = vst [vmem:[%s4 + $0x8] sm:$0xf] %v164
  %173 = vst [vmem:[%s4 + $0xc] sm:$0xf] %v165
  %174 = vst [vmem:[%s4 + $0x10] sm:$0xf] %v166
  %175 = vst [vmem:[%s4 + $0x14] sm:$0xf] %v167
  %176 = vst [vmem:[%s4 + $0x18] sm:$0xf] %v168
  %177 = vst [vmem:[%s4 + $0x1c] sm:$0xf] %v169
  // Predicated region
  $region18: #{generator_forward.11} parent=0 // pred_check
    _
  $region19: #{generator_forward.11} parent=0 // pred_check_branch
    %179 = sbr.rel (0) target = $region21
  $region20: #{generator_forward.11} parent=0 // pred_region
    _
  $region21: #{generator_forward.11} parent=0 // pred_fallthru
    _
  // Predicated region
  $region22: #{generator_forward.11} parent=0 // pred_check
    _
  $region23: #{generator_forward.11} parent=0 // pred_check_branch
    %181 = sbr.rel (0) target = $region25
  $region24: #{generator_forward.11} parent=0 // pred_region
    _
  $region25: #{generator_forward.11} parent=0 // pred_fallthru
    _

// kernel: tile.58
$region0: #{tile.58}
  #allocation0 [shape = 's32[1]{0}', space=sflag, size = 0x4, scoped, tag = 'scoped memory for tile.58']
  %s0 = inlined_call_operand.vmem [shape: f32[16], index: 0, kind: input, shape index: {}]
  %s1 = inlined_call_operand.vmem [shape: f32[4,16], index: 1, kind: output, shape index: {}]
  // Predicated region
  $region2: #{tile.58} parent=0 // pred_check
    _
  $region3: #{tile.58} parent=0 // pred_check_branch
    %3 = sbr.rel (0) target = $region5
  $region4: #{tile.58} parent=0 // pred_region
    _
  $region5: #{tile.58} parent=0 // pred_fallthru
    _
  %v4 = vld [vmem:[%s0] ss:$0 sm:$0xff]
  %5 = vst [vmem:[%s1] sm:$0xf] %v4

// kernel: tile.59
$region0: #{tile.59}
  %s0 = inlined_call_operand.vmem [shape: f32[4,16], index: 0, kind: input, shape index: {}]
  %s1 = inlined_call_operand.vmem [shape: f32[1,64], index: 1, kind: output, shape index: {}]
  $region1: #{tile.59} parent=0
    #allocation0 [shape = 'u8[4096]{0}', space=vmem, size = 0x1000, scoped, tag = 'scoped mem for output reshape']
    #allocation1 [shape = 'u8[4096]{0}', space=vmem, size = 0x1000, scoped, tag = 'scoped mem for input reshape']
    %s3 = ssub.s32 16, 1
    %v4 = vld [vmem:[%s0] sm:%s3]
    %5 = vst [vmem:[#allocation1] sm:%s3] %v4
    %v6 = vld [vmem:[#allocation1] sm:$0x1]
    %vm7 = vcmask 130048
    %8 = vst.msk [vmem:[#allocation0] sm:$0x1] %vm7, %v6
    %s9 = scalar_lea.vmem [#allocation1], 3
    %v10 = vld [vmem:[%s9] sm:$0x1]
    %11 = vrot.lane.b32.xlu0 %v10, 48
    %v12 = vpop.permute.xlu0 %11
    %vm13 = vcmask 523648
    %14 = vst.msk [vmem:[#allocation0] sm:$0x1] %vm13, %v12
    %s15 = scalar_lea.vmem [#allocation1], 2
    %v16 = vld [vmem:[%s15] sm:$0x1]
    %17 = vrot.lane.b32.xlu0 %v16, 32
    %v18 = vpop.permute.xlu0 %17
    %vm19 = vcmask 392448
    %20 = vst.msk [vmem:[#allocation0] sm:$0x1] %vm19, %v18
    %s21 = scalar_lea.vmem [#allocation1], 1
    %v22 = vld [vmem:[%s21] sm:$0x1]
    %23 = vrot.lane.b32.xlu0 %v22, 16
    %v24 = vpop.permute.xlu0 %23
    %vm25 = vcmask 261248
    %26 = vst.msk [vmem:[#allocation0] sm:$0x1] %vm25, %v24
    %s28 = ssub.s32 2, 1
    %v29 = vld [vmem:[#allocation0] sm:%s28]
    %s31 = ssub.s32 2, 1
    %32 = vst [vmem:[%s1] sm:%s31] %v29

// kernel: generator_forward.12
$region0: #{generator_forward.12}
  #allocation0 [shape = 'u32[]', space=smem, size = 0x4, offset = 0x4, fixed_abs, tag = 'smem constant byte address 0x4 - core index']
  #allocation1 [shape = 'u32[72,128]{1,0:T(1,128)}', space=vmem, size = 0x9000, scoped, tag = 'internal scratch']
  #allocation2 [shape = 'f32[8,128]{1,0:T(8,128)}', space=vmem, size = 0x1000, scoped, tag = 'scratch operand']
  #allocation3 [shape = 'f32[8,128]{1,0:T(8,128)}', space=vmem, size = 0x1000, scoped, tag = 'scratch operand']
  %s0 = inlined_call_operand.vmem [shape: bf16[16,128], index: 0, kind: input, shape index: {}]
  %s1 = inlined_call_operand.vmem [shape: f32[1,128], index: 1, kind: output, shape index: {0}]
  %s2 = inlined_call_operand.vmem [shape: f32[1,128], index: 2, kind: output, shape index: {1}]
  %3 = xla_tuple %s1, %s2
  %s4 = sld [smem:[#allocation0]]
  $region30: #{generator_forward.12} parent=0
    _
  %s6 = ssub.s32 1, %s4
  %s7 = scalar_select 0, %s6, %s4
  // Predicated region
  $region2: #{generator_forward.12} parent=0 // pred_check
    _
  $region3: #{generator_forward.12} parent=0 // pred_check_branch
    %9 = sbr.rel (0) target = $region5
  $region4: #{generator_forward.12} parent=0 // pred_region
    _
  $region5: #{generator_forward.12} parent=0 // pred_fallthru
    _
  %p10 = scmp.eq.s32.totalorder 0, 0
  // Predicated region
  $region6: #{generator_forward.12} parent=0 // pred_check
    %p11 = pneg %p10
  $region7: #{generator_forward.12} parent=0 // pred_check_branch
    %13 = sbr.rel (%p11) target = $region9
  $region8: #{generator_forward.12} parent=0 // pred_region
    %14 = vst [vmem:[#allocation2] sm:$0xff] 0.0
    %15 = vst [vmem:[#allocation3] sm:$0xff] 0.0
  $region9: #{generator_forward.12} parent=0 // pred_fallthru
    _
  %v16 = vld [vmem:[%s0] sm:$0xf]
  %v17 = vld [vmem:[%s0 + $0x4] sm:$0xf]
  %v18 = vunpack.c.l.bf16 %v16
  %v19 = vunpack.c.l.bf16 %v17
  %v20 = vld [vmem:[#allocation2] sm:$0xff]
  %v21 = vadd.f32 %v18, %v19
  %v22 = vadd.f32 %v20, %v21
  %23 = vst [vmem:[#allocation2] sm:$0xff] %v22
  %v24 = vld [vmem:[#allocation3] sm:$0xff]
  %v25 = vmul.f32 %v18, %v18
  %v26 = vmul.f32 %v19, %v19
  %v27 = vadd.f32 %v25, %v26
  %v28 = vadd.f32 %v24, %v27
  %29 = vst [vmem:[#allocation3] sm:$0xff] %v28
  // Predicated region
  $region10: #{generator_forward.12} parent=0 // pred_check
    %p30 = pneg %p10
  $region11: #{generator_forward.12} parent=0 // pred_check_branch
    %32 = sbr.rel (%p30) target = $region13
  $region12: #{generator_forward.12} parent=0 // pred_region
    %v33 = vld [vmem:[#allocation2] sm:$0xff]
    %v34 = vrot.slane %v33, 4
    %v35 = vadd.f32 %v33, %v34
    %v36 = vrot.slane %v35, 2
    %v37 = vadd.f32 %v35, %v36
    %v38 = vrot.slane %v37, 1
    %v39 = vadd.f32 %v37, %v38
    %40 = vst [vmem:[%s1] sm:$0x1] %v39
    %v41 = vld [vmem:[#allocation3] sm:$0xff]
    %v42 = vrot.slane %v41, 4
    %v43 = vadd.f32 %v41, %v42
    %v44 = vrot.slane %v43, 2
    %v45 = vadd.f32 %v43, %v44
    %v46 = vrot.slane %v45, 1
    %v47 = vadd.f32 %v45, %v46
    %48 = vst [vmem:[%s2] sm:$0x1] %v47
  $region13: #{generator_forward.12} parent=0 // pred_fallthru
    _
  // Predicated region
  $region14: #{generator_forward.12} parent=0 // pred_check
    _
  $region15: #{generator_forward.12} parent=0 // pred_check_branch
    %50 = sbr.rel (0) target = $region17
  $region16: #{generator_forward.12} parent=0 // pred_region
    _
  $region17: #{generator_forward.12} parent=0 // pred_fallthru
    _
  // Predicated region
  $region18: #{generator_forward.12} parent=0 // pred_check
    _
  $region19: #{generator_forward.12} parent=0 // pred_check_branch
    %52 = sbr.rel (0) target = $region21
  $region20: #{generator_forward.12} parent=0 // pred_region
    _
  $region21: #{generator_forward.12} parent=0 // pred_fallthru
    _
  // Predicated region
  $region22: #{generator_forward.12} parent=0 // pred_check
    _
  $region23: #{generator_forward.12} parent=0 // pred_check_branch
    %54 = sbr.rel (0) target = $region25
  $region24: #{generator_forward.12} parent=0 // pred_region
    _
  $region25: #{generator_forward.12} parent=0 // pred_fallthru
    _
  // Predicated region
  $region26: #{generator_forward.12} parent=0 // pred_check
    _
  $region27: #{generator_forward.12} parent=0 // pred_check_branch
    %56 = sbr.rel (0) target = $region29
  $region28: #{generator_forward.12} parent=0 // pred_region
    _
  $region29: #{generator_forward.12} parent=0 // pred_fallthru
    _

// kernel: generator_forward.13
$region0: #{generator_forward.13}
  #allocation0 [shape = 'u32[]', space=smem, size = 0x4, offset = 0x4, fixed_abs, tag = 'smem constant byte address 0x4 - core index']
  #allocation1 [shape = 'u32[72,128]{1,0:T(1,128)}', space=vmem, size = 0x9000, scoped, tag = 'internal scratch']
  %s0 = inlined_call_operand.vmem [shape: bf16[176,64], index: 0, kind: input, shape index: {}]
  %s1 = inlined_call_operand.vmem [shape: bf16[64,128], index: 1, kind: input, shape index: {}]
  %s2 = inlined_call_operand.vmem [shape: f32[1,64], index: 2, kind: input, shape index: {}]
  %s3 = inlined_call_operand.vmem [shape: f32[1,64], index: 3, kind: input, shape index: {}]
  %s4 = inlined_call_operand.vmem [shape: bf16[176,128], index: 4, kind: output, shape index: {}]
  %s5 = sld [smem:[#allocation0]]
  $region26: #{generator_forward.13} parent=0
    _
  %s7 = ssub.s32 1, %s5
  %s8 = scalar_select 0, %s7, %s5
  // Predicated region
  $region2: #{generator_forward.13} parent=0 // pred_check
    _
  $region3: #{generator_forward.13} parent=0 // pred_check_branch
    %10 = sbr.rel (0) target = $region5
  $region4: #{generator_forward.13} parent=0 // pred_region
    _
  $region5: #{generator_forward.13} parent=0 // pred_fallthru
    _
  // Predicated region
  $region6: #{generator_forward.13} parent=0 // pred_check
    _
  $region7: #{generator_forward.13} parent=0 // pred_check_branch
    %12 = sbr.rel (0) target = $region9
  $region8: #{generator_forward.13} parent=0 // pred_region
    _
  $region9: #{generator_forward.13} parent=0 // pred_fallthru
    _
  // Predicated region
  $region10: #{generator_forward.13} parent=0 // pred_check
    _
  $region11: #{generator_forward.13} parent=0 // pred_check_branch
    %14 = sbr.rel (0) target = $region13
  $region12: #{generator_forward.13} parent=0 // pred_region
    _
  $region13: #{generator_forward.13} parent=0 // pred_fallthru
    _
  // Predicated region
  $region14: #{generator_forward.13} parent=0 // pred_check
    _
  $region15: #{generator_forward.13} parent=0 // pred_check_branch
    %16 = sbr.rel (0) target = $region17
  $region16: #{generator_forward.13} parent=0 // pred_region
    _
  $region17: #{generator_forward.13} parent=0 // pred_fallthru
    _
  %v18 = vld [vmem:[%s0] sm:$0xf]
  %v19 = vld [vmem:[%s0 + $0x4] sm:$0xf]
  %v20 = vld [vmem:[%s0 + $0x8] sm:$0xf]
  %v21 = vld [vmem:[%s0 + $0xc] sm:$0xf]
  %v22 = vld [vmem:[%s0 + $0x10] sm:$0xf]
  %v23 = vld [vmem:[%s0 + $0x14] sm:$0xf]
  %v24 = vld [vmem:[%s0 + $0x18] sm:$0xf]
  %v25 = vld [vmem:[%s0 + $0x1c] sm:$0xf]
  %v26 = vld [vmem:[%s0 + $0x20] sm:$0xf]
  %v27 = vld [vmem:[%s0 + $0x24] sm:$0xf]
  %v28 = vld [vmem:[%s0 + $0x28] sm:$0xf]
  %v29 = vld [vmem:[%s0 + $0x2c] sm:$0xf]
  %v30 = vld [vmem:[%s0 + $0x30] sm:$0xf]
  %v31 = vld [vmem:[%s0 + $0x34] sm:$0xf]
  %v32 = vld [vmem:[%s0 + $0x38] sm:$0xf]
  %v33 = vld [vmem:[%s0 + $0x3c] sm:$0xf]
  %v34 = vld [vmem:[%s0 + $0x40] sm:$0xf]
  %v35 = vld [vmem:[%s0 + $0x44] sm:$0xf]
  %v36 = vld [vmem:[%s0 + $0x48] sm:$0xf]
  %v37 = vld [vmem:[%s0 + $0x4c] sm:$0xf]
  %v38 = vld [vmem:[%s0 + $0x50] sm:$0xf]
  %v39 = vld [vmem:[%s0 + $0x54] sm:$0xf]
  %v40 = vunpack.c.l.bf16 %v18
  %v41 = vunpack.c.l.bf16 %v19
  %v42 = vunpack.c.l.bf16 %v20
  %v43 = vunpack.c.l.bf16 %v21
  %v44 = vunpack.c.l.bf16 %v22
  %v45 = vunpack.c.l.bf16 %v23
  %v46 = vunpack.c.l.bf16 %v24
  %v47 = vunpack.c.l.bf16 %v25
  %v48 = vunpack.c.l.bf16 %v26
  %v49 = vunpack.c.l.bf16 %v27
  %v50 = vunpack.c.l.bf16 %v28
  %v51 = vunpack.c.l.bf16 %v29
  %v52 = vunpack.c.l.bf16 %v30
  %v53 = vunpack.c.l.bf16 %v31
  %v54 = vunpack.c.l.bf16 %v32
  %v55 = vunpack.c.l.bf16 %v33
  %v56 = vunpack.c.l.bf16 %v34
  %v57 = vunpack.c.l.bf16 %v35
  %v58 = vunpack.c.l.bf16 %v36
  %v59 = vunpack.c.l.bf16 %v37
  %v60 = vunpack.c.l.bf16 %v38
  %v61 = vunpack.c.l.bf16 %v39
  %v62 = vld [vmem:[%s2] sm:$0x1]
  %v64 = vperm.slane %v62, 0
  %v66 = vmul.f32 %v40, %v64
  %v67 = vmul.f32 %v41, %v64
  %v68 = vmul.f32 %v42, %v64
  %v69 = vmul.f32 %v43, %v64
  %v70 = vmul.f32 %v44, %v64
  %v71 = vmul.f32 %v45, %v64
  %v72 = vmul.f32 %v46, %v64
  %v73 = vmul.f32 %v47, %v64
  %v74 = vmul.f32 %v48, %v64
  %v75 = vmul.f32 %v49, %v64
  %v76 = vmul.f32 %v50, %v64
  %v77 = vmul.f32 %v51, %v64
  %v78 = vmul.f32 %v52, %v64
  %v79 = vmul.f32 %v53, %v64
  %v80 = vmul.f32 %v54, %v64
  %v81 = vmul.f32 %v55, %v64
  %v82 = vmul.f32 %v56, %v64
  %v83 = vmul.f32 %v57, %v64
  %v84 = vmul.f32 %v58, %v64
  %v85 = vmul.f32 %v59, %v64
  %v86 = vmul.f32 %v60, %v64
  %v87 = vmul.f32 %v61, %v64
  %v88 = vld [vmem:[%s3] sm:$0x1]
  %v90 = vperm.slane %v88, 0
  %v92 = vadd.f32 %v66, %v90
  %v93 = vadd.f32 %v67, %v90
  %v94 = vadd.f32 %v68, %v90
  %v95 = vadd.f32 %v69, %v90
  %v96 = vadd.f32 %v70, %v90
  %v97 = vadd.f32 %v71, %v90
  %v98 = vadd.f32 %v72, %v90
  %v99 = vadd.f32 %v73, %v90
  %v100 = vadd.f32 %v74, %v90
  %v101 = vadd.f32 %v75, %v90
  %v102 = vadd.f32 %v76, %v90
  %v103 = vadd.f32 %v77, %v90
  %v104 = vadd.f32 %v78, %v90
  %v105 = vadd.f32 %v79, %v90
  %v106 = vadd.f32 %v80, %v90
  %v107 = vadd.f32 %v81, %v90
  %v108 = vadd.f32 %v82, %v90
  %v109 = vadd.f32 %v83, %v90
  %v110 = vadd.f32 %v84, %v90
  %v111 = vadd.f32 %v85, %v90
  %v112 = vadd.f32 %v86, %v90
  %v113 = vadd.f32 %v87, %v90
  %v114 = vmax.f32 %v92, 0.0
  %v115 = vmax.f32 %v93, 0.0
  %v116 = vmax.f32 %v94, 0.0
  %v117 = vmax.f32 %v95, 0.0
  %v118 = vmax.f32 %v96, 0.0
  %v119 = vmax.f32 %v97, 0.0
  %v120 = vmax.f32 %v98, 0.0
  %v121 = vmax.f32 %v99, 0.0
  %v122 = vmax.f32 %v100, 0.0
  %v123 = vmax.f32 %v101, 0.0
  %v124 = vmax.f32 %v102, 0.0
  %v125 = vmax.f32 %v103, 0.0
  %v126 = vmax.f32 %v104, 0.0
  %v127 = vmax.f32 %v105, 0.0
  %v128 = vmax.f32 %v106, 0.0
  %v129 = vmax.f32 %v107, 0.0
  %v130 = vmax.f32 %v108, 0.0
  %v131 = vmax.f32 %v109, 0.0
  %v132 = vmax.f32 %v110, 0.0
  %v133 = vmax.f32 %v111, 0.0
  %v134 = vmax.f32 %v112, 0.0
  %v135 = vmax.f32 %v113, 0.0
  %v136 = vpack.c.bf16 %v115, %v114
  %v137 = vpack.c.bf16 %v117, %v116
  %v138 = vpack.c.bf16 %v119, %v118
  %v139 = vpack.c.bf16 %v121, %v120
  %v140 = vpack.c.bf16 %v123, %v122
  %v141 = vpack.c.bf16 %v125, %v124
  %v142 = vpack.c.bf16 %v127, %v126
  %v143 = vpack.c.bf16 %v129, %v128
  %v144 = vpack.c.bf16 %v131, %v130
  %v145 = vpack.c.bf16 %v133, %v132
  %v146 = vpack.c.bf16 %v135, %v134
  %v147 = vld [vmem:[%s1] sm:$0xf]
  %v148 = vld [vmem:[%s1 + $0x4] sm:$0xf]
  %v149 = vld [vmem:[%s1 + $0x8] sm:$0xf]
  %v150 = vld [vmem:[%s1 + $0xc] sm:$0xf]
  %v151 = vld [vmem:[%s1 + $0x10] sm:$0xf]
  %v152 = vld [vmem:[%s1 + $0x14] sm:$0xf]
  %v153 = vld [vmem:[%s1 + $0x18] sm:$0xf]
  %v154 = vld [vmem:[%s1 + $0x1c] sm:$0xf]
  %v163 = vunpack.c.l.b16 %v147
  %v164 = vunpack.c.l.b16 %v148
  %v165 = vunpack.c.l.b16 %v149
  %v166 = vunpack.c.l.b16 %v150
  %v167 = vunpack.c.l.b16 %v151
  %v168 = vunpack.c.l.b16 %v152
  %v169 = vunpack.c.l.b16 %v153
  %v170 = vunpack.c.l.b16 %v154
  %v171 = vpack.c.b16 %v164, %v163
  %v172 = vpack.c.b16 %v166, %v165
  %v173 = vpack.c.b16 %v168, %v167
  %v174 = vpack.c.b16 %v170, %v169
  %vm179 = vcmask 523264
  %v181 = vsel %vm179, %v136, 0
  %v184 = vsel %vm179, %v137, 0
  %v187 = vsel %vm179, %v138, 0
  %v190 = vsel %vm179, %v139, 0
  %v193 = vsel %vm179, %v140, 0
  %v196 = vsel %vm179, %v141, 0
  %v199 = vsel %vm179, %v142, 0
  %v202 = vsel %vm179, %v143, 0
  %v205 = vsel %vm179, %v144, 0
  %v208 = vsel %vm179, %v145, 0
  %v211 = vsel %vm179, %v146, 0
  %213 = vmatpush.bf16.msra.mxu0 0
  %214 = vmatpush.bf16.msra.mxu0 0
  %215 = vmatpush.bf16.msra.mxu0 0
  %216 = vmatpush.bf16.msra.mxu0 0
  %217 = vmatpush.bf16.msra.mxu0 %v174
  %218 = vmatpush.bf16.msra.mxu0 %v173
  %219 = vmatpush.bf16.msra.mxu0 %v172
  %220 = vmatpush.bf16.msra.mxu0 %v171
  %221 = vmatmul.bf16.gmra.mxu0 %v181
  %v222 = vpop.f32.mrf.mxu0
  %v223 = vadd.f32 0.0, %v222
  %v224 = vpop.f32.mrf.mxu0
  %v225 = vadd.f32 0.0, %v224
  %226 = vmatmul.bf16.gmra.mxu0 %v184
  %v227 = vpop.f32.mrf.mxu0
  %v228 = vadd.f32 0.0, %v227
  %v229 = vpop.f32.mrf.mxu0
  %v230 = vadd.f32 0.0, %v229
  %231 = vmatmul.bf16.gmra.mxu0 %v187
  %v232 = vpop.f32.mrf.mxu0
  %v233 = vadd.f32 0.0, %v232
  %v234 = vpop.f32.mrf.mxu0
  %v235 = vadd.f32 0.0, %v234
  %236 = vmatmul.bf16.gmra.mxu0 %v190
  %v237 = vpop.f32.mrf.mxu0
  %v238 = vadd.f32 0.0, %v237
  %v239 = vpop.f32.mrf.mxu0
  %v240 = vadd.f32 0.0, %v239
  %241 = vmatmul.bf16.gmra.mxu0 %v193
  %v242 = vpop.f32.mrf.mxu0
  %v243 = vadd.f32 0.0, %v242
  %v244 = vpop.f32.mrf.mxu0
  %v245 = vadd.f32 0.0, %v244
  %246 = vmatmul.bf16.gmra.mxu0 %v196
  %v247 = vpop.f32.mrf.mxu0
  %v248 = vadd.f32 0.0, %v247
  %v249 = vpop.f32.mrf.mxu0
  %v250 = vadd.f32 0.0, %v249
  %251 = vmatmul.bf16.gmra.mxu0 %v199
  %v252 = vpop.f32.mrf.mxu0
  %v253 = vadd.f32 0.0, %v252
  %v254 = vpop.f32.mrf.mxu0
  %v255 = vadd.f32 0.0, %v254
  %256 = vmatmul.bf16.gmra.mxu0 %v202
  %v257 = vpop.f32.mrf.mxu0
  %v258 = vadd.f32 0.0, %v257
  %v259 = vpop.f32.mrf.mxu0
  %v260 = vadd.f32 0.0, %v259
  %261 = vmatmul.bf16.gmra.mxu0 %v205
  %v262 = vpop.f32.mrf.mxu0
  %v263 = vadd.f32 0.0, %v262
  %v264 = vpop.f32.mrf.mxu0
  %v265 = vadd.f32 0.0, %v264
  %266 = vmatmul.bf16.gmra.mxu0 %v208
  %v267 = vpop.f32.mrf.mxu0
  %v268 = vadd.f32 0.0, %v267
  %v269 = vpop.f32.mrf.mxu0
  %v270 = vadd.f32 0.0, %v269
  %271 = vmatmul.bf16.gmra.mxu0 %v211
  %v272 = vpop.f32.mrf.mxu0
  %v273 = vadd.f32 0.0, %v272
  %v274 = vpop.f32.mrf.mxu0
  %v275 = vadd.f32 0.0, %v274
  %276 = vdwg.mxu0
  %v277 = vpack.c.bf16 %v223, %v223
  %v278 = vpack.c.bf16 %v225, %v225
  %v279 = vpack.c.bf16 %v228, %v228
  %v280 = vpack.c.bf16 %v230, %v230
  %v281 = vpack.c.bf16 %v233, %v233
  %v282 = vpack.c.bf16 %v235, %v235
  %v283 = vpack.c.bf16 %v238, %v238
  %v284 = vpack.c.bf16 %v240, %v240
  %v285 = vpack.c.bf16 %v243, %v243
  %v286 = vpack.c.bf16 %v245, %v245
  %v287 = vpack.c.bf16 %v248, %v248
  %v288 = vpack.c.bf16 %v250, %v250
  %v289 = vpack.c.bf16 %v253, %v253
  %v290 = vpack.c.bf16 %v255, %v255
  %v291 = vpack.c.bf16 %v258, %v258
  %v292 = vpack.c.bf16 %v260, %v260
  %v293 = vpack.c.bf16 %v263, %v263
  %v294 = vpack.c.bf16 %v265, %v265
  %v295 = vpack.c.bf16 %v268, %v268
  %v296 = vpack.c.bf16 %v270, %v270
  %v297 = vpack.c.bf16 %v273, %v273
  %v298 = vpack.c.bf16 %v275, %v275
  %299 = vst [vmem:[%s4] sm:$0xf] %v277
  %300 = vst [vmem:[%s4 + $0x4] sm:$0xf] %v278
  %301 = vst [vmem:[%s4 + $0x8] sm:$0xf] %v279
  %302 = vst [vmem:[%s4 + $0xc] sm:$0xf] %v280
  %303 = vst [vmem:[%s4 + $0x10] sm:$0xf] %v281
  %304 = vst [vmem:[%s4 + $0x14] sm:$0xf] %v282
  %305 = vst [vmem:[%s4 + $0x18] sm:$0xf] %v283
  %306 = vst [vmem:[%s4 + $0x1c] sm:$0xf] %v284
  %307 = vst [vmem:[%s4 + $0x20] sm:$0xf] %v285
  %308 = vst [vmem:[%s4 + $0x24] sm:$0xf] %v286
  %309 = vst [vmem:[%s4 + $0x28] sm:$0xf] %v287
  %310 = vst [vmem:[%s4 + $0x2c] sm:$0xf] %v288
  %311 = vst [vmem:[%s4 + $0x30] sm:$0xf] %v289
  %312 = vst [vmem:[%s4 + $0x34] sm:$0xf] %v290
  %313 = vst [vmem:[%s4 + $0x38] sm:$0xf] %v291
  %314 = vst [vmem:[%s4 + $0x3c] sm:$0xf] %v292
  %315 = vst [vmem:[%s4 + $0x40] sm:$0xf] %v293
  %316 = vst [vmem:[%s4 + $0x44] sm:$0xf] %v294
  %317 = vst [vmem:[%s4 + $0x48] sm:$0xf] %v295
  %318 = vst [vmem:[%s4 + $0x4c] sm:$0xf] %v296
  %319 = vst [vmem:[%s4 + $0x50] sm:$0xf] %v297
  %320 = vst [vmem:[%s4 + $0x54] sm:$0xf] %v298
  // Predicated region
  $region18: #{generator_forward.13} parent=0 // pred_check
    _
  $region19: #{generator_forward.13} parent=0 // pred_check_branch
    %322 = sbr.rel (0) target = $region21
  $region20: #{generator_forward.13} parent=0 // pred_region
    _
  $region21: #{generator_forward.13} parent=0 // pred_fallthru
    _
  // Predicated region
  $region22: #{generator_forward.13} parent=0 // pred_check
    _
  $region23: #{generator_forward.13} parent=0 // pred_check_branch
    %324 = sbr.rel (0) target = $region25
  $region24: #{generator_forward.13} parent=0 // pred_region
    _
  $region25: #{generator_forward.13} parent=0 // pred_fallthru
    _

// kernel: generator_forward.14
$region0: #{generator_forward.14}
  #allocation0 [shape = 'u32[]', space=smem, size = 0x4, offset = 0x4, fixed_abs, tag = 'smem constant byte address 0x4 - core index']
  #allocation1 [shape = 'u32[72,128]{1,0:T(1,128)}', space=vmem, size = 0x9000, scoped, tag = 'internal scratch']
  #allocation2 [shape = 'f32[8,256]{1,0:T(8,128)}', space=vmem, size = 0x2000, scoped, tag = 'scratch operand']
  #allocation3 [shape = 'f32[8,256]{1,0:T(8,128)}', space=vmem, size = 0x2000, scoped, tag = 'scratch operand']
  %s0 = inlined_call_operand.vmem [shape: bf16[32,256], index: 0, kind: input, shape index: {}]
  %s1 = inlined_call_operand.vmem [shape: f32[1,256], index: 1, kind: output, shape index: {0}]
  %s2 = inlined_call_operand.vmem [shape: f32[1,256], index: 2, kind: output, shape index: {1}]
  %3 = xla_tuple %s1, %s2
  %s4 = sld [smem:[#allocation0]]
  $region30: #{generator_forward.14} parent=0
    _
  %s6 = ssub.s32 1, %s4
  %s7 = scalar_select 0, %s6, %s4
  // Predicated region
  $region2: #{generator_forward.14} parent=0 // pred_check
    _
  $region3: #{generator_forward.14} parent=0 // pred_check_branch
    %9 = sbr.rel (0) target = $region5
  $region4: #{generator_forward.14} parent=0 // pred_region
    _
  $region5: #{generator_forward.14} parent=0 // pred_fallthru
    _
  %p10 = scmp.eq.s32.totalorder 0, 0
  // Predicated region
  $region6: #{generator_forward.14} parent=0 // pred_check
    %p11 = pneg %p10
  $region7: #{generator_forward.14} parent=0 // pred_check_branch
    %13 = sbr.rel (%p11) target = $region9
  $region8: #{generator_forward.14} parent=0 // pred_region
    %14 = vst [vmem:[#allocation2] sm:$0xff] 0.0
    %15 = vst [vmem:[#allocation2 + $0x8] sm:$0xff] 0.0
    %16 = vst [vmem:[#allocation3] sm:$0xff] 0.0
    %17 = vst [vmem:[#allocation3 + $0x8] sm:$0xff] 0.0
  $region9: #{generator_forward.14} parent=0 // pred_fallthru
    _
  %v18 = vld [vmem:[%s0] sm:$0xff]
  %v19 = vld [vmem:[%s0 + $0x8] sm:$0xff]
  %v20 = vld [vmem:[%s0 + $0x10] sm:$0xff]
  %v21 = vld [vmem:[%s0 + $0x18] sm:$0xff]
  %v22 = vunpack.c.l.bf16 %v18
  %v23 = vunpack.c.h.bf16 %v18
  %v24 = vunpack.c.l.bf16 %v19
  %v25 = vunpack.c.h.bf16 %v19
  %v26 = vunpack.c.l.bf16 %v20
  %v27 = vunpack.c.h.bf16 %v20
  %v28 = vunpack.c.l.bf16 %v21
  %v29 = vunpack.c.h.bf16 %v21
  %v30 = vld [vmem:[#allocation2] sm:$0xff]
  %v31 = vld [vmem:[#allocation2 + $0x8] sm:$0xff]
  %v32 = vadd.f32 %v22, %v24
  %v33 = vadd.f32 %v32, %v26
  %v34 = vadd.f32 %v33, %v28
  %v35 = vadd.f32 %v23, %v25
  %v36 = vadd.f32 %v35, %v27
  %v37 = vadd.f32 %v36, %v29
  %v38 = vadd.f32 %v30, %v34
  %v39 = vadd.f32 %v31, %v37
  %40 = vst [vmem:[#allocation2] sm:$0xff] %v38
  %41 = vst [vmem:[#allocation2 + $0x8] sm:$0xff] %v39
  %v42 = vld [vmem:[#allocation3] sm:$0xff]
  %v43 = vld [vmem:[#allocation3 + $0x8] sm:$0xff]
  %v44 = vmul.f32 %v22, %v22
  %v45 = vmul.f32 %v23, %v23
  %v46 = vmul.f32 %v24, %v24
  %v47 = vmul.f32 %v25, %v25
  %v48 = vmul.f32 %v26, %v26
  %v49 = vmul.f32 %v27, %v27
  %v50 = vmul.f32 %v28, %v28
  %v51 = vmul.f32 %v29, %v29
  %v52 = vadd.f32 %v44, %v46
  %v53 = vadd.f32 %v52, %v48
  %v54 = vadd.f32 %v53, %v50
  %v55 = vadd.f32 %v45, %v47
  %v56 = vadd.f32 %v55, %v49
  %v57 = vadd.f32 %v56, %v51
  %v58 = vadd.f32 %v42, %v54
  %v59 = vadd.f32 %v43, %v57
  %60 = vst [vmem:[#allocation3] sm:$0xff] %v58
  %61 = vst [vmem:[#allocation3 + $0x8] sm:$0xff] %v59
  // Predicated region
  $region10: #{generator_forward.14} parent=0 // pred_check
    %p62 = pneg %p10
  $region11: #{generator_forward.14} parent=0 // pred_check_branch
    %64 = sbr.rel (%p62) target = $region13
  $region12: #{generator_forward.14} parent=0 // pred_region
    %v65 = vld [vmem:[#allocation2] sm:$0xff]
    %v66 = vld [vmem:[#allocation2 + $0x8] sm:$0xff]
    %v67 = vrot.slane %v65, 4
    %v68 = vadd.f32 %v65, %v67
    %v69 = vrot.slane %v68, 2
    %v70 = vadd.f32 %v68, %v69
    %v71 = vrot.slane %v70, 1
    %v72 = vadd.f32 %v70, %v71
    %v73 = vrot.slane %v66, 4
    %v74 = vadd.f32 %v66, %v73
    %v75 = vrot.slane %v74, 2
    %v76 = vadd.f32 %v74, %v75
    %v77 = vrot.slane %v76, 1
    %v78 = vadd.f32 %v76, %v77
    %v81 = vrot.slane %v78, 7
    %vm82 = vcmask 1040384
    %v83 = vsel %vm82, %v72, %v81
    %v85 = vlaneseq
    %vm86 = vcmp.ge.s32.totalorder %v85, 0
    %vm87 = vcmp.lt.s32.totalorder %v85, 256
    %vm88 = vmand %vm86, %vm87
    %89 = vst.msk [vmem:[%s1] sm:$0x3] %vm88, %v83
    %v90 = vld [vmem:[#allocation3] sm:$0xff]
    %v91 = vld [vmem:[#allocation3 + $0x8] sm:$0xff]
    %v92 = vrot.slane %v90, 4
    %v93 = vadd.f32 %v90, %v92
    %v94 = vrot.slane %v93, 2
    %v95 = vadd.f32 %v93, %v94
    %v96 = vrot.slane %v95, 1
    %v97 = vadd.f32 %v95, %v96
    %v98 = vrot.slane %v91, 4
    %v99 = vadd.f32 %v91, %v98
    %v100 = vrot.slane %v99, 2
    %v101 = vadd.f32 %v99, %v100
    %v102 = vrot.slane %v101, 1
    %v103 = vadd.f32 %v101, %v102
    %v106 = vrot.slane %v103, 7
    %v107 = vsel %vm82, %v97, %v106
    %109 = vst.msk [vmem:[%s2] sm:$0x3] %vm88, %v107
  $region13: #{generator_forward.14} parent=0 // pred_fallthru
    _
  // Predicated region
  $region14: #{generator_forward.14} parent=0 // pred_check
    _
  $region15: #{generator_forward.14} parent=0 // pred_check_branch
    %111 = sbr.rel (0) target = $region17
  $region16: #{generator_forward.14} parent=0 // pred_region
    _
  $region17: #{generator_forward.14} parent=0 // pred_fallthru
    _
  // Predicated region
  $region18: #{generator_forward.14} parent=0 // pred_check
    _
  $region19: #{generator_forward.14} parent=0 // pred_check_branch
    %113 = sbr.rel (0) target = $region21
  $region20: #{generator_forward.14} parent=0 // pred_region
    _
  $region21: #{generator_forward.14} parent=0 // pred_fallthru
    _
  // Predicated region
  $region22: #{generator_forward.14} parent=0 // pred_check
    _
  $region23: #{generator_forward.14} parent=0 // pred_check_branch
    %115 = sbr.rel (0) target = $region25
  $region24: #{generator_forward.14} parent=0 // pred_region
    _
  $region25: #{generator_forward.14} parent=0 // pred_fallthru
    _
  // Predicated region
  $region26: #{generator_forward.14} parent=0 // pred_check
    _
  $region27: #{generator_forward.14} parent=0 // pred_check_branch
    %117 = sbr.rel (0) target = $region29
  $region28: #{generator_forward.14} parent=0 // pred_region
    _
  $region29: #{generator_forward.14} parent=0 // pred_fallthru
    _

// kernel: generator_forward.15
$region0: #{generator_forward.15}
  #allocation0 [shape = 'u32[]', space=smem, size = 0x4, offset = 0x4, fixed_abs, tag = 'smem constant byte address 0x4 - core index']
  #allocation1 [shape = 'u32[72,128]{1,0:T(1,128)}', space=vmem, size = 0x9000, scoped, tag = 'internal scratch']
  %s0 = inlined_call_operand.vmem [shape: bf16[592,64], index: 0, kind: input, shape index: {}]
  %s1 = inlined_call_operand.vmem [shape: bf16[64,128], index: 1, kind: input, shape index: {}]
  %s2 = inlined_call_operand.vmem [shape: f32[1,64], index: 2, kind: input, shape index: {}]
  %s3 = inlined_call_operand.vmem [shape: f32[1,64], index: 3, kind: input, shape index: {}]
  %s4 = inlined_call_operand.vmem [shape: bf16[592,128], index: 4, kind: output, shape index: {}]
  %s5 = sld [smem:[#allocation0]]
  $region26: #{generator_forward.15} parent=0
    _
  %s7 = ssub.s32 1, %s5
  %s8 = scalar_select 0, %s7, %s5
  // Predicated region
  $region2: #{generator_forward.15} parent=0 // pred_check
    _
  $region3: #{generator_forward.15} parent=0 // pred_check_branch
    %10 = sbr.rel (0) target = $region5
  $region4: #{generator_forward.15} parent=0 // pred_region
    _
  $region5: #{generator_forward.15} parent=0 // pred_fallthru
    _
  // Predicated region
  $region6: #{generator_forward.15} parent=0 // pred_check
    _
  $region7: #{generator_forward.15} parent=0 // pred_check_branch
    %12 = sbr.rel (0) target = $region9
  $region8: #{generator_forward.15} parent=0 // pred_region
    _
  $region9: #{generator_forward.15} parent=0 // pred_fallthru
    _
  // Predicated region
  $region10: #{generator_forward.15} parent=0 // pred_check
    _
  $region11: #{generator_forward.15} parent=0 // pred_check_branch
    %14 = sbr.rel (0) target = $region13
  $region12: #{generator_forward.15} parent=0 // pred_region
    _
  $region13: #{generator_forward.15} parent=0 // pred_fallthru
    _
  // Predicated region
  $region14: #{generator_forward.15} parent=0 // pred_check
    _
  $region15: #{generator_forward.15} parent=0 // pred_check_branch
    %16 = sbr.rel (0) target = $region17
  $region16: #{generator_forward.15} parent=0 // pred_region
    _
  $region17: #{generator_forward.15} parent=0 // pred_fallthru
    _
  %v18 = vld [vmem:[%s0] sm:$0xf]
  %v19 = vld [vmem:[%s0 + $0x4] sm:$0xf]
  %v20 = vld [vmem:[%s0 + $0x8] sm:$0xf]
  %v21 = vld [vmem:[%s0 + $0xc] sm:$0xf]
  %v22 = vld [vmem:[%s0 + $0x10] sm:$0xf]
  %v23 = vld [vmem:[%s0 + $0x14] sm:$0xf]
  %v24 = vld [vmem:[%s0 + $0x18] sm:$0xf]
  %v25 = vld [vmem:[%s0 + $0x1c] sm:$0xf]
  %v26 = vld [vmem:[%s0 + $0x20] sm:$0xf]
  %v27 = vld [vmem:[%s0 + $0x24] sm:$0xf]
  %v28 = vld [vmem:[%s0 + $0x28] sm:$0xf]
  %v29 = vld [vmem:[%s0 + $0x2c] sm:$0xf]
  %v30 = vld [vmem:[%s0 + $0x30] sm:$0xf]
  %v31 = vld [vmem:[%s0 + $0x34] sm:$0xf]
  %v32 = vld [vmem:[%s0 + $0x38] sm:$0xf]
  %v33 = vld [vmem:[%s0 + $0x3c] sm:$0xf]
  %v34 = vld [vmem:[%s0 + $0x40] sm:$0xf]
  %v35 = vld [vmem:[%s0 + $0x44] sm:$0xf]
  %v36 = vld [vmem:[%s0 + $0x48] sm:$0xf]
  %v37 = vld [vmem:[%s0 + $0x4c] sm:$0xf]
  %v38 = vld [vmem:[%s0 + $0x50] sm:$0xf]
  %v39 = vld [vmem:[%s0 + $0x54] sm:$0xf]
  %v40 = vld [vmem:[%s0 + $0x58] sm:$0xf]
  %v41 = vld [vmem:[%s0 + $0x5c] sm:$0xf]
  %v42 = vld [vmem:[%s0 + $0x60] sm:$0xf]
  %v43 = vld [vmem:[%s0 + $0x64] sm:$0xf]
  %v44 = vld [vmem:[%s0 + $0x68] sm:$0xf]
  %v45 = vld [vmem:[%s0 + $0x6c] sm:$0xf]
  %v46 = vld [vmem:[%s0 + $0x70] sm:$0xf]
  %v47 = vld [vmem:[%s0 + $0x74] sm:$0xf]
  %v48 = vld [vmem:[%s0 + $0x78] sm:$0xf]
  %v49 = vld [vmem:[%s0 + $0x7c] sm:$0xf]
  %v50 = vld [vmem:[%s0 + $0x80] sm:$0xf]
  %v51 = vld [vmem:[%s0 + $0x84] sm:$0xf]
  %v52 = vld [vmem:[%s0 + $0x88] sm:$0xf]
  %v53 = vld [vmem:[%s0 + $0x8c] sm:$0xf]
  %v54 = vld [vmem:[%s0 + $0x90] sm:$0xf]
  %v55 = vld [vmem:[%s0 + $0x94] sm:$0xf]
  %v56 = vld [vmem:[%s0 + $0x98] sm:$0xf]
  %v57 = vld [vmem:[%s0 + $0x9c] sm:$0xf]
  %v58 = vld [vmem:[%s0 + $0xa0] sm:$0xf]
  %v59 = vld [vmem:[%s0 + $0xa4] sm:$0xf]
  %v60 = vld [vmem:[%s0 + $0xa8] sm:$0xf]
  %v61 = vld [vmem:[%s0 + $0xac] sm:$0xf]
  %v62 = vld [vmem:[%s0 + $0xb0] sm:$0xf]
  %v63 = vld [vmem:[%s0 + $0xb4] sm:$0xf]
  %v64 = vld [vmem:[%s0 + $0xb8] sm:$0xf]
  %v65 = vld [vmem:[%s0 + $0xbc] sm:$0xf]
  %v66 = vld [vmem:[%s0 + $0xc0] sm:$0xf]
  %v67 = vld [vmem:[%s0 + $0xc4] sm:$0xf]
  %v68 = vld [vmem:[%s0 + $0xc8] sm:$0xf]
  %v69 = vld [vmem:[%s0 + $0xcc] sm:$0xf]
  %v70 = vld [vmem:[%s0 + $0xd0] sm:$0xf]
  %v71 = vld [vmem:[%s0 + $0xd4] sm:$0xf]
  %v72 = vld [vmem:[%s0 + $0xd8] sm:$0xf]
  %v73 = vld [vmem:[%s0 + $0xdc] sm:$0xf]
  %v74 = vld [vmem:[%s0 + $0xe0] sm:$0xf]
  %v75 = vld [vmem:[%s0 + $0xe4] sm:$0xf]
  %v76 = vld [vmem:[%s0 + $0xe8] sm:$0xf]
  %v77 = vld [vmem:[%s0 + $0xec] sm:$0xf]
  %v78 = vld [vmem:[%s0 + $0xf0] sm:$0xf]
  %v79 = vld [vmem:[%s0 + $0xf4] sm:$0xf]
  %v80 = vld [vmem:[%s0 + $0xf8] sm:$0xf]
  %v81 = vld [vmem:[%s0 + $0xfc] sm:$0xf]
  %v82 = vld [vmem:[%s0 + $0x100] sm:$0xf]
  %v83 = vld [vmem:[%s0 + $0x104] sm:$0xf]
  %v84 = vld [vmem:[%s0 + $0x108] sm:$0xf]
  %v85 = vld [vmem:[%s0 + $0x10c] sm:$0xf]
  %v86 = vld [vmem:[%s0 + $0x110] sm:$0xf]
  %v87 = vld [vmem:[%s0 + $0x114] sm:$0xf]
  %v88 = vld [vmem:[%s0 + $0x118] sm:$0xf]
  %v89 = vld [vmem:[%s0 + $0x11c] sm:$0xf]
  %v90 = vld [vmem:[%s0 + $0x120] sm:$0xf]
  %v91 = vld [vmem:[%s0 + $0x124] sm:$0xf]
  %v92 = vunpack.c.l.bf16 %v18
  %v93 = vunpack.c.l.bf16 %v19
  %v94 = vunpack.c.l.bf16 %v20
  %v95 = vunpack.c.l.bf16 %v21
  %v96 = vunpack.c.l.bf16 %v22
  %v97 = vunpack.c.l.bf16 %v23
  %v98 = vunpack.c.l.bf16 %v24
  %v99 = vunpack.c.l.bf16 %v25
  %v100 = vunpack.c.l.bf16 %v26
  %v101 = vunpack.c.l.bf16 %v27
  %v102 = vunpack.c.l.bf16 %v28
  %v103 = vunpack.c.l.bf16 %v29
  %v104 = vunpack.c.l.bf16 %v30
  %v105 = vunpack.c.l.bf16 %v31
  %v106 = vunpack.c.l.bf16 %v32
  %v107 = vunpack.c.l.bf16 %v33
  %v108 = vunpack.c.l.bf16 %v34
  %v109 = vunpack.c.l.bf16 %v35
  %v110 = vunpack.c.l.bf16 %v36
  %v111 = vunpack.c.l.bf16 %v37
  %v112 = vunpack.c.l.bf16 %v38
  %v113 = vunpack.c.l.bf16 %v39
  %v114 = vunpack.c.l.bf16 %v40
  %v115 = vunpack.c.l.bf16 %v41
  %v116 = vunpack.c.l.bf16 %v42
  %v117 = vunpack.c.l.bf16 %v43
  %v118 = vunpack.c.l.bf16 %v44
  %v119 = vunpack.c.l.bf16 %v45
  %v120 = vunpack.c.l.bf16 %v46
  %v121 = vunpack.c.l.bf16 %v47
  %v122 = vunpack.c.l.bf16 %v48
  %v123 = vunpack.c.l.bf16 %v49
  %v124 = vunpack.c.l.bf16 %v50
  %v125 = vunpack.c.l.bf16 %v51
  %v126 = vunpack.c.l.bf16 %v52
  %v127 = vunpack.c.l.bf16 %v53
  %v128 = vunpack.c.l.bf16 %v54
  %v129 = vunpack.c.l.bf16 %v55
  %v130 = vunpack.c.l.bf16 %v56
  %v131 = vunpack.c.l.bf16 %v57
  %v132 = vunpack.c.l.bf16 %v58
  %v133 = vunpack.c.l.bf16 %v59
  %v134 = vunpack.c.l.bf16 %v60
  %v135 = vunpack.c.l.bf16 %v61
  %v136 = vunpack.c.l.bf16 %v62
  %v137 = vunpack.c.l.bf16 %v63
  %v138 = vunpack.c.l.bf16 %v64
  %v139 = vunpack.c.l.bf16 %v65
  %v140 = vunpack.c.l.bf16 %v66
  %v141 = vunpack.c.l.bf16 %v67
  %v142 = vunpack.c.l.bf16 %v68
  %v143 = vunpack.c.l.bf16 %v69
  %v144 = vunpack.c.l.bf16 %v70
  %v145 = vunpack.c.l.bf16 %v71
  %v146 = vunpack.c.l.bf16 %v72
  %v147 = vunpack.c.l.bf16 %v73
  %v148 = vunpack.c.l.bf16 %v74
  %v149 = vunpack.c.l.bf16 %v75
  %v150 = vunpack.c.l.bf16 %v76
  %v151 = vunpack.c.l.bf16 %v77
  %v152 = vunpack.c.l.bf16 %v78
  %v153 = vunpack.c.l.bf16 %v79
  %v154 = vunpack.c.l.bf16 %v80
  %v155 = vunpack.c.l.bf16 %v81
  %v156 = vunpack.c.l.bf16 %v82
  %v157 = vunpack.c.l.bf16 %v83
  %v158 = vunpack.c.l.bf16 %v84
  %v159 = vunpack.c.l.bf16 %v85
  %v160 = vunpack.c.l.bf16 %v86
  %v161 = vunpack.c.l.bf16 %v87
  %v162 = vunpack.c.l.bf16 %v88
  %v163 = vunpack.c.l.bf16 %v89
  %v164 = vunpack.c.l.bf16 %v90
  %v165 = vunpack.c.l.bf16 %v91
  %v166 = vld [vmem:[%s2] sm:$0x1]
  %v168 = vperm.slane %v166, 0
  %v170 = vmul.f32 %v92, %v168
  %v171 = vmul.f32 %v93, %v168
  %v172 = vmul.f32 %v94, %v168
  %v173 = vmul.f32 %v95, %v168
  %v174 = vmul.f32 %v96, %v168
  %v175 = vmul.f32 %v97, %v168
  %v176 = vmul.f32 %v98, %v168
  %v177 = vmul.f32 %v99, %v168
  %v178 = vmul.f32 %v100, %v168
  %v179 = vmul.f32 %v101, %v168
  %v180 = vmul.f32 %v102, %v168
  %v181 = vmul.f32 %v103, %v168
  %v182 = vmul.f32 %v104, %v168
  %v183 = vmul.f32 %v105, %v168
  %v184 = vmul.f32 %v106, %v168
  %v185 = vmul.f32 %v107, %v168
  %v186 = vmul.f32 %v108, %v168
  %v187 = vmul.f32 %v109, %v168
  %v188 = vmul.f32 %v110, %v168
  %v189 = vmul.f32 %v111, %v168
  %v190 = vmul.f32 %v112, %v168
  %v191 = vmul.f32 %v113, %v168
  %v192 = vmul.f32 %v114, %v168
  %v193 = vmul.f32 %v115, %v168
  %v194 = vmul.f32 %v116, %v168
  %v195 = vmul.f32 %v117, %v168
  %v196 = vmul.f32 %v118, %v168
  %v197 = vmul.f32 %v119, %v168
  %v198 = vmul.f32 %v120, %v168
  %v199 = vmul.f32 %v121, %v168
  %v200 = vmul.f32 %v122, %v168
  %v201 = vmul.f32 %v123, %v168
  %v202 = vmul.f32 %v124, %v168
  %v203 = vmul.f32 %v125, %v168
  %v204 = vmul.f32 %v126, %v168
  %v205 = vmul.f32 %v127, %v168
  %v206 = vmul.f32 %v128, %v168
  %v207 = vmul.f32 %v129, %v168
  %v208 = vmul.f32 %v130, %v168
  %v209 = vmul.f32 %v131, %v168
  %v210 = vmul.f32 %v132, %v168
  %v211 = vmul.f32 %v133, %v168
  %v212 = vmul.f32 %v134, %v168
  %v213 = vmul.f32 %v135, %v168
  %v214 = vmul.f32 %v136, %v168
  %v215 = vmul.f32 %v137, %v168
  %v216 = vmul.f32 %v138, %v168
  %v217 = vmul.f32 %v139, %v168
  %v218 = vmul.f32 %v140, %v168
  %v219 = vmul.f32 %v141, %v168
  %v220 = vmul.f32 %v142, %v168
  %v221 = vmul.f32 %v143, %v168
  %v222 = vmul.f32 %v144, %v168
  %v223 = vmul.f32 %v145, %v168
  %v224 = vmul.f32 %v146, %v168
  %v225 = vmul.f32 %v147, %v168
  %v226 = vmul.f32 %v148, %v168
  %v227 = vmul.f32 %v149, %v168
  %v228 = vmul.f32 %v150, %v168
  %v229 = vmul.f32 %v151, %v168
  %v230 = vmul.f32 %v152, %v168
  %v231 = vmul.f32 %v153, %v168
  %v232 = vmul.f32 %v154, %v168
  %v233 = vmul.f32 %v155, %v168
  %v234 = vmul.f32 %v156, %v168
  %v235 = vmul.f32 %v157, %v168
  %v236 = vmul.f32 %v158, %v168
  %v237 = vmul.f32 %v159, %v168
  %v238 = vmul.f32 %v160, %v168
  %v239 = vmul.f32 %v161, %v168
  %v240 = vmul.f32 %v162, %v168
  %v241 = vmul.f32 %v163, %v168
  %v242 = vmul.f32 %v164, %v168
  %v243 = vmul.f32 %v165, %v168
  %v244 = vld [vmem:[%s3] sm:$0x1]
  %v246 = vperm.slane %v244, 0
  %v248 = vadd.f32 %v170, %v246
  %v249 = vadd.f32 %v171, %v246
  %v250 = vadd.f32 %v172, %v246
  %v251 = vadd.f32 %v173, %v246
  %v252 = vadd.f32 %v174, %v246
  %v253 = vadd.f32 %v175, %v246
  %v254 = vadd.f32 %v176, %v246
  %v255 = vadd.f32 %v177, %v246
  %v256 = vadd.f32 %v178, %v246
  %v257 = vadd.f32 %v179, %v246
  %v258 = vadd.f32 %v180, %v246
  %v259 = vadd.f32 %v181, %v246
  %v260 = vadd.f32 %v182, %v246
  %v261 = vadd.f32 %v183, %v246
  %v262 = vadd.f32 %v184, %v246
  %v263 = vadd.f32 %v185, %v246
  %v264 = vadd.f32 %v186, %v246
  %v265 = vadd.f32 %v187, %v246
  %v266 = vadd.f32 %v188, %v246
  %v267 = vadd.f32 %v189, %v246
  %v268 = vadd.f32 %v190, %v246
  %v269 = vadd.f32 %v191, %v246
  %v270 = vadd.f32 %v192, %v246
  %v271 = vadd.f32 %v193, %v246
  %v272 = vadd.f32 %v194, %v246
  %v273 = vadd.f32 %v195, %v246
  %v274 = vadd.f32 %v196, %v246
  %v275 = vadd.f32 %v197, %v246
  %v276 = vadd.f32 %v198, %v246
  %v277 = vadd.f32 %v199, %v246
  %v278 = vadd.f32 %v200, %v246
  %v279 = vadd.f32 %v201, %v246
  %v280 = vadd.f32 %v202, %v246
  %v281 = vadd.f32 %v203, %v246
  %v282 = vadd.f32 %v204, %v246
  %v283 = vadd.f32 %v205, %v246
  %v284 = vadd.f32 %v206, %v246
  %v285 = vadd.f32 %v207, %v246
  %v286 = vadd.f32 %v208, %v246
  %v287 = vadd.f32 %v209, %v246
  %v288 = vadd.f32 %v210, %v246
  %v289 = vadd.f32 %v211, %v246
  %v290 = vadd.f32 %v212, %v246
  %v291 = vadd.f32 %v213, %v246
  %v292 = vadd.f32 %v214, %v246
  %v293 = vadd.f32 %v215, %v246
  %v294 = vadd.f32 %v216, %v246
  %v295 = vadd.f32 %v217, %v246
  %v296 = vadd.f32 %v218, %v246
  %v297 = vadd.f32 %v219, %v246
  %v298 = vadd.f32 %v220, %v246
  %v299 = vadd.f32 %v221, %v246
  %v300 = vadd.f32 %v222, %v246
  %v301 = vadd.f32 %v223, %v246
  %v302 = vadd.f32 %v224, %v246
  %v303 = vadd.f32 %v225, %v246
  %v304 = vadd.f32 %v226, %v246
  %v305 = vadd.f32 %v227, %v246
  %v306 = vadd.f32 %v228, %v246
  %v307 = vadd.f32 %v229, %v246
  %v308 = vadd.f32 %v230, %v246
  %v309 = vadd.f32 %v231, %v246
  %v310 = vadd.f32 %v232, %v246
  %v311 = vadd.f32 %v233, %v246
  %v312 = vadd.f32 %v234, %v246
  %v313 = vadd.f32 %v235, %v246
  %v314 = vadd.f32 %v236, %v246
  %v315 = vadd.f32 %v237, %v246
  %v316 = vadd.f32 %v238, %v246
  %v317 = vadd.f32 %v239, %v246
  %v318 = vadd.f32 %v240, %v246
  %v319 = vadd.f32 %v241, %v246
  %v320 = vadd.f32 %v242, %v246
  %v321 = vadd.f32 %v243, %v246
  %v322 = vmax.f32 %v248, 0.0
  %v323 = vmax.f32 %v249, 0.0
  %v324 = vmax.f32 %v250, 0.0
  %v325 = vmax.f32 %v251, 0.0
  %v326 = vmax.f32 %v252, 0.0
  %v327 = vmax.f32 %v253, 0.0
  %v328 = vmax.f32 %v254, 0.0
  %v329 = vmax.f32 %v255, 0.0
  %v330 = vmax.f32 %v256, 0.0
  %v331 = vmax.f32 %v257, 0.0
  %v332 = vmax.f32 %v258, 0.0
  %v333 = vmax.f32 %v259, 0.0
  %v334 = vmax.f32 %v260, 0.0
  %v335 = vmax.f32 %v261, 0.0
  %v336 = vmax.f32 %v262, 0.0
  %v337 = vmax.f32 %v263, 0.0
  %v338 = vmax.f32 %v264, 0.0
  %v339 = vmax.f32 %v265, 0.0
  %v340 = vmax.f32 %v266, 0.0
  %v341 = vmax.f32 %v267, 0.0
  %v342 = vmax.f32 %v268, 0.0
  %v343 = vmax.f32 %v269, 0.0
  %v344 = vmax.f32 %v270, 0.0
  %v345 = vmax.f32 %v271, 0.0
  %v346 = vmax.f32 %v272, 0.0
  %v347 = vmax.f32 %v273, 0.0
  %v348 = vmax.f32 %v274, 0.0
  %v349 = vmax.f32 %v275, 0.0
  %v350 = vmax.f32 %v276, 0.0
  %v351 = vmax.f32 %v277, 0.0
  %v352 = vmax.f32 %v278, 0.0
  %v353 = vmax.f32 %v279, 0.0
  %v354 = vmax.f32 %v280, 0.0
  %v355 = vmax.f32 %v281, 0.0
  %v356 = vmax.f32 %v282, 0.0
  %v357 = vmax.f32 %v283, 0.0
  %v358 = vmax.f32 %v284, 0.0
  %v359 = vmax.f32 %v285, 0.0
  %v360 = vmax.f32 %v286, 0.0
  %v361 = vmax.f32 %v287, 0.0
  %v362 = vmax.f32 %v288, 0.0
  %v363 = vmax.f32 %v289, 0.0
  %v364 = vmax.f32 %v290, 0.0
  %v365 = vmax.f32 %v291, 0.0
  %v366 = vmax.f32 %v292, 0.0
  %v367 = vmax.f32 %v293, 0.0
  %v368 = vmax.f32 %v294, 0.0
  %v369 = vmax.f32 %v295, 0.0
  %v370 = vmax.f32 %v296, 0.0
  %v371 = vmax.f32 %v297, 0.0
  %v372 = vmax.f32 %v298, 0.0
  %v373 = vmax.f32 %v299, 0.0
  %v374 = vmax.f32 %v300, 0.0
  %v375 = vmax.f32 %v301, 0.0
  %v376 = vmax.f32 %v302, 0.0
  %v377 = vmax.f32 %v303, 0.0
  %v378 = vmax.f32 %v304, 0.0
  %v379 = vmax.f32 %v305, 0.0
  %v380 = vmax.f32 %v306, 0.0
  %v381 = vmax.f32 %v307, 0.0
  %v382 = vmax.f32 %v308, 0.0
  %v383 = vmax.f32 %v309, 0.0
  %v384 = vmax.f32 %v310, 0.0
  %v385 = vmax.f32 %v311, 0.0
  %v386 = vmax.f32 %v312, 0.0
  %v387 = vmax.f32 %v313, 0.0
  %v388 = vmax.f32 %v314, 0.0
  %v389 = vmax.f32 %v315, 0.0
  %v390 = vmax.f32 %v316, 0.0
  %v391 = vmax.f32 %v317, 0.0
  %v392 = vmax.f32 %v318, 0.0
  %v393 = vmax.f32 %v319, 0.0
  %v394 = vmax.f32 %v320, 0.0
  %v395 = vmax.f32 %v321, 0.0
  %v396 = vpack.c.bf16 %v323, %v322
  %v397 = vpack.c.bf16 %v325, %v324
  %v398 = vpack.c.bf16 %v327, %v326
  %v399 = vpack.c.bf16 %v329, %v328
  %v400 = vpack.c.bf16 %v331, %v330
  %v401 = vpack.c.bf16 %v333, %v332
  %v402 = vpack.c.bf16 %v335, %v334
  %v403 = vpack.c.bf16 %v337, %v336
  %v404 = vpack.c.bf16 %v339, %v338
  %v405 = vpack.c.bf16 %v341, %v340
  %v406 = vpack.c.bf16 %v343, %v342
  %v407 = vpack.c.bf16 %v345, %v344
  %v408 = vpack.c.bf16 %v347, %v346
  %v409 = vpack.c.bf16 %v349, %v348
  %v410 = vpack.c.bf16 %v351, %v350
  %v411 = vpack.c.bf16 %v353, %v352
  %v412 = vpack.c.bf16 %v355, %v354
  %v413 = vpack.c.bf16 %v357, %v356
  %v414 = vpack.c.bf16 %v359, %v358
  %v415 = vpack.c.bf16 %v361, %v360
  %v416 = vpack.c.bf16 %v363, %v362
  %v417 = vpack.c.bf16 %v365, %v364
  %v418 = vpack.c.bf16 %v367, %v366
  %v419 = vpack.c.bf16 %v369, %v368
  %v420 = vpack.c.bf16 %v371, %v370
  %v421 = vpack.c.bf16 %v373, %v372
  %v422 = vpack.c.bf16 %v375, %v374
  %v423 = vpack.c.bf16 %v377, %v376
  %v424 = vpack.c.bf16 %v379, %v378
  %v425 = vpack.c.bf16 %v381, %v380
  %v426 = vpack.c.bf16 %v383, %v382
  %v427 = vpack.c.bf16 %v385, %v384
  %v428 = vpack.c.bf16 %v387, %v386
  %v429 = vpack.c.bf16 %v389, %v388
  %v430 = vpack.c.bf16 %v391, %v390
  %v431 = vpack.c.bf16 %v393, %v392
  %v432 = vpack.c.bf16 %v395, %v394
  %v433 = vld [vmem:[%s1] sm:$0xf]
  %v434 = vld [vmem:[%s1 + $0x4] sm:$0xf]
  %v435 = vld [vmem:[%s1 + $0x8] sm:$0xf]
  %v436 = vld [vmem:[%s1 + $0xc] sm:$0xf]
  %v437 = vld [vmem:[%s1 + $0x10] sm:$0xf]
  %v438 = vld [vmem:[%s1 + $0x14] sm:$0xf]
  %v439 = vld [vmem:[%s1 + $0x18] sm:$0xf]
  %v440 = vld [vmem:[%s1 + $0x1c] sm:$0xf]
  %v449 = vunpack.c.l.b16 %v433
  %v450 = vunpack.c.l.b16 %v434
  %v451 = vunpack.c.l.b16 %v435
  %v452 = vunpack.c.l.b16 %v436
  %v453 = vunpack.c.l.b16 %v437
  %v454 = vunpack.c.l.b16 %v438
  %v455 = vunpack.c.l.b16 %v439
  %v456 = vunpack.c.l.b16 %v440
  %v457 = vpack.c.b16 %v450, %v449
  %v458 = vpack.c.b16 %v452, %v451
  %v459 = vpack.c.b16 %v454, %v453
  %v460 = vpack.c.b16 %v456, %v455
  %vm465 = vcmask 523264
  %v467 = vsel %vm465, %v396, 0
  %v470 = vsel %vm465, %v397, 0
  %v473 = vsel %vm465, %v398, 0
  %v476 = vsel %vm465, %v399, 0
  %v479 = vsel %vm465, %v400, 0
  %v482 = vsel %vm465, %v401, 0
  %v485 = vsel %vm465, %v402, 0
  %v488 = vsel %vm465, %v403, 0
  %v491 = vsel %vm465, %v404, 0
  %v494 = vsel %vm465, %v405, 0
  %v497 = vsel %vm465, %v406, 0
  %v500 = vsel %vm465, %v407, 0
  %v503 = vsel %vm465, %v408, 0
  %v506 = vsel %vm465, %v409, 0
  %v509 = vsel %vm465, %v410, 0
  %v512 = vsel %vm465, %v411, 0
  %v515 = vsel %vm465, %v412, 0
  %v518 = vsel %vm465, %v413, 0
  %v521 = vsel %vm465, %v414, 0
  %v524 = vsel %vm465, %v415, 0
  %v527 = vsel %vm465, %v416, 0
  %v530 = vsel %vm465, %v417, 0
  %v533 = vsel %vm465, %v418, 0
  %v536 = vsel %vm465, %v419, 0
  %v539 = vsel %vm465, %v420, 0
  %v542 = vsel %vm465, %v421, 0
  %v545 = vsel %vm465, %v422, 0
  %v548 = vsel %vm465, %v423, 0
  %v551 = vsel %vm465, %v424, 0
  %v554 = vsel %vm465, %v425, 0
  %v557 = vsel %vm465, %v426, 0
  %v560 = vsel %vm465, %v427, 0
  %v563 = vsel %vm465, %v428, 0
  %v566 = vsel %vm465, %v429, 0
  %v569 = vsel %vm465, %v430, 0
  %v572 = vsel %vm465, %v431, 0
  %v575 = vsel %vm465, %v432, 0
  %577 = vmatpush.bf16.msra.mxu0 0
  %578 = vmatpush.bf16.msra.mxu0 0
  %579 = vmatpush.bf16.msra.mxu0 0
  %580 = vmatpush.bf16.msra.mxu0 0
  %581 = vmatpush.bf16.msra.mxu0 %v460
  %582 = vmatpush.bf16.msra.mxu0 %v459
  %583 = vmatpush.bf16.msra.mxu0 %v458
  %584 = vmatpush.bf16.msra.mxu0 %v457
  %585 = vmatmul.bf16.gmra.mxu0 %v467
  %v586 = vpop.f32.mrf.mxu0
  %v587 = vadd.f32 0.0, %v586
  %v588 = vpop.f32.mrf.mxu0
  %v589 = vadd.f32 0.0, %v588
  %590 = vmatmul.bf16.gmra.mxu0 %v470
  %v591 = vpop.f32.mrf.mxu0
  %v592 = vadd.f32 0.0, %v591
  %v593 = vpop.f32.mrf.mxu0
  %v594 = vadd.f32 0.0, %v593
  %595 = vmatmul.bf16.gmra.mxu0 %v473
  %v596 = vpop.f32.mrf.mxu0
  %v597 = vadd.f32 0.0, %v596
  %v598 = vpop.f32.mrf.mxu0
  %v599 = vadd.f32 0.0, %v598
  %600 = vmatmul.bf16.gmra.mxu0 %v476
  %v601 = vpop.f32.mrf.mxu0
  %v602 = vadd.f32 0.0, %v601
  %v603 = vpop.f32.mrf.mxu0
  %v604 = vadd.f32 0.0, %v603
  %605 = vmatmul.bf16.gmra.mxu0 %v479
  %v606 = vpop.f32.mrf.mxu0
  %v607 = vadd.f32 0.0, %v606
  %v608 = vpop.f32.mrf.mxu0
  %v609 = vadd.f32 0.0, %v608
  %610 = vmatmul.bf16.gmra.mxu0 %v482
  %v611 = vpop.f32.mrf.mxu0
  %v612 = vadd.f32 0.0, %v611
  %v613 = vpop.f32.mrf.mxu0
  %v614 = vadd.f32 0.0, %v613
  %615 = vmatmul.bf16.gmra.mxu0 %v485
  %v616 = vpop.f32.mrf.mxu0
  %v617 = vadd.f32 0.0, %v616
  %v618 = vpop.f32.mrf.mxu0
  %v619 = vadd.f32 0.0, %v618
  %620 = vmatmul.bf16.gmra.mxu0 %v488
  %v621 = vpop.f32.mrf.mxu0
  %v622 = vadd.f32 0.0, %v621
  %v623 = vpop.f32.mrf.mxu0
  %v624 = vadd.f32 0.0, %v623
  %625 = vmatmul.bf16.gmra.mxu0 %v491
  %v626 = vpop.f32.mrf.mxu0
  %v627 = vadd.f32 0.0, %v626
  %v628 = vpop.f32.mrf.mxu0
  %v629 = vadd.f32 0.0, %v628
  %630 = vmatmul.bf16.gmra.mxu0 %v494
  %v631 = vpop.f32.mrf.mxu0
  %v632 = vadd.f32 0.0, %v631
  %v633 = vpop.f32.mrf.mxu0
  %v634 = vadd.f32 0.0, %v633
  %635 = vmatmul.bf16.gmra.mxu0 %v497
  %v636 = vpop.f32.mrf.mxu0
  %v637 = vadd.f32 0.0, %v636
  %v638 = vpop.f32.mrf.mxu0
  %v639 = vadd.f32 0.0, %v638
  %640 = vmatmul.bf16.gmra.mxu0 %v500
  %v641 = vpop.f32.mrf.mxu0
  %v642 = vadd.f32 0.0, %v641
  %v643 = vpop.f32.mrf.mxu0
  %v644 = vadd.f32 0.0, %v643
  %645 = vmatmul.bf16.gmra.mxu0 %v503
  %v646 = vpop.f32.mrf.mxu0
  %v647 = vadd.f32 0.0, %v646
  %v648 = vpop.f32.mrf.mxu0
  %v649 = vadd.f32 0.0, %v648
  %650 = vmatmul.bf16.gmra.mxu0 %v506
  %v651 = vpop.f32.mrf.mxu0
  %v652 = vadd.f32 0.0, %v651
  %v653 = vpop.f32.mrf.mxu0
  %v654 = vadd.f32 0.0, %v653
  %655 = vmatmul.bf16.gmra.mxu0 %v509
  %v656 = vpop.f32.mrf.mxu0
  %v657 = vadd.f32 0.0, %v656
  %v658 = vpop.f32.mrf.mxu0
  %v659 = vadd.f32 0.0, %v658
  %660 = vmatmul.bf16.gmra.mxu0 %v512
  %v661 = vpop.f32.mrf.mxu0
  %v662 = vadd.f32 0.0, %v661
  %v663 = vpop.f32.mrf.mxu0
  %v664 = vadd.f32 0.0, %v663
  %665 = vmatmul.bf16.gmra.mxu0 %v515
  %v666 = vpop.f32.mrf.mxu0
  %v667 = vadd.f32 0.0, %v666
  %v668 = vpop.f32.mrf.mxu0
  %v669 = vadd.f32 0.0, %v668
  %670 = vmatmul.bf16.gmra.mxu0 %v518
  %v671 = vpop.f32.mrf.mxu0
  %v672 = vadd.f32 0.0, %v671
  %v673 = vpop.f32.mrf.mxu0
  %v674 = vadd.f32 0.0, %v673
  %675 = vmatmul.bf16.gmra.mxu0 %v521
  %v676 = vpop.f32.mrf.mxu0
  %v677 = vadd.f32 0.0, %v676
  %v678 = vpop.f32.mrf.mxu0
  %v679 = vadd.f32 0.0, %v678
  %680 = vmatmul.bf16.gmra.mxu0 %v524
  %v681 = vpop.f32.mrf.mxu0
  %v682 = vadd.f32 0.0, %v681
  %v683 = vpop.f32.mrf.mxu0
  %v684 = vadd.f32 0.0, %v683
  %685 = vmatmul.bf16.gmra.mxu0 %v527
  %v686 = vpop.f32.mrf.mxu0
  %v687 = vadd.f32 0.0, %v686
  %v688 = vpop.f32.mrf.mxu0
  %v689 = vadd.f32 0.0, %v688
  %690 = vmatmul.bf16.gmra.mxu0 %v530
  %v691 = vpop.f32.mrf.mxu0
  %v692 = vadd.f32 0.0, %v691
  %v693 = vpop.f32.mrf.mxu0
  %v694 = vadd.f32 0.0, %v693
  %695 = vmatmul.bf16.gmra.mxu0 %v533
  %v696 = vpop.f32.mrf.mxu0
  %v697 = vadd.f32 0.0, %v696
  %v698 = vpop.f32.mrf.mxu0
  %v699 = vadd.f32 0.0, %v698
  %700 = vmatmul.bf16.gmra.mxu0 %v536
  %v701 = vpop.f32.mrf.mxu0
  %v702 = vadd.f32 0.0, %v701
  %v703 = vpop.f32.mrf.mxu0
  %v704 = vadd.f32 0.0, %v703
  %705 = vmatmul.bf16.gmra.mxu0 %v539
  %v706 = vpop.f32.mrf.mxu0
  %v707 = vadd.f32 0.0, %v706
  %v708 = vpop.f32.mrf.mxu0
  %v709 = vadd.f32 0.0, %v708
  %710 = vmatmul.bf16.gmra.mxu0 %v542
  %v711 = vpop.f32.mrf.mxu0
  %v712 = vadd.f32 0.0, %v711
  %v713 = vpop.f32.mrf.mxu0
  %v714 = vadd.f32 0.0, %v713
  %715 = vmatmul.bf16.gmra.mxu0 %v545
  %v716 = vpop.f32.mrf.mxu0
  %v717 = vadd.f32 0.0, %v716
  %v718 = vpop.f32.mrf.mxu0
  %v719 = vadd.f32 0.0, %v718
  %720 = vmatmul.bf16.gmra.mxu0 %v548
  %v721 = vpop.f32.mrf.mxu0
  %v722 = vadd.f32 0.0, %v721
  %v723 = vpop.f32.mrf.mxu0
  %v724 = vadd.f32 0.0, %v723
  %725 = vmatmul.bf16.gmra.mxu0 %v551
  %v726 = vpop.f32.mrf.mxu0
  %v727 = vadd.f32 0.0, %v726
  %v728 = vpop.f32.mrf.mxu0
  %v729 = vadd.f32 0.0, %v728
  %730 = vmatmul.bf16.gmra.mxu0 %v554
  %v731 = vpop.f32.mrf.mxu0
  %v732 = vadd.f32 0.0, %v731
  %v733 = vpop.f32.mrf.mxu0
  %v734 = vadd.f32 0.0, %v733
  %735 = vmatmul.bf16.gmra.mxu0 %v557
  %v736 = vpop.f32.mrf.mxu0
  %v737 = vadd.f32 0.0, %v736
  %v738 = vpop.f32.mrf.mxu0
  %v739 = vadd.f32 0.0, %v738
  %740 = vmatmul.bf16.gmra.mxu0 %v560
  %v741 = vpop.f32.mrf.mxu0
  %v742 = vadd.f32 0.0, %v741
  %v743 = vpop.f32.mrf.mxu0
  %v744 = vadd.f32 0.0, %v743
  %745 = vmatmul.bf16.gmra.mxu0 %v563
  %v746 = vpop.f32.mrf.mxu0
  %v747 = vadd.f32 0.0, %v746
  %v748 = vpop.f32.mrf.mxu0
  %v749 = vadd.f32 0.0, %v748
  %750 = vmatmul.bf16.gmra.mxu0 %v566
  %v751 = vpop.f32.mrf.mxu0
  %v752 = vadd.f32 0.0, %v751
  %v753 = vpop.f32.mrf.mxu0
  %v754 = vadd.f32 0.0, %v753
  %755 = vmatmul.bf16.gmra.mxu0 %v569
  %v756 = vpop.f32.mrf.mxu0
  %v757 = vadd.f32 0.0, %v756
  %v758 = vpop.f32.mrf.mxu0
  %v759 = vadd.f32 0.0, %v758
  %760 = vmatmul.bf16.gmra.mxu0 %v572
  %v761 = vpop.f32.mrf.mxu0
  %v762 = vadd.f32 0.0, %v761
  %v763 = vpop.f32.mrf.mxu0
  %v764 = vadd.f32 0.0, %v763
  %765 = vmatmul.bf16.gmra.mxu0 %v575
  %v766 = vpop.f32.mrf.mxu0
  %v767 = vadd.f32 0.0, %v766
  %v768 = vpop.f32.mrf.mxu0
  %v769 = vadd.f32 0.0, %v768
  %770 = vdwg.mxu0
  %v771 = vpack.c.bf16 %v587, %v587
  %v772 = vpack.c.bf16 %v589, %v589
  %v773 = vpack.c.bf16 %v592, %v592
  %v774 = vpack.c.bf16 %v594, %v594
  %v775 = vpack.c.bf16 %v597, %v597
  %v776 = vpack.c.bf16 %v599, %v599
  %v777 = vpack.c.bf16 %v602, %v602
  %v778 = vpack.c.bf16 %v604, %v604
  %v779 = vpack.c.bf16 %v607, %v607
  %v780 = vpack.c.bf16 %v609, %v609
  %v781 = vpack.c.bf16 %v612, %v612
  %v782 = vpack.c.bf16 %v614, %v614
  %v783 = vpack.c.bf16 %v617, %v617
  %v784 = vpack.c.bf16 %v619, %v619
  %v785 = vpack.c.bf16 %v622, %v622
  %v786 = vpack.c.bf16 %v624, %v624
  %v787 = vpack.c.bf16 %v627, %v627
  %v788 = vpack.c.bf16 %v629, %v629
  %v789 = vpack.c.bf16 %v632, %v632
  %v790 = vpack.c.bf16 %v634, %v634
  %v791 = vpack.c.bf16 %v637, %v637
  %v792 = vpack.c.bf16 %v639, %v639
  %v793 = vpack.c.bf16 %v642, %v642
  %v794 = vpack.c.bf16 %v644, %v644
  %v795 = vpack.c.bf16 %v647, %v647
  %v796 = vpack.c.bf16 %v649, %v649
  %v797 = vpack.c.bf16 %v652, %v652
  %v798 = vpack.c.bf16 %v654, %v654
  %v799 = vpack.c.bf16 %v657, %v657
  %v800 = vpack.c.bf16 %v659, %v659
  %v801 = vpack.c.bf16 %v662, %v662
  %v802 = vpack.c.bf16 %v664, %v664
  %v803 = vpack.c.bf16 %v667, %v667
  %v804 = vpack.c.bf16 %v669, %v669
  %v805 = vpack.c.bf16 %v672, %v672
  %v806 = vpack.c.bf16 %v674, %v674
  %v807 = vpack.c.bf16 %v677, %v677
  %v808 = vpack.c.bf16 %v679, %v679
  %v809 = vpack.c.bf16 %v682, %v682
  %v810 = vpack.c.bf16 %v684, %v684
  %v811 = vpack.c.bf16 %v687, %v687
  %v812 = vpack.c.bf16 %v689, %v689
  %v813 = vpack.c.bf16 %v692, %v692
  %v814 = vpack.c.bf16 %v694, %v694
  %v815 = vpack.c.bf16 %v697, %v697
  %v816 = vpack.c.bf16 %v699, %v699
  %v817 = vpack.c.bf16 %v702, %v702
  %v818 = vpack.c.bf16 %v704, %v704
  %v819 = vpack.c.bf16 %v707, %v707
  %v820 = vpack.c.bf16 %v709, %v709
  %v821 = vpack.c.bf16 %v712, %v712
  %v822 = vpack.c.bf16 %v714, %v714
  %v823 = vpack.c.bf16 %v717, %v717
  %v824 = vpack.c.bf16 %v719, %v719
  %v825 = vpack.c.bf16 %v722, %v722
  %v826 = vpack.c.bf16 %v724, %v724
  %v827 = vpack.c.bf16 %v727, %v727
  %v828 = vpack.c.bf16 %v729, %v729
  %v829 = vpack.c.bf16 %v732, %v732
  %v830 = vpack.c.bf16 %v734, %v734
  %v831 = vpack.c.bf16 %v737, %v737
  %v832 = vpack.c.bf16 %v739, %v739
  %v833 = vpack.c.bf16 %v742, %v742
  %v834 = vpack.c.bf16 %v744, %v744
  %v835 = vpack.c.bf16 %v747, %v747
  %v836 = vpack.c.bf16 %v749, %v749
  %v837 = vpack.c.bf16 %v752, %v752
  %v838 = vpack.c.bf16 %v754, %v754
  %v839 = vpack.c.bf16 %v757, %v757
  %v840 = vpack.c.bf16 %v759, %v759
  %v841 = vpack.c.bf16 %v762, %v762
  %v842 = vpack.c.bf16 %v764, %v764
  %v843 = vpack.c.bf16 %v767, %v767
  %v844 = vpack.c.bf16 %v769, %v769
  %845 = vst [vmem:[%s4] sm:$0xf] %v771
  %846 = vst [vmem:[%s4 + $0x4] sm:$0xf] %v772
  %847 = vst [vmem:[%s4 + $0x8] sm:$0xf] %v773
  %848 = vst [vmem:[%s4 + $0xc] sm:$0xf] %v774
  %849 = vst [vmem:[%s4 + $0x10] sm:$0xf] %v775
  %850 = vst [vmem:[%s4 + $0x14] sm:$0xf] %v776
  %851 = vst [vmem:[%s4 + $0x18] sm:$0xf] %v777
  %852 = vst [vmem:[%s4 + $0x1c] sm:$0xf] %v778
  %853 = vst [vmem:[%s4 + $0x20] sm:$0xf] %v779
  %854 = vst [vmem:[%s4 + $0x24] sm:$0xf] %v780
  %855 = vst [vmem:[%s4 + $0x28] sm:$0xf] %v781
  %856 = vst [vmem:[%s4 + $0x2c] sm:$0xf] %v782
  %857 = vst [vmem:[%s4 + $0x30] sm:$0xf] %v783
  %858 = vst [vmem:[%s4 + $0x34] sm:$0xf] %v784
  %859 = vst [vmem:[%s4 + $0x38] sm:$0xf] %v785
  %860 = vst [vmem:[%s4 + $0x3c] sm:$0xf] %v786
  %861 = vst [vmem:[%s4 + $0x40] sm:$0xf] %v787
  %862 = vst [vmem:[%s4 + $0x44] sm:$0xf] %v788
  %863 = vst [vmem:[%s4 + $0x48] sm:$0xf] %v789
  %864 = vst [vmem:[%s4 + $0x4c] sm:$0xf] %v790
  %865 = vst [vmem:[%s4 + $0x50] sm:$0xf] %v791
  %866 = vst [vmem:[%s4 + $0x54] sm:$0xf] %v792
  %867 = vst [vmem:[%s4 + $0x58] sm:$0xf] %v793
  %868 = vst [vmem:[%s4 + $0x5c] sm:$0xf] %v794
  %869 = vst [vmem:[%s4 + $0x60] sm:$0xf] %v795
  %870 = vst [vmem:[%s4 + $0x64] sm:$0xf] %v796
  %871 = vst [vmem:[%s4 + $0x68] sm:$0xf] %v797
  %872 = vst [vmem:[%s4 + $0x6c] sm:$0xf] %v798
  %873 = vst [vmem:[%s4 + $0x70] sm:$0xf] %v799
  %874 = vst [vmem:[%s4 + $0x74] sm:$0xf] %v800
  %875 = vst [vmem:[%s4 + $0x78] sm:$0xf] %v801
  %876 = vst [vmem:[%s4 + $0x7c] sm:$0xf] %v802
  %877 = vst [vmem:[%s4 + $0x80] sm:$0xf] %v803
  %878 = vst [vmem:[%s4 + $0x84] sm:$0xf] %v804
  %879 = vst [vmem:[%s4 + $0x88] sm:$0xf] %v805
  %880 = vst [vmem:[%s4 + $0x8c] sm:$0xf] %v806
  %881 = vst [vmem:[%s4 + $0x90] sm:$0xf] %v807
  %882 = vst [vmem:[%s4 + $0x94] sm:$0xf] %v808
  %883 = vst [vmem:[%s4 + $0x98] sm:$0xf] %v809
  %884 = vst [vmem:[%s4 + $0x9c] sm:$0xf] %v810
  %885 = vst [vmem:[%s4 + $0xa0] sm:$0xf] %v811
  %886 = vst [vmem:[%s4 + $0xa4] sm:$0xf] %v812
  %887 = vst [vmem:[%s4 + $0xa8] sm:$0xf] %v813
  %888 = vst [vmem:[%s4 + $0xac] sm:$0xf] %v814
  %889 = vst [vmem:[%s4 + $0xb0] sm:$0xf] %v815
  %890 = vst [vmem:[%s4 + $0xb4] sm:$0xf] %v816
  %891 = vst [vmem:[%s4 + $0xb8] sm:$0xf] %v817
  %892 = vst [vmem:[%s4 + $0xbc] sm:$0xf] %v818
  %893 = vst [vmem:[%s4 + $0xc0] sm:$0xf] %v819
  %894 = vst [vmem:[%s4 + $0xc4] sm:$0xf] %v820
  %895 = vst [vmem:[%s4 + $0xc8] sm:$0xf] %v821
  %896 = vst [vmem:[%s4 + $0xcc] sm:$0xf] %v822
  %897 = vst [vmem:[%s4 + $0xd0] sm:$0xf] %v823
  %898 = vst [vmem:[%s4 + $0xd4] sm:$0xf] %v824
  %899 = vst [vmem:[%s4 + $0xd8] sm:$0xf] %v825
  %900 = vst [vmem:[%s4 + $0xdc] sm:$0xf] %v826
  %901 = vst [vmem:[%s4 + $0xe0] sm:$0xf] %v827
  %902 = vst [vmem:[%s4 + $0xe4] sm:$0xf] %v828
  %903 = vst [vmem:[%s4 + $0xe8] sm:$0xf] %v829
  %904 = vst [vmem:[%s4 + $0xec] sm:$0xf] %v830
  %905 = vst [vmem:[%s4 + $0xf0] sm:$0xf] %v831
  %906 = vst [vmem:[%s4 + $0xf4] sm:$0xf] %v832
  %907 = vst [vmem:[%s4 + $0xf8] sm:$0xf] %v833
  %908 = vst [vmem:[%s4 + $0xfc] sm:$0xf] %v834
  %909 = vst [vmem:[%s4 + $0x100] sm:$0xf] %v835
  %910 = vst [vmem:[%s4 + $0x104] sm:$0xf] %v836
  %911 = vst [vmem:[%s4 + $0x108] sm:$0xf] %v837
  %912 = vst [vmem:[%s4 + $0x10c] sm:$0xf] %v838
  %913 = vst [vmem:[%s4 + $0x110] sm:$0xf] %v839
  %914 = vst [vmem:[%s4 + $0x114] sm:$0xf] %v840
  %915 = vst [vmem:[%s4 + $0x118] sm:$0xf] %v841
  %916 = vst [vmem:[%s4 + $0x11c] sm:$0xf] %v842
  %917 = vst [vmem:[%s4 + $0x120] sm:$0xf] %v843
  %918 = vst [vmem:[%s4 + $0x124] sm:$0xf] %v844
  // Predicated region
  $region18: #{generator_forward.15} parent=0 // pred_check
    _
  $region19: #{generator_forward.15} parent=0 // pred_check_branch
    %920 = sbr.rel (0) target = $region21
  $region20: #{generator_forward.15} parent=0 // pred_region
    _
  $region21: #{generator_forward.15} parent=0 // pred_fallthru
    _
  // Predicated region
  $region22: #{generator_forward.15} parent=0 // pred_check
    _
  $region23: #{generator_forward.15} parent=0 // pred_check_branch
    %922 = sbr.rel (0) target = $region25
  $region24: #{generator_forward.15} parent=0 // pred_region
    _
  $region25: #{generator_forward.15} parent=0 // pred_fallthru
    _

// kernel: tile.78
$region0: #{tile.78}
  #allocation0 [shape = 's32[1]{0}', space=sflag, size = 0x4, scoped, tag = 'scoped memory for tile.78']
  %s0 = inlined_call_operand.vmem [shape: f32[8], index: 0, kind: input, shape index: {}]
  %s1 = inlined_call_operand.vmem [shape: f32[4,8], index: 1, kind: output, shape index: {}]
  // Predicated region
  $region2: #{tile.78} parent=0 // pred_check
    _
  $region3: #{tile.78} parent=0 // pred_check_branch
    %3 = sbr.rel (0) target = $region5
  $region4: #{tile.78} parent=0 // pred_region
    _
  $region5: #{tile.78} parent=0 // pred_fallthru
    _
  %v4 = vld [vmem:[%s0] ss:$0 sm:$0xff]
  %5 = vst [vmem:[%s1] sm:$0xf] %v4

// kernel: tile.79
$region0: #{tile.79}
  %s0 = inlined_call_operand.vmem [shape: f32[4,8], index: 0, kind: input, shape index: {}]
  %s1 = inlined_call_operand.vmem [shape: f32[1,32], index: 1, kind: output, shape index: {}]
  $region1: #{tile.79} parent=0
    #allocation0 [shape = 'u8[4096]{0}', space=vmem, size = 0x1000, scoped, tag = 'scoped mem for output reshape']
    #allocation1 [shape = 'u8[4096]{0}', space=vmem, size = 0x1000, scoped, tag = 'scoped mem for input reshape']
    %s3 = ssub.s32 16, 1
    %v4 = vld [vmem:[%s0] sm:%s3]
    %5 = vst [vmem:[#allocation1] sm:%s3] %v4
    %v6 = vld [vmem:[#allocation1] sm:$0x1]
    %vm7 = vcmask 64512
    %8 = vst.msk [vmem:[#allocation0] sm:$0x1] %vm7, %v6
    %s9 = scalar_lea.vmem [#allocation1], 3
    %v10 = vld [vmem:[%s9] sm:$0x1]
    %11 = vrot.lane.b32.xlu0 %v10, 24
    %v12 = vpop.permute.xlu0 %11
    %vm13 = vcmask 261312
    %14 = vst.msk [vmem:[#allocation0] sm:$0x1] %vm13, %v12
    %s15 = scalar_lea.vmem [#allocation1], 2
    %v16 = vld [vmem:[%s15] sm:$0x1]
    %17 = vrot.lane.b32.xlu0 %v16, 16
    %v18 = vpop.permute.xlu0 %17
    %vm19 = vcmask 195712
    %20 = vst.msk [vmem:[#allocation0] sm:$0x1] %vm19, %v18
    %s21 = scalar_lea.vmem [#allocation1], 1
    %v22 = vld [vmem:[%s21] sm:$0x1]
    %23 = vrot.lane.b32.xlu0 %v22, 8
    %v24 = vpop.permute.xlu0 %23
    %vm25 = vcmask 130112
    %26 = vst.msk [vmem:[#allocation0] sm:$0x1] %vm25, %v24
    %s28 = ssub.s32 2, 1
    %v29 = vld [vmem:[#allocation0] sm:%s28]
    %s31 = ssub.s32 2, 1
    %32 = vst [vmem:[%s1] sm:%s31] %v29

// kernel: generator_forward.16
$region0: #{generator_forward.16}
  #allocation0 [shape = 'u32[]', space=smem, size = 0x4, offset = 0x4, fixed_abs, tag = 'smem constant byte address 0x4 - core index']
  #allocation1 [shape = 'u32[72,128]{1,0:T(1,128)}', space=vmem, size = 0x9000, scoped, tag = 'internal scratch']
  #allocation2 [shape = 'f32[8,256]{1,0:T(8,128)}', space=vmem, size = 0x2000, scoped, tag = 'scratch operand']
  #allocation3 [shape = 'f32[8,256]{1,0:T(8,128)}', space=vmem, size = 0x2000, scoped, tag = 'scratch operand']
  %s0 = inlined_call_operand.vmem [shape: bf16[64,256], index: 0, kind: input, shape index: {}]
  %s1 = inlined_call_operand.vmem [shape: f32[1,256], index: 1, kind: output, shape index: {0}]
  %s2 = inlined_call_operand.vmem [shape: f32[1,256], index: 2, kind: output, shape index: {1}]
  %3 = xla_tuple %s1, %s2
  %s4 = sld [smem:[#allocation0]]
  $region30: #{generator_forward.16} parent=0
    _
  %s6 = ssub.s32 1, %s4
  %s7 = scalar_select 0, %s6, %s4
  // Predicated region
  $region2: #{generator_forward.16} parent=0 // pred_check
    _
  $region3: #{generator_forward.16} parent=0 // pred_check_branch
    %9 = sbr.rel (0) target = $region5
  $region4: #{generator_forward.16} parent=0 // pred_region
    _
  $region5: #{generator_forward.16} parent=0 // pred_fallthru
    _
  %p10 = scmp.eq.s32.totalorder 0, 0
  // Predicated region
  $region6: #{generator_forward.16} parent=0 // pred_check
    %p11 = pneg %p10
  $region7: #{generator_forward.16} parent=0 // pred_check_branch
    %13 = sbr.rel (%p11) target = $region9
  $region8: #{generator_forward.16} parent=0 // pred_region
    %14 = vst [vmem:[#allocation2] sm:$0xff] 0.0
    %15 = vst [vmem:[#allocation2 + $0x8] sm:$0xff] 0.0
    %16 = vst [vmem:[#allocation3] sm:$0xff] 0.0
    %17 = vst [vmem:[#allocation3 + $0x8] sm:$0xff] 0.0
  $region9: #{generator_forward.16} parent=0 // pred_fallthru
    _
  %v18 = vld [vmem:[%s0] sm:$0xff]
  %v19 = vld [vmem:[%s0 + $0x8] sm:$0xff]
  %v20 = vld [vmem:[%s0 + $0x10] sm:$0xff]
  %v21 = vld [vmem:[%s0 + $0x18] sm:$0xff]
  %v22 = vld [vmem:[%s0 + $0x20] sm:$0xff]
  %v23 = vld [vmem:[%s0 + $0x28] sm:$0xff]
  %v24 = vld [vmem:[%s0 + $0x30] sm:$0xff]
  %v25 = vld [vmem:[%s0 + $0x38] sm:$0xff]
  %v26 = vunpack.c.l.bf16 %v18
  %v27 = vunpack.c.h.bf16 %v18
  %v28 = vunpack.c.l.bf16 %v19
  %v29 = vunpack.c.h.bf16 %v19
  %v30 = vunpack.c.l.bf16 %v20
  %v31 = vunpack.c.h.bf16 %v20
  %v32 = vunpack.c.l.bf16 %v21
  %v33 = vunpack.c.h.bf16 %v21
  %v34 = vunpack.c.l.bf16 %v22
  %v35 = vunpack.c.h.bf16 %v22
  %v36 = vunpack.c.l.bf16 %v23
  %v37 = vunpack.c.h.bf16 %v23
  %v38 = vunpack.c.l.bf16 %v24
  %v39 = vunpack.c.h.bf16 %v24
  %v40 = vunpack.c.l.bf16 %v25
  %v41 = vunpack.c.h.bf16 %v25
  %v42 = vld [vmem:[#allocation2] sm:$0xff]
  %v43 = vld [vmem:[#allocation2 + $0x8] sm:$0xff]
  %v44 = vadd.f32 %v26, %v28
  %v45 = vadd.f32 %v44, %v30
  %v46 = vadd.f32 %v45, %v32
  %v47 = vadd.f32 %v46, %v34
  %v48 = vadd.f32 %v47, %v36
  %v49 = vadd.f32 %v48, %v38
  %v50 = vadd.f32 %v49, %v40
  %v51 = vadd.f32 %v27, %v29
  %v52 = vadd.f32 %v51, %v31
  %v53 = vadd.f32 %v52, %v33
  %v54 = vadd.f32 %v53, %v35
  %v55 = vadd.f32 %v54, %v37
  %v56 = vadd.f32 %v55, %v39
  %v57 = vadd.f32 %v56, %v41
  %v58 = vadd.f32 %v42, %v50
  %v59 = vadd.f32 %v43, %v57
  %60 = vst [vmem:[#allocation2] sm:$0xff] %v58
  %61 = vst [vmem:[#allocation2 + $0x8] sm:$0xff] %v59
  %v62 = vld [vmem:[#allocation3] sm:$0xff]
  %v63 = vld [vmem:[#allocation3 + $0x8] sm:$0xff]
  %v64 = vmul.f32 %v26, %v26
  %v65 = vmul.f32 %v27, %v27
  %v66 = vmul.f32 %v28, %v28
  %v67 = vmul.f32 %v29, %v29
  %v68 = vmul.f32 %v30, %v30
  %v69 = vmul.f32 %v31, %v31
  %v70 = vmul.f32 %v32, %v32
  %v71 = vmul.f32 %v33, %v33
  %v72 = vmul.f32 %v34, %v34
  %v73 = vmul.f32 %v35, %v35
  %v74 = vmul.f32 %v36, %v36
  %v75 = vmul.f32 %v37, %v37
  %v76 = vmul.f32 %v38, %v38
  %v77 = vmul.f32 %v39, %v39
  %v78 = vmul.f32 %v40, %v40
  %v79 = vmul.f32 %v41, %v41
  %v80 = vadd.f32 %v64, %v66
  %v81 = vadd.f32 %v80, %v68
  %v82 = vadd.f32 %v81, %v70
  %v83 = vadd.f32 %v82, %v72
  %v84 = vadd.f32 %v83, %v74
  %v85 = vadd.f32 %v84, %v76
  %v86 = vadd.f32 %v85, %v78
  %v87 = vadd.f32 %v65, %v67
  %v88 = vadd.f32 %v87, %v69
  %v89 = vadd.f32 %v88, %v71
  %v90 = vadd.f32 %v89, %v73
  %v91 = vadd.f32 %v90, %v75
  %v92 = vadd.f32 %v91, %v77
  %v93 = vadd.f32 %v92, %v79
  %v94 = vadd.f32 %v62, %v86
  %v95 = vadd.f32 %v63, %v93
  %96 = vst [vmem:[#allocation3] sm:$0xff] %v94
  %97 = vst [vmem:[#allocation3 + $0x8] sm:$0xff] %v95
  // Predicated region
  $region10: #{generator_forward.16} parent=0 // pred_check
    %p98 = pneg %p10
  $region11: #{generator_forward.16} parent=0 // pred_check_branch
    %100 = sbr.rel (%p98) target = $region13
  $region12: #{generator_forward.16} parent=0 // pred_region
    %v101 = vld [vmem:[#allocation2] sm:$0xff]
    %v102 = vld [vmem:[#allocation2 + $0x8] sm:$0xff]
    %v103 = vrot.slane %v101, 4
    %v104 = vadd.f32 %v101, %v103
    %v105 = vrot.slane %v104, 2
    %v106 = vadd.f32 %v104, %v105
    %v107 = vrot.slane %v106, 1
    %v108 = vadd.f32 %v106, %v107
    %v109 = vrot.slane %v102, 4
    %v110 = vadd.f32 %v102, %v109
    %v111 = vrot.slane %v110, 2
    %v112 = vadd.f32 %v110, %v111
    %v113 = vrot.slane %v112, 1
    %v114 = vadd.f32 %v112, %v113
    %v117 = vrot.slane %v114, 7
    %vm118 = vcmask 1040384
    %v119 = vsel %vm118, %v108, %v117
    %v121 = vlaneseq
    %vm122 = vcmp.ge.s32.totalorder %v121, 0
    %vm123 = vcmp.lt.s32.totalorder %v121, 256
    %vm124 = vmand %vm122, %vm123
    %125 = vst.msk [vmem:[%s1] sm:$0x3] %vm124, %v119
    %v126 = vld [vmem:[#allocation3] sm:$0xff]
    %v127 = vld [vmem:[#allocation3 + $0x8] sm:$0xff]
    %v128 = vrot.slane %v126, 4
    %v129 = vadd.f32 %v126, %v128
    %v130 = vrot.slane %v129, 2
    %v131 = vadd.f32 %v129, %v130
    %v132 = vrot.slane %v131, 1
    %v133 = vadd.f32 %v131, %v132
    %v134 = vrot.slane %v127, 4
    %v135 = vadd.f32 %v127, %v134
    %v136 = vrot.slane %v135, 2
    %v137 = vadd.f32 %v135, %v136
    %v138 = vrot.slane %v137, 1
    %v139 = vadd.f32 %v137, %v138
    %v142 = vrot.slane %v139, 7
    %v143 = vsel %vm118, %v133, %v142
    %145 = vst.msk [vmem:[%s2] sm:$0x3] %vm124, %v143
  $region13: #{generator_forward.16} parent=0 // pred_fallthru
    _
  // Predicated region
  $region14: #{generator_forward.16} parent=0 // pred_check
    _
  $region15: #{generator_forward.16} parent=0 // pred_check_branch
    %147 = sbr.rel (0) target = $region17
  $region16: #{generator_forward.16} parent=0 // pred_region
    _
  $region17: #{generator_forward.16} parent=0 // pred_fallthru
    _
  // Predicated region
  $region18: #{generator_forward.16} parent=0 // pred_check
    _
  $region19: #{generator_forward.16} parent=0 // pred_check_branch
    %149 = sbr.rel (0) target = $region21
  $region20: #{generator_forward.16} parent=0 // pred_region
    _
  $region21: #{generator_forward.16} parent=0 // pred_fallthru
    _
  // Predicated region
  $region22: #{generator_forward.16} parent=0 // pred_check
    _
  $region23: #{generator_forward.16} parent=0 // pred_check_branch
    %151 = sbr.rel (0) target = $region25
  $region24: #{generator_forward.16} parent=0 // pred_region
    _
  $region25: #{generator_forward.16} parent=0 // pred_fallthru
    _
  // Predicated region
  $region26: #{generator_forward.16} parent=0 // pred_check
    _
  $region27: #{generator_forward.16} parent=0 // pred_check_branch
    %153 = sbr.rel (0) target = $region29
  $region28: #{generator_forward.16} parent=0 // pred_region
    _
  $region29: #{generator_forward.16} parent=0 // pred_fallthru
    _

// kernel: generator_forward.17
$region0: #{generator_forward.17}
  #allocation0 [shape = 'u32[]', space=smem, size = 0x4, offset = 0x4, fixed_abs, tag = 'smem constant byte address 0x4 - core index']
  #allocation1 [shape = 'u32[72,128]{1,0:T(1,128)}', space=vmem, size = 0x9000, scoped, tag = 'internal scratch']
  %s0 = inlined_call_operand.vmem [shape: bf16[2208,32], index: 0, kind: input, shape index: {}]
  %s1 = inlined_call_operand.vmem [shape: bf16[32,128], index: 1, kind: input, shape index: {}]
  %s2 = inlined_call_operand.vmem [shape: f32[1,32], index: 2, kind: input, shape index: {}]
  %s3 = inlined_call_operand.vmem [shape: f32[1,32], index: 3, kind: input, shape index: {}]
  %s4 = inlined_call_operand.vmem [shape: f32[2208,128], index: 4, kind: output, shape index: {}]
  %s5 = sld [smem:[#allocation0]]
  $region49: #{generator_forward.17} parent=0
    _
  %s7 = ssub.s32 1, %s5
  %s8 = scalar_select 0, %s7, %s5
  loop: start=0, step=1, limit=5
  $region2: #{generator_forward.17} parent=0 // loop_pre_header
    _
  $region3: #{generator_forward.17} parent=0 // loop_header
    %s10 = sphi 0, %s14
    %p11 = scmp.ge.s32.totalorder %s10, 5
    %s17 = sphi 0, %s29
    %s18 = sphi 0, %s25
    %s19 = sphi 0, %s17
    %s20 = sphi 0, %s18
    %s21 = sphi 0, %s19
    %s22 = sphi 0, %s20
    %s32 = sphi 0, %s34
    %s35 = sphi 0, %s32
    %s36 = sphi 0, %s35
    %s52 = sphi 0, %s36
    %s58 = sphi 0, %s60
    %s61 = sphi 0, %s58
    %s62 = sphi 0, %s61
    %s78 = sphi 0, %s62
    %s82 = sphi 0, %s82
    %s84 = sphi 0, %s82
    %s85 = sphi 0, %s84
    %s99 = sphi 0, %s85
    %s103 = sphi 0, %s103
    %s105 = sphi 0, %s103
    %s106 = sphi 0, %s105
    %s120 = sphi 0, %s106
    %s128 = sphi 0, %s130
    %s131 = sphi 0, %s128
    %s132 = sphi 0, %s131
    %s148 = sphi 0, %s132
  $region4: #{generator_forward.17} parent=0 // loop_header_branch
    %13 = sbr.rel (%p11) target = $region8
  $region5: #{generator_forward.17} parent=0 // loop_body
    %s15 = ssub.s32 %s10, 1
    %s16 = ssub.s32 %s10, 2
    %s23 = sadd.s32 1, %s18
    %p24 = scmp.ge.s32.totalorder %s23, 1
    %s25 = scalar_select %p24, 0, %s23
    %s26 = sadd.s32 1, %s17
    %s27 = scalar_select %p24, %s26, %s17
    %p28 = scmp.ge.s32.totalorder %s27, 3
    %s29 = scalar_select %p28, 0, %s27
    %s30 = ssub.s32 %s17, %s29
    %p31 = scmp.eq.s32.totalorder %s30, 0
    %s33 = sadd.s32 %s32, 1
    %s34 = scalar_select %p31, %s32, %s33
    %p37 = pneg %p31
    %p38 = scmp.eq.s32.totalorder %s10, 2
    %p39 = por %p37, %p38
    %p40 = scmp.ne.s32.totalorder %s32, %s35
    %p41 = scmp.eq.s32.totalorder %s10, 0
    %p42 = por %p40, %p41
    %p43 = scmp.ne.s32.totalorder %s32, %s35
    %p44 = scmp.eq.s32.totalorder %s15, 2
    %p45 = por %p43, %p44
    %p46 = scmp.ne.s32.totalorder %s35, %s36
    %p47 = scmp.eq.s32.totalorder %s15, 0
    %p48 = por %p46, %p47
    %p49 = scmp.ne.s32.totalorder %s35, %s36
    %p50 = scmp.eq.s32.totalorder %s16, 2
    %p51 = por %p49, %p50
    %p53 = scmp.ne.s32.totalorder %s36, %s52
    %p54 = scmp.eq.s32.totalorder %s16, 0
    %p55 = por %p53, %p54
    %s56 = ssub.s32 %s18, %s25
    %p57 = scmp.eq.s32.totalorder %s56, 0
    %s59 = sadd.s32 %s58, 1
    %s60 = scalar_select %p57, %s58, %s59
    %p63 = pneg %p57
    %p64 = scmp.eq.s32.totalorder %s10, 2
    %p65 = por %p63, %p64
    %p66 = scmp.ne.s32.totalorder %s58, %s61
    %p67 = scmp.eq.s32.totalorder %s10, 0
    %p68 = por %p66, %p67
    %p69 = scmp.ne.s32.totalorder %s58, %s61
    %p70 = scmp.eq.s32.totalorder %s15, 2
    %p71 = por %p69, %p70
    %p72 = scmp.ne.s32.totalorder %s61, %s62
    %p73 = scmp.eq.s32.totalorder %s15, 0
    %p74 = por %p72, %p73
    %p75 = scmp.ne.s32.totalorder %s61, %s62
    %p76 = scmp.eq.s32.totalorder %s16, 2
    %p77 = por %p75, %p76
    %p79 = scmp.ne.s32.totalorder %s62, %s78
    %p80 = scmp.eq.s32.totalorder %s16, 0
    %p81 = por %p79, %p80
    %s83 = sadd.s32 %s82, 1
    %p86 = scmp.eq.s32.totalorder %s10, 2
    %p87 = scmp.ne.s32.totalorder %s82, %s84
    %p88 = scmp.eq.s32.totalorder %s10, 0
    %p89 = por %p87, %p88
    %p90 = scmp.ne.s32.totalorder %s82, %s84
    %p91 = scmp.eq.s32.totalorder %s15, 2
    %p92 = por %p90, %p91
    %p93 = scmp.ne.s32.totalorder %s84, %s85
    %p94 = scmp.eq.s32.totalorder %s15, 0
    %p95 = por %p93, %p94
    %p96 = scmp.ne.s32.totalorder %s84, %s85
    %p97 = scmp.eq.s32.totalorder %s16, 2
    %p98 = por %p96, %p97
    %p100 = scmp.ne.s32.totalorder %s85, %s99
    %p101 = scmp.eq.s32.totalorder %s16, 0
    %p102 = por %p100, %p101
    %s104 = sadd.s32 %s103, 1
    %p107 = scmp.eq.s32.totalorder %s10, 2
    %p108 = scmp.ne.s32.totalorder %s103, %s105
    %p109 = scmp.eq.s32.totalorder %s10, 0
    %p110 = por %p108, %p109
    %p111 = scmp.ne.s32.totalorder %s103, %s105
    %p112 = scmp.eq.s32.totalorder %s15, 2
    %p113 = por %p111, %p112
    %p114 = scmp.ne.s32.totalorder %s105, %s106
    %p115 = scmp.eq.s32.totalorder %s15, 0
    %p116 = por %p114, %p115
    %p117 = scmp.ne.s32.totalorder %s105, %s106
    %p118 = scmp.eq.s32.totalorder %s16, 2
    %p119 = por %p117, %p118
    %p121 = scmp.ne.s32.totalorder %s106, %s120
    %p122 = scmp.eq.s32.totalorder %s16, 0
    %p123 = por %p121, %p122
    %s124 = ssub.s32 %s17, %s29
    %s125 = ssub.s32 %s18, %s25
    %s126 = sor.u32 %s124, %s125
    %p127 = scmp.eq.s32.totalorder %s126, 0
    %s129 = sadd.s32 %s128, 1
    %s130 = scalar_select %p127, %s128, %s129
    %p133 = pneg %p127
    %p134 = scmp.eq.s32.totalorder %s10, 2
    %p135 = por %p133, %p134
    %p136 = scmp.ne.s32.totalorder %s128, %s131
    %p137 = scmp.eq.s32.totalorder %s10, 0
    %p138 = por %p136, %p137
    %p139 = scmp.ne.s32.totalorder %s128, %s131
    %p140 = scmp.eq.s32.totalorder %s15, 2
    %p141 = por %p139, %p140
    %p142 = scmp.ne.s32.totalorder %s131, %s132
    %p143 = scmp.eq.s32.totalorder %s15, 0
    %p144 = por %p142, %p143
    %p145 = scmp.ne.s32.totalorder %s131, %s132
    %p146 = scmp.eq.s32.totalorder %s16, 2
    %p147 = por %p145, %p146
    %p149 = scmp.ne.s32.totalorder %s132, %s148
    %p150 = scmp.eq.s32.totalorder %s16, 0
    %p151 = por %p149, %p150
    %p152 = scmp.le.s32.totalorder 1, %s10
    %p153 = scmp.lt.s32.totalorder %s10, 4
    %p154 = pnand %p152, %p153
    %p155 = pneg %p154
    // Predicated region
    $region9: #{generator_forward.17} parent=5 // pred_check
      _
    $region10: #{generator_forward.17} parent=5 // pred_check_branch
      %157 = sbr.rel (%p154) target = $region12
    $region11: #{generator_forward.17} parent=5 // pred_region
      %s158 = ssub.s32 %s10, 1
      // Predicated region
      $region13: #{generator_forward.17} parent=11 // pred_check
        %p159 = pneg %p74
      $region14: #{generator_forward.17} parent=11 // pred_check_branch
        %161 = sbr.rel (%p159) target = $region16
      $region15: #{generator_forward.17} parent=11 // pred_region
        %p162 = scmp.lt.s32.totalorder %s20, 0
        %s163 = scalar_select %p162, %s20, 0
        %s164 = smul.addr %s163, 4
        %s165 = scalar_lea.vmem %s1, %s164
      $region16: #{generator_forward.17} parent=11 // pred_fallthru
        _
      // Predicated region
      $region17: #{generator_forward.17} parent=11 // pred_check
        %p166 = pneg %p95
      $region18: #{generator_forward.17} parent=11 // pred_check_branch
        %168 = sbr.rel (%p166) target = $region20
      $region19: #{generator_forward.17} parent=11 // pred_region
        _
      $region20: #{generator_forward.17} parent=11 // pred_fallthru
        _
      // Predicated region
      $region21: #{generator_forward.17} parent=11 // pred_check
        %p169 = pneg %p116
      $region22: #{generator_forward.17} parent=11 // pred_check_branch
        %171 = sbr.rel (%p169) target = $region24
      $region23: #{generator_forward.17} parent=11 // pred_region
        _
      $region24: #{generator_forward.17} parent=11 // pred_fallthru
        _
    $region12: #{generator_forward.17} parent=5 // pred_fallthru
      _
    %p172 = scmp.lt.s32.totalorder %s10, 3
    // Predicated region
    $region25: #{generator_forward.17} parent=5 // pred_check
      %p173 = pneg %p172
    $region26: #{generator_forward.17} parent=5 // pred_check_branch
      %175 = sbr.rel (%p173) target = $region28
    $region27: #{generator_forward.17} parent=5 // pred_region
      // Predicated region
      $region29: #{generator_forward.17} parent=27 // pred_check
        %p176 = pneg %p42
      $region30: #{generator_forward.17} parent=27 // pred_check_branch
        %178 = sbr.rel (%p176) target = $region32
      $region31: #{generator_forward.17} parent=27 // pred_region
        %s179 = smul.u32 92, %s17
        %p180 = scmp.lt.s32.totalorder %s179, 275
        %s181 = scalar_select %p180, %s179, 275
        %s182 = smul.addr %s181, 4
        %s183 = scalar_lea.vmem %s0, %s182
        %s184 = smul.u32 92, %s17
      $region32: #{generator_forward.17} parent=27 // pred_fallthru
        _
    $region28: #{generator_forward.17} parent=5 // pred_fallthru
      _
    %p185 = scmp.le.s32.totalorder 1, %s10
    %p186 = scmp.lt.s32.totalorder %s10, 4
    %p187 = pnand %p185, %p186
    %p188 = pneg %p187
    // Predicated region
    $region33: #{generator_forward.17} parent=5 // pred_check
      _
    $region34: #{generator_forward.17} parent=5 // pred_check_branch
      %190 = sbr.rel (%p187) target = $region36
    $region35: #{generator_forward.17} parent=5 // pred_region
      %s191 = ssub.s32 %s10, 1
      %s192 = smul.u32 92, %s19
      %p193 = scmp.lt.s32.totalorder %s192, 275
      %s194 = scalar_select %p193, %s192, 275
      %s195 = smul.addr %s194, 4
      %s196 = scalar_lea.vmem %s0, %s195
      %p197 = pneg %p48
      %p198 = pneg %p45
      %p199 = scmp.lt.s32.totalorder %s20, 0
      %s200 = scalar_select %p199, %s20, 0
      %s201 = smul.addr %s200, 4
      %s202 = scalar_lea.vmem %s1, %s201
      %p203 = pneg %p74
      %p204 = pneg %p71
      %p205 = pneg %p95
      %p206 = pneg %p92
      %p207 = pneg %p116
      %p208 = pneg %p113
      %p209 = pneg %p144
      %p210 = pneg %p141
      %s211 = smul.u32 92, %s19
      %p212 = scmp.lt.s32.totalorder %s211, 275
      %s213 = scalar_select %p212, %s211, 275
      %p214 = scmp.lt.s32.totalorder %s20, 0
      %s215 = scalar_select %p214, %s20, 0
      %s216 = sadd.s32 %s215, %s213
      %s217 = smul.addr %s216, 8
      %s218 = scalar_lea.vmem %s4, %s217
      %s219 = smul.u32 92, %s19
      %p220 = scmp.lt.s32.totalorder %s219, 275
      %s221 = scalar_select %p220, %s219, 275
      %s222 = smul.addr %s221, 4
      %s223 = scalar_lea.vmem %s0, %s222
      %s224 = smul.u32 92, %s19
      %p225 = scmp.lt.s32.totalorder %s20, 0
      %s226 = scalar_select %p225, %s20, 0
      %s227 = smul.addr %s226, 4
      %s228 = scalar_lea.vmem %s1, %s227
      %s229 = smul.u32 92, %s19
      %p230 = scmp.lt.s32.totalorder %s229, 275
      %s231 = scalar_select %p230, %s229, 275
      %p232 = scmp.lt.s32.totalorder %s20, 0
      %s233 = scalar_select %p232, %s20, 0
      %s234 = sadd.s32 %s233, %s231
      %s235 = smul.addr %s234, 8
      %s236 = scalar_lea.vmem %s4, %s235
      %s237 = smul.u32 92, %s19
      %v239 = vld [vmem:[%s223] sm:$0xf]
      %v240 = vld [vmem:[%s223 + $0x4] sm:$0xf]
      %v241 = vld [vmem:[%s223 + $0x8] sm:$0xf]
      %v242 = vld [vmem:[%s223 + $0xc] sm:$0xf]
      %v243 = vld [vmem:[%s223 + $0x10] sm:$0xf]
      %v244 = vld [vmem:[%s223 + $0x14] sm:$0xf]
      %v245 = vld [vmem:[%s223 + $0x18] sm:$0xf]
      %v246 = vld [vmem:[%s223 + $0x1c] sm:$0xf]
      %v247 = vld [vmem:[%s223 + $0x20] sm:$0xf]
      %v248 = vld [vmem:[%s223 + $0x24] sm:$0xf]
      %v249 = vld [vmem:[%s223 + $0x28] sm:$0xf]
      %v250 = vld [vmem:[%s223 + $0x2c] sm:$0xf]
      %v251 = vld [vmem:[%s223 + $0x30] sm:$0xf]
      %v252 = vld [vmem:[%s223 + $0x34] sm:$0xf]
      %v253 = vld [vmem:[%s223 + $0x38] sm:$0xf]
      %v254 = vld [vmem:[%s223 + $0x3c] sm:$0xf]
      %v255 = vld [vmem:[%s223 + $0x40] sm:$0xf]
      %v256 = vld [vmem:[%s223 + $0x44] sm:$0xf]
      %v257 = vld [vmem:[%s223 + $0x48] sm:$0xf]
      %v258 = vld [vmem:[%s223 + $0x4c] sm:$0xf]
      %v259 = vld [vmem:[%s223 + $0x50] sm:$0xf]
      %v260 = vld [vmem:[%s223 + $0x54] sm:$0xf]
      %v261 = vld [vmem:[%s223 + $0x58] sm:$0xf]
      %v262 = vld [vmem:[%s223 + $0x5c] sm:$0xf]
      %v263 = vld [vmem:[%s223 + $0x60] sm:$0xf]
      %v264 = vld [vmem:[%s223 + $0x64] sm:$0xf]
      %v265 = vld [vmem:[%s223 + $0x68] sm:$0xf]
      %v266 = vld [vmem:[%s223 + $0x6c] sm:$0xf]
      %v267 = vld [vmem:[%s223 + $0x70] sm:$0xf]
      %v268 = vld [vmem:[%s223 + $0x74] sm:$0xf]
      %v269 = vld [vmem:[%s223 + $0x78] sm:$0xf]
      %v270 = vld [vmem:[%s223 + $0x7c] sm:$0xf]
      %v271 = vld [vmem:[%s223 + $0x80] sm:$0xf]
      %v272 = vld [vmem:[%s223 + $0x84] sm:$0xf]
      %v273 = vld [vmem:[%s223 + $0x88] sm:$0xf]
      %v274 = vld [vmem:[%s223 + $0x8c] sm:$0xf]
      %v275 = vld [vmem:[%s223 + $0x90] sm:$0xf]
      %v276 = vld [vmem:[%s223 + $0x94] sm:$0xf]
      %v277 = vld [vmem:[%s223 + $0x98] sm:$0xf]
      %v278 = vld [vmem:[%s223 + $0x9c] sm:$0xf]
      %v279 = vld [vmem:[%s223 + $0xa0] sm:$0xf]
      %v280 = vld [vmem:[%s223 + $0xa4] sm:$0xf]
      %v281 = vld [vmem:[%s223 + $0xa8] sm:$0xf]
      %v282 = vld [vmem:[%s223 + $0xac] sm:$0xf]
      %v283 = vld [vmem:[%s223 + $0xb0] sm:$0xf]
      %v284 = vld [vmem:[%s223 + $0xb4] sm:$0xf]
      %v285 = vld [vmem:[%s223 + $0xb8] sm:$0xf]
      %v286 = vld [vmem:[%s223 + $0xbc] sm:$0xf]
      %v287 = vld [vmem:[%s223 + $0xc0] sm:$0xf]
      %v288 = vld [vmem:[%s223 + $0xc4] sm:$0xf]
      %v289 = vld [vmem:[%s223 + $0xc8] sm:$0xf]
      %v290 = vld [vmem:[%s223 + $0xcc] sm:$0xf]
      %v291 = vld [vmem:[%s223 + $0xd0] sm:$0xf]
      %v292 = vld [vmem:[%s223 + $0xd4] sm:$0xf]
      %v293 = vld [vmem:[%s223 + $0xd8] sm:$0xf]
      %v294 = vld [vmem:[%s223 + $0xdc] sm:$0xf]
      %v295 = vld [vmem:[%s223 + $0xe0] sm:$0xf]
      %v296 = vld [vmem:[%s223 + $0xe4] sm:$0xf]
      %v297 = vld [vmem:[%s223 + $0xe8] sm:$0xf]
      %v298 = vld [vmem:[%s223 + $0xec] sm:$0xf]
      %v299 = vld [vmem:[%s223 + $0xf0] sm:$0xf]
      %v300 = vld [vmem:[%s223 + $0xf4] sm:$0xf]
      %v301 = vld [vmem:[%s223 + $0xf8] sm:$0xf]
      %v302 = vld [vmem:[%s223 + $0xfc] sm:$0xf]
      %v303 = vld [vmem:[%s223 + $0x100] sm:$0xf]
      %v304 = vld [vmem:[%s223 + $0x104] sm:$0xf]
      %v305 = vld [vmem:[%s223 + $0x108] sm:$0xf]
      %v306 = vld [vmem:[%s223 + $0x10c] sm:$0xf]
      %v307 = vld [vmem:[%s223 + $0x110] sm:$0xf]
      %v308 = vld [vmem:[%s223 + $0x114] sm:$0xf]
      %v309 = vld [vmem:[%s223 + $0x118] sm:$0xf]
      %v310 = vld [vmem:[%s223 + $0x11c] sm:$0xf]
      %v311 = vld [vmem:[%s223 + $0x120] sm:$0xf]
      %v312 = vld [vmem:[%s223 + $0x124] sm:$0xf]
      %v313 = vld [vmem:[%s223 + $0x128] sm:$0xf]
      %v314 = vld [vmem:[%s223 + $0x12c] sm:$0xf]
      %v315 = vld [vmem:[%s223 + $0x130] sm:$0xf]
      %v316 = vld [vmem:[%s223 + $0x134] sm:$0xf]
      %v317 = vld [vmem:[%s223 + $0x138] sm:$0xf]
      %v318 = vld [vmem:[%s223 + $0x13c] sm:$0xf]
      %v319 = vld [vmem:[%s223 + $0x140] sm:$0xf]
      %v320 = vld [vmem:[%s223 + $0x144] sm:$0xf]
      %v321 = vld [vmem:[%s223 + $0x148] sm:$0xf]
      %v322 = vld [vmem:[%s223 + $0x14c] sm:$0xf]
      %v323 = vld [vmem:[%s223 + $0x150] sm:$0xf]
      %v324 = vld [vmem:[%s223 + $0x154] sm:$0xf]
      %v325 = vld [vmem:[%s223 + $0x158] sm:$0xf]
      %v326 = vld [vmem:[%s223 + $0x15c] sm:$0xf]
      %v327 = vld [vmem:[%s223 + $0x160] sm:$0xf]
      %v328 = vld [vmem:[%s223 + $0x164] sm:$0xf]
      %v329 = vld [vmem:[%s223 + $0x168] sm:$0xf]
      %v330 = vld [vmem:[%s223 + $0x16c] sm:$0xf]
      %v331 = vunpack.c.l.bf16 %v239
      %v332 = vunpack.c.l.bf16 %v240
      %v333 = vunpack.c.l.bf16 %v241
      %v334 = vunpack.c.l.bf16 %v242
      %v335 = vunpack.c.l.bf16 %v243
      %v336 = vunpack.c.l.bf16 %v244
      %v337 = vunpack.c.l.bf16 %v245
      %v338 = vunpack.c.l.bf16 %v246
      %v339 = vunpack.c.l.bf16 %v247
      %v340 = vunpack.c.l.bf16 %v248
      %v341 = vunpack.c.l.bf16 %v249
      %v342 = vunpack.c.l.bf16 %v250
      %v343 = vunpack.c.l.bf16 %v251
      %v344 = vunpack.c.l.bf16 %v252
      %v345 = vunpack.c.l.bf16 %v253
      %v346 = vunpack.c.l.bf16 %v254
      %v347 = vunpack.c.l.bf16 %v255
      %v348 = vunpack.c.l.bf16 %v256
      %v349 = vunpack.c.l.bf16 %v257
      %v350 = vunpack.c.l.bf16 %v258
      %v351 = vunpack.c.l.bf16 %v259
      %v352 = vunpack.c.l.bf16 %v260
      %v353 = vunpack.c.l.bf16 %v261
      %v354 = vunpack.c.l.bf16 %v262
      %v355 = vunpack.c.l.bf16 %v263
      %v356 = vunpack.c.l.bf16 %v264
      %v357 = vunpack.c.l.bf16 %v265
      %v358 = vunpack.c.l.bf16 %v266
      %v359 = vunpack.c.l.bf16 %v267
      %v360 = vunpack.c.l.bf16 %v268
      %v361 = vunpack.c.l.bf16 %v269
      %v362 = vunpack.c.l.bf16 %v270
      %v363 = vunpack.c.l.bf16 %v271
      %v364 = vunpack.c.l.bf16 %v272
      %v365 = vunpack.c.l.bf16 %v273
      %v366 = vunpack.c.l.bf16 %v274
      %v367 = vunpack.c.l.bf16 %v275
      %v368 = vunpack.c.l.bf16 %v276
      %v369 = vunpack.c.l.bf16 %v277
      %v370 = vunpack.c.l.bf16 %v278
      %v371 = vunpack.c.l.bf16 %v279
      %v372 = vunpack.c.l.bf16 %v280
      %v373 = vunpack.c.l.bf16 %v281
      %v374 = vunpack.c.l.bf16 %v282
      %v375 = vunpack.c.l.bf16 %v283
      %v376 = vunpack.c.l.bf16 %v284
      %v377 = vunpack.c.l.bf16 %v285
      %v378 = vunpack.c.l.bf16 %v286
      %v379 = vunpack.c.l.bf16 %v287
      %v380 = vunpack.c.l.bf16 %v288
      %v381 = vunpack.c.l.bf16 %v289
      %v382 = vunpack.c.l.bf16 %v290
      %v383 = vunpack.c.l.bf16 %v291
      %v384 = vunpack.c.l.bf16 %v292
      %v385 = vunpack.c.l.bf16 %v293
      %v386 = vunpack.c.l.bf16 %v294
      %v387 = vunpack.c.l.bf16 %v295
      %v388 = vunpack.c.l.bf16 %v296
      %v389 = vunpack.c.l.bf16 %v297
      %v390 = vunpack.c.l.bf16 %v298
      %v391 = vunpack.c.l.bf16 %v299
      %v392 = vunpack.c.l.bf16 %v300
      %v393 = vunpack.c.l.bf16 %v301
      %v394 = vunpack.c.l.bf16 %v302
      %v395 = vunpack.c.l.bf16 %v303
      %v396 = vunpack.c.l.bf16 %v304
      %v397 = vunpack.c.l.bf16 %v305
      %v398 = vunpack.c.l.bf16 %v306
      %v399 = vunpack.c.l.bf16 %v307
      %v400 = vunpack.c.l.bf16 %v308
      %v401 = vunpack.c.l.bf16 %v309
      %v402 = vunpack.c.l.bf16 %v310
      %v403 = vunpack.c.l.bf16 %v311
      %v404 = vunpack.c.l.bf16 %v312
      %v405 = vunpack.c.l.bf16 %v313
      %v406 = vunpack.c.l.bf16 %v314
      %v407 = vunpack.c.l.bf16 %v315
      %v408 = vunpack.c.l.bf16 %v316
      %v409 = vunpack.c.l.bf16 %v317
      %v410 = vunpack.c.l.bf16 %v318
      %v411 = vunpack.c.l.bf16 %v319
      %v412 = vunpack.c.l.bf16 %v320
      %v413 = vunpack.c.l.bf16 %v321
      %v414 = vunpack.c.l.bf16 %v322
      %v415 = vunpack.c.l.bf16 %v323
      %v416 = vunpack.c.l.bf16 %v324
      %v417 = vunpack.c.l.bf16 %v325
      %v418 = vunpack.c.l.bf16 %v326
      %v419 = vunpack.c.l.bf16 %v327
      %v420 = vunpack.c.l.bf16 %v328
      %v421 = vunpack.c.l.bf16 %v329
      %v422 = vunpack.c.l.bf16 %v330
      %v423 = vld [vmem:[%s2] sm:$0x1]
      %v425 = vperm.slane %v423, 0
      %v427 = vmul.f32 %v331, %v425
      %v428 = vmul.f32 %v332, %v425
      %v429 = vmul.f32 %v333, %v425
      %v430 = vmul.f32 %v334, %v425
      %v431 = vmul.f32 %v335, %v425
      %v432 = vmul.f32 %v336, %v425
      %v433 = vmul.f32 %v337, %v425
      %v434 = vmul.f32 %v338, %v425
      %v435 = vmul.f32 %v339, %v425
      %v436 = vmul.f32 %v340, %v425
      %v437 = vmul.f32 %v341, %v425
      %v438 = vmul.f32 %v342, %v425
      %v439 = vmul.f32 %v343, %v425
      %v440 = vmul.f32 %v344, %v425
      %v441 = vmul.f32 %v345, %v425
      %v442 = vmul.f32 %v346, %v425
      %v443 = vmul.f32 %v347, %v425
      %v444 = vmul.f32 %v348, %v425
      %v445 = vmul.f32 %v349, %v425
      %v446 = vmul.f32 %v350, %v425
      %v447 = vmul.f32 %v351, %v425
      %v448 = vmul.f32 %v352, %v425
      %v449 = vmul.f32 %v353, %v425
      %v450 = vmul.f32 %v354, %v425
      %v451 = vmul.f32 %v355, %v425
      %v452 = vmul.f32 %v356, %v425
      %v453 = vmul.f32 %v357, %v425
      %v454 = vmul.f32 %v358, %v425
      %v455 = vmul.f32 %v359, %v425
      %v456 = vmul.f32 %v360, %v425
      %v457 = vmul.f32 %v361, %v425
      %v458 = vmul.f32 %v362, %v425
      %v459 = vmul.f32 %v363, %v425
      %v460 = vmul.f32 %v364, %v425
      %v461 = vmul.f32 %v365, %v425
      %v462 = vmul.f32 %v366, %v425
      %v463 = vmul.f32 %v367, %v425
      %v464 = vmul.f32 %v368, %v425
      %v465 = vmul.f32 %v369, %v425
      %v466 = vmul.f32 %v370, %v425
      %v467 = vmul.f32 %v371, %v425
      %v468 = vmul.f32 %v372, %v425
      %v469 = vmul.f32 %v373, %v425
      %v470 = vmul.f32 %v374, %v425
      %v471 = vmul.f32 %v375, %v425
      %v472 = vmul.f32 %v376, %v425
      %v473 = vmul.f32 %v377, %v425
      %v474 = vmul.f32 %v378, %v425
      %v475 = vmul.f32 %v379, %v425
      %v476 = vmul.f32 %v380, %v425
      %v477 = vmul.f32 %v381, %v425
      %v478 = vmul.f32 %v382, %v425
      %v479 = vmul.f32 %v383, %v425
      %v480 = vmul.f32 %v384, %v425
      %v481 = vmul.f32 %v385, %v425
      %v482 = vmul.f32 %v386, %v425
      %v483 = vmul.f32 %v387, %v425
      %v484 = vmul.f32 %v388, %v425
      %v485 = vmul.f32 %v389, %v425
      %v486 = vmul.f32 %v390, %v425
      %v487 = vmul.f32 %v391, %v425
      %v488 = vmul.f32 %v392, %v425
      %v489 = vmul.f32 %v393, %v425
      %v490 = vmul.f32 %v394, %v425
      %v491 = vmul.f32 %v395, %v425
      %v492 = vmul.f32 %v396, %v425
      %v493 = vmul.f32 %v397, %v425
      %v494 = vmul.f32 %v398, %v425
      %v495 = vmul.f32 %v399, %v425
      %v496 = vmul.f32 %v400, %v425
      %v497 = vmul.f32 %v401, %v425
      %v498 = vmul.f32 %v402, %v425
      %v499 = vmul.f32 %v403, %v425
      %v500 = vmul.f32 %v404, %v425
      %v501 = vmul.f32 %v405, %v425
      %v502 = vmul.f32 %v406, %v425
      %v503 = vmul.f32 %v407, %v425
      %v504 = vmul.f32 %v408, %v425
      %v505 = vmul.f32 %v409, %v425
      %v506 = vmul.f32 %v410, %v425
      %v507 = vmul.f32 %v411, %v425
      %v508 = vmul.f32 %v412, %v425
      %v509 = vmul.f32 %v413, %v425
      %v510 = vmul.f32 %v414, %v425
      %v511 = vmul.f32 %v415, %v425
      %v512 = vmul.f32 %v416, %v425
      %v513 = vmul.f32 %v417, %v425
      %v514 = vmul.f32 %v418, %v425
      %v515 = vmul.f32 %v419, %v425
      %v516 = vmul.f32 %v420, %v425
      %v517 = vmul.f32 %v421, %v425
      %v518 = vmul.f32 %v422, %v425
      %v519 = vld [vmem:[%s3] sm:$0x1]
      %v521 = vperm.slane %v519, 0
      %v523 = vadd.f32 %v427, %v521
      %v524 = vadd.f32 %v428, %v521
      %v525 = vadd.f32 %v429, %v521
      %v526 = vadd.f32 %v430, %v521
      %v527 = vadd.f32 %v431, %v521
      %v528 = vadd.f32 %v432, %v521
      %v529 = vadd.f32 %v433, %v521
      %v530 = vadd.f32 %v434, %v521
      %v531 = vadd.f32 %v435, %v521
      %v532 = vadd.f32 %v436, %v521
      %v533 = vadd.f32 %v437, %v521
      %v534 = vadd.f32 %v438, %v521
      %v535 = vadd.f32 %v439, %v521
      %v536 = vadd.f32 %v440, %v521
      %v537 = vadd.f32 %v441, %v521
      %v538 = vadd.f32 %v442, %v521
      %v539 = vadd.f32 %v443, %v521
      %v540 = vadd.f32 %v444, %v521
      %v541 = vadd.f32 %v445, %v521
      %v542 = vadd.f32 %v446, %v521
      %v543 = vadd.f32 %v447, %v521
      %v544 = vadd.f32 %v448, %v521
      %v545 = vadd.f32 %v449, %v521
      %v546 = vadd.f32 %v450, %v521
      %v547 = vadd.f32 %v451, %v521
      %v548 = vadd.f32 %v452, %v521
      %v549 = vadd.f32 %v453, %v521
      %v550 = vadd.f32 %v454, %v521
      %v551 = vadd.f32 %v455, %v521
      %v552 = vadd.f32 %v456, %v521
      %v553 = vadd.f32 %v457, %v521
      %v554 = vadd.f32 %v458, %v521
      %v555 = vadd.f32 %v459, %v521
      %v556 = vadd.f32 %v460, %v521
      %v557 = vadd.f32 %v461, %v521
      %v558 = vadd.f32 %v462, %v521
      %v559 = vadd.f32 %v463, %v521
      %v560 = vadd.f32 %v464, %v521
      %v561 = vadd.f32 %v465, %v521
      %v562 = vadd.f32 %v466, %v521
      %v563 = vadd.f32 %v467, %v521
      %v564 = vadd.f32 %v468, %v521
      %v565 = vadd.f32 %v469, %v521
      %v566 = vadd.f32 %v470, %v521
      %v567 = vadd.f32 %v471, %v521
      %v568 = vadd.f32 %v472, %v521
      %v569 = vadd.f32 %v473, %v521
      %v570 = vadd.f32 %v474, %v521
      %v571 = vadd.f32 %v475, %v521
      %v572 = vadd.f32 %v476, %v521
      %v573 = vadd.f32 %v477, %v521
      %v574 = vadd.f32 %v478, %v521
      %v575 = vadd.f32 %v479, %v521
      %v576 = vadd.f32 %v480, %v521
      %v577 = vadd.f32 %v481, %v521
      %v578 = vadd.f32 %v482, %v521
      %v579 = vadd.f32 %v483, %v521
      %v580 = vadd.f32 %v484, %v521
      %v581 = vadd.f32 %v485, %v521
      %v582 = vadd.f32 %v486, %v521
      %v583 = vadd.f32 %v487, %v521
      %v584 = vadd.f32 %v488, %v521
      %v585 = vadd.f32 %v489, %v521
      %v586 = vadd.f32 %v490, %v521
      %v587 = vadd.f32 %v491, %v521
      %v588 = vadd.f32 %v492, %v521
      %v589 = vadd.f32 %v493, %v521
      %v590 = vadd.f32 %v494, %v521
      %v591 = vadd.f32 %v495, %v521
      %v592 = vadd.f32 %v496, %v521
      %v593 = vadd.f32 %v497, %v521
      %v594 = vadd.f32 %v498, %v521
      %v595 = vadd.f32 %v499, %v521
      %v596 = vadd.f32 %v500, %v521
      %v597 = vadd.f32 %v501, %v521
      %v598 = vadd.f32 %v502, %v521
      %v599 = vadd.f32 %v503, %v521
      %v600 = vadd.f32 %v504, %v521
      %v601 = vadd.f32 %v505, %v521
      %v602 = vadd.f32 %v506, %v521
      %v603 = vadd.f32 %v507, %v521
      %v604 = vadd.f32 %v508, %v521
      %v605 = vadd.f32 %v509, %v521
      %v606 = vadd.f32 %v510, %v521
      %v607 = vadd.f32 %v511, %v521
      %v608 = vadd.f32 %v512, %v521
      %v609 = vadd.f32 %v513, %v521
      %v610 = vadd.f32 %v514, %v521
      %v611 = vadd.f32 %v515, %v521
      %v612 = vadd.f32 %v516, %v521
      %v613 = vadd.f32 %v517, %v521
      %v614 = vadd.f32 %v518, %v521
      %v615 = vmax.f32 %v523, 0.0
      %v616 = vmax.f32 %v524, 0.0
      %v617 = vmax.f32 %v525, 0.0
      %v618 = vmax.f32 %v526, 0.0
      %v619 = vmax.f32 %v527, 0.0
      %v620 = vmax.f32 %v528, 0.0
      %v621 = vmax.f32 %v529, 0.0
      %v622 = vmax.f32 %v530, 0.0
      %v623 = vmax.f32 %v531, 0.0
      %v624 = vmax.f32 %v532, 0.0
      %v625 = vmax.f32 %v533, 0.0
      %v626 = vmax.f32 %v534, 0.0
      %v627 = vmax.f32 %v535, 0.0
      %v628 = vmax.f32 %v536, 0.0
      %v629 = vmax.f32 %v537, 0.0
      %v630 = vmax.f32 %v538, 0.0
      %v631 = vmax.f32 %v539, 0.0
      %v632 = vmax.f32 %v540, 0.0
      %v633 = vmax.f32 %v541, 0.0
      %v634 = vmax.f32 %v542, 0.0
      %v635 = vmax.f32 %v543, 0.0
      %v636 = vmax.f32 %v544, 0.0
      %v637 = vmax.f32 %v545, 0.0
      %v638 = vmax.f32 %v546, 0.0
      %v639 = vmax.f32 %v547, 0.0
      %v640 = vmax.f32 %v548, 0.0
      %v641 = vmax.f32 %v549, 0.0
      %v642 = vmax.f32 %v550, 0.0
      %v643 = vmax.f32 %v551, 0.0
      %v644 = vmax.f32 %v552, 0.0
      %v645 = vmax.f32 %v553, 0.0
      %v646 = vmax.f32 %v554, 0.0
      %v647 = vmax.f32 %v555, 0.0
      %v648 = vmax.f32 %v556, 0.0
      %v649 = vmax.f32 %v557, 0.0
      %v650 = vmax.f32 %v558, 0.0
      %v651 = vmax.f32 %v559, 0.0
      %v652 = vmax.f32 %v560, 0.0
      %v653 = vmax.f32 %v561, 0.0
      %v654 = vmax.f32 %v562, 0.0
      %v655 = vmax.f32 %v563, 0.0
      %v656 = vmax.f32 %v564, 0.0
      %v657 = vmax.f32 %v565, 0.0
      %v658 = vmax.f32 %v566, 0.0
      %v659 = vmax.f32 %v567, 0.0
      %v660 = vmax.f32 %v568, 0.0
      %v661 = vmax.f32 %v569, 0.0
      %v662 = vmax.f32 %v570, 0.0
      %v663 = vmax.f32 %v571, 0.0
      %v664 = vmax.f32 %v572, 0.0
      %v665 = vmax.f32 %v573, 0.0
      %v666 = vmax.f32 %v574, 0.0
      %v667 = vmax.f32 %v575, 0.0
      %v668 = vmax.f32 %v576, 0.0
      %v669 = vmax.f32 %v577, 0.0
      %v670 = vmax.f32 %v578, 0.0
      %v671 = vmax.f32 %v579, 0.0
      %v672 = vmax.f32 %v580, 0.0
      %v673 = vmax.f32 %v581, 0.0
      %v674 = vmax.f32 %v582, 0.0
      %v675 = vmax.f32 %v583, 0.0
      %v676 = vmax.f32 %v584, 0.0
      %v677 = vmax.f32 %v585, 0.0
      %v678 = vmax.f32 %v586, 0.0
      %v679 = vmax.f32 %v587, 0.0
      %v680 = vmax.f32 %v588, 0.0
      %v681 = vmax.f32 %v589, 0.0
      %v682 = vmax.f32 %v590, 0.0
      %v683 = vmax.f32 %v591, 0.0
      %v684 = vmax.f32 %v592, 0.0
      %v685 = vmax.f32 %v593, 0.0
      %v686 = vmax.f32 %v594, 0.0
      %v687 = vmax.f32 %v595, 0.0
      %v688 = vmax.f32 %v596, 0.0
      %v689 = vmax.f32 %v597, 0.0
      %v690 = vmax.f32 %v598, 0.0
      %v691 = vmax.f32 %v599, 0.0
      %v692 = vmax.f32 %v600, 0.0
      %v693 = vmax.f32 %v601, 0.0
      %v694 = vmax.f32 %v602, 0.0
      %v695 = vmax.f32 %v603, 0.0
      %v696 = vmax.f32 %v604, 0.0
      %v697 = vmax.f32 %v605, 0.0
      %v698 = vmax.f32 %v606, 0.0
      %v699 = vmax.f32 %v607, 0.0
      %v700 = vmax.f32 %v608, 0.0
      %v701 = vmax.f32 %v609, 0.0
      %v702 = vmax.f32 %v610, 0.0
      %v703 = vmax.f32 %v611, 0.0
      %v704 = vmax.f32 %v612, 0.0
      %v705 = vmax.f32 %v613, 0.0
      %v706 = vmax.f32 %v614, 0.0
      %v707 = vpack.c.bf16 %v616, %v615
      %v708 = vpack.c.bf16 %v618, %v617
      %v709 = vpack.c.bf16 %v620, %v619
      %v710 = vpack.c.bf16 %v622, %v621
      %v711 = vpack.c.bf16 %v624, %v623
      %v712 = vpack.c.bf16 %v626, %v625
      %v713 = vpack.c.bf16 %v628, %v627
      %v714 = vpack.c.bf16 %v630, %v629
      %v715 = vpack.c.bf16 %v632, %v631
      %v716 = vpack.c.bf16 %v634, %v633
      %v717 = vpack.c.bf16 %v636, %v635
      %v718 = vpack.c.bf16 %v638, %v637
      %v719 = vpack.c.bf16 %v640, %v639
      %v720 = vpack.c.bf16 %v642, %v641
      %v721 = vpack.c.bf16 %v644, %v643
      %v722 = vpack.c.bf16 %v646, %v645
      %v723 = vpack.c.bf16 %v648, %v647
      %v724 = vpack.c.bf16 %v650, %v649
      %v725 = vpack.c.bf16 %v652, %v651
      %v726 = vpack.c.bf16 %v654, %v653
      %v727 = vpack.c.bf16 %v656, %v655
      %v728 = vpack.c.bf16 %v658, %v657
      %v729 = vpack.c.bf16 %v660, %v659
      %v730 = vpack.c.bf16 %v662, %v661
      %v731 = vpack.c.bf16 %v664, %v663
      %v732 = vpack.c.bf16 %v666, %v665
      %v733 = vpack.c.bf16 %v668, %v667
      %v734 = vpack.c.bf16 %v670, %v669
      %v735 = vpack.c.bf16 %v672, %v671
      %v736 = vpack.c.bf16 %v674, %v673
      %v737 = vpack.c.bf16 %v676, %v675
      %v738 = vpack.c.bf16 %v678, %v677
      %v739 = vpack.c.bf16 %v680, %v679
      %v740 = vpack.c.bf16 %v682, %v681
      %v741 = vpack.c.bf16 %v684, %v683
      %v742 = vpack.c.bf16 %v686, %v685
      %v743 = vpack.c.bf16 %v688, %v687
      %v744 = vpack.c.bf16 %v690, %v689
      %v745 = vpack.c.bf16 %v692, %v691
      %v746 = vpack.c.bf16 %v694, %v693
      %v747 = vpack.c.bf16 %v696, %v695
      %v748 = vpack.c.bf16 %v698, %v697
      %v749 = vpack.c.bf16 %v700, %v699
      %v750 = vpack.c.bf16 %v702, %v701
      %v751 = vpack.c.bf16 %v704, %v703
      %v752 = vpack.c.bf16 %v706, %v705
      %v753 = vld [vmem:[%s228] sm:$0xf]
      %v754 = vld [vmem:[%s228 + $0x4] sm:$0xf]
      %v755 = vld [vmem:[%s228 + $0x8] sm:$0xf]
      %v756 = vld [vmem:[%s228 + $0xc] sm:$0xf]
      %v761 = vunpack.c.l.b16 %v753
      %v762 = vunpack.c.l.b16 %v754
      %v763 = vunpack.c.l.b16 %v755
      %v764 = vunpack.c.l.b16 %v756
      %v765 = vpack.c.b16 %v762, %v761
      %v766 = vpack.c.b16 %v764, %v763
      %vm769 = vcmask 261120
      %v771 = vsel %vm769, %v707, 0
      %v774 = vsel %vm769, %v708, 0
      %v777 = vsel %vm769, %v709, 0
      %v780 = vsel %vm769, %v710, 0
      %v783 = vsel %vm769, %v711, 0
      %v786 = vsel %vm769, %v712, 0
      %v789 = vsel %vm769, %v713, 0
      %v792 = vsel %vm769, %v714, 0
      %v795 = vsel %vm769, %v715, 0
      %v798 = vsel %vm769, %v716, 0
      %v801 = vsel %vm769, %v717, 0
      %v804 = vsel %vm769, %v718, 0
      %v807 = vsel %vm769, %v719, 0
      %v810 = vsel %vm769, %v720, 0
      %v813 = vsel %vm769, %v721, 0
      %v816 = vsel %vm769, %v722, 0
      %v819 = vsel %vm769, %v723, 0
      %v822 = vsel %vm769, %v724, 0
      %v825 = vsel %vm769, %v725, 0
      %v828 = vsel %vm769, %v726, 0
      %v831 = vsel %vm769, %v727, 0
      %v834 = vsel %vm769, %v728, 0
      %v837 = vsel %vm769, %v729, 0
      %v840 = vsel %vm769, %v730, 0
      %v843 = vsel %vm769, %v731, 0
      %v846 = vsel %vm769, %v732, 0
      %v849 = vsel %vm769, %v733, 0
      %v852 = vsel %vm769, %v734, 0
      %v855 = vsel %vm769, %v735, 0
      %v858 = vsel %vm769, %v736, 0
      %v861 = vsel %vm769, %v737, 0
      %v864 = vsel %vm769, %v738, 0
      %v867 = vsel %vm769, %v739, 0
      %v870 = vsel %vm769, %v740, 0
      %v873 = vsel %vm769, %v741, 0
      %v876 = vsel %vm769, %v742, 0
      %v879 = vsel %vm769, %v743, 0
      %v882 = vsel %vm769, %v744, 0
      %v885 = vsel %vm769, %v745, 0
      %v888 = vsel %vm769, %v746, 0
      %v891 = vsel %vm769, %v747, 0
      %v894 = vsel %vm769, %v748, 0
      %v897 = vsel %vm769, %v749, 0
      %v900 = vsel %vm769, %v750, 0
      %v903 = vsel %vm769, %v751, 0
      %v906 = vsel %vm769, %v752, 0
      %908 = vmatpush.bf16.msra.mxu0 0
      %909 = vmatpush.bf16.msra.mxu0 0
      %910 = vmatpush.bf16.msra.mxu0 0
      %911 = vmatpush.bf16.msra.mxu0 0
      %912 = vmatpush.bf16.msra.mxu0 0
      %913 = vmatpush.bf16.msra.mxu0 0
      %914 = vmatpush.bf16.msra.mxu0 %v766
      %915 = vmatpush.bf16.msra.mxu0 %v765
      %916 = vmatmul.bf16.gmra.mxu0 %v771
      %v917 = vpop.f32.mrf.mxu0
      %v918 = vadd.f32 0.0, %v917
      %v919 = vpop.f32.mrf.mxu0
      %v920 = vadd.f32 0.0, %v919
      %921 = vmatmul.bf16.gmra.mxu0 %v774
      %v922 = vpop.f32.mrf.mxu0
      %v923 = vadd.f32 0.0, %v922
      %v924 = vpop.f32.mrf.mxu0
      %v925 = vadd.f32 0.0, %v924
      %926 = vmatmul.bf16.gmra.mxu0 %v777
      %v927 = vpop.f32.mrf.mxu0
      %v928 = vadd.f32 0.0, %v927
      %v929 = vpop.f32.mrf.mxu0
      %v930 = vadd.f32 0.0, %v929
      %931 = vmatmul.bf16.gmra.mxu0 %v780
      %v932 = vpop.f32.mrf.mxu0
      %v933 = vadd.f32 0.0, %v932
      %v934 = vpop.f32.mrf.mxu0
      %v935 = vadd.f32 0.0, %v934
      %936 = vmatmul.bf16.gmra.mxu0 %v783
      %v937 = vpop.f32.mrf.mxu0
      %v938 = vadd.f32 0.0, %v937
      %v939 = vpop.f32.mrf.mxu0
      %v940 = vadd.f32 0.0, %v939
      %941 = vmatmul.bf16.gmra.mxu0 %v786
      %v942 = vpop.f32.mrf.mxu0
      %v943 = vadd.f32 0.0, %v942
      %v944 = vpop.f32.mrf.mxu0
      %v945 = vadd.f32 0.0, %v944
      %946 = vmatmul.bf16.gmra.mxu0 %v789
      %v947 = vpop.f32.mrf.mxu0
      %v948 = vadd.f32 0.0, %v947
      %v949 = vpop.f32.mrf.mxu0
      %v950 = vadd.f32 0.0, %v949
      %951 = vmatmul.bf16.gmra.mxu0 %v792
      %v952 = vpop.f32.mrf.mxu0
      %v953 = vadd.f32 0.0, %v952
      %v954 = vpop.f32.mrf.mxu0
      %v955 = vadd.f32 0.0, %v954
      %956 = vmatmul.bf16.gmra.mxu0 %v795
      %v957 = vpop.f32.mrf.mxu0
      %v958 = vadd.f32 0.0, %v957
      %v959 = vpop.f32.mrf.mxu0
      %v960 = vadd.f32 0.0, %v959
      %961 = vmatmul.bf16.gmra.mxu0 %v798
      %v962 = vpop.f32.mrf.mxu0
      %v963 = vadd.f32 0.0, %v962
      %v964 = vpop.f32.mrf.mxu0
      %v965 = vadd.f32 0.0, %v964
      %966 = vmatmul.bf16.gmra.mxu0 %v801
      %v967 = vpop.f32.mrf.mxu0
      %v968 = vadd.f32 0.0, %v967
      %v969 = vpop.f32.mrf.mxu0
      %v970 = vadd.f32 0.0, %v969
      %971 = vmatmul.bf16.gmra.mxu0 %v804
      %v972 = vpop.f32.mrf.mxu0
      %v973 = vadd.f32 0.0, %v972
      %v974 = vpop.f32.mrf.mxu0
      %v975 = vadd.f32 0.0, %v974
      %976 = vmatmul.bf16.gmra.mxu0 %v807
      %v977 = vpop.f32.mrf.mxu0
      %v978 = vadd.f32 0.0, %v977
      %v979 = vpop.f32.mrf.mxu0
      %v980 = vadd.f32 0.0, %v979
      %981 = vmatmul.bf16.gmra.mxu0 %v810
      %v982 = vpop.f32.mrf.mxu0
      %v983 = vadd.f32 0.0, %v982
      %v984 = vpop.f32.mrf.mxu0
      %v985 = vadd.f32 0.0, %v984
      %986 = vmatmul.bf16.gmra.mxu0 %v813
      %v987 = vpop.f32.mrf.mxu0
      %v988 = vadd.f32 0.0, %v987
      %v989 = vpop.f32.mrf.mxu0
      %v990 = vadd.f32 0.0, %v989
      %991 = vmatmul.bf16.gmra.mxu0 %v816
      %v992 = vpop.f32.mrf.mxu0
      %v993 = vadd.f32 0.0, %v992
      %v994 = vpop.f32.mrf.mxu0
      %v995 = vadd.f32 0.0, %v994
      %996 = vmatmul.bf16.gmra.mxu0 %v819
      %v997 = vpop.f32.mrf.mxu0
      %v998 = vadd.f32 0.0, %v997
      %v999 = vpop.f32.mrf.mxu0
      %v1000 = vadd.f32 0.0, %v999
      %1001 = vmatmul.bf16.gmra.mxu0 %v822
      %v1002 = vpop.f32.mrf.mxu0
      %v1003 = vadd.f32 0.0, %v1002
      %v1004 = vpop.f32.mrf.mxu0
      %v1005 = vadd.f32 0.0, %v1004
      %1006 = vmatmul.bf16.gmra.mxu0 %v825
      %v1007 = vpop.f32.mrf.mxu0
      %v1008 = vadd.f32 0.0, %v1007
      %v1009 = vpop.f32.mrf.mxu0
      %v1010 = vadd.f32 0.0, %v1009
      %1011 = vmatmul.bf16.gmra.mxu0 %v828
      %v1012 = vpop.f32.mrf.mxu0
      %v1013 = vadd.f32 0.0, %v1012
      %v1014 = vpop.f32.mrf.mxu0
      %v1015 = vadd.f32 0.0, %v1014
      %1016 = vmatmul.bf16.gmra.mxu0 %v831
      %v1017 = vpop.f32.mrf.mxu0
      %v1018 = vadd.f32 0.0, %v1017
      %v1019 = vpop.f32.mrf.mxu0
      %v1020 = vadd.f32 0.0, %v1019
      %1021 = vmatmul.bf16.gmra.mxu0 %v834
      %v1022 = vpop.f32.mrf.mxu0
      %v1023 = vadd.f32 0.0, %v1022
      %v1024 = vpop.f32.mrf.mxu0
      %v1025 = vadd.f32 0.0, %v1024
      %1026 = vmatmul.bf16.gmra.mxu0 %v837
      %v1027 = vpop.f32.mrf.mxu0
      %v1028 = vadd.f32 0.0, %v1027
      %v1029 = vpop.f32.mrf.mxu0
      %v1030 = vadd.f32 0.0, %v1029
      %1031 = vmatmul.bf16.gmra.mxu0 %v840
      %v1032 = vpop.f32.mrf.mxu0
      %v1033 = vadd.f32 0.0, %v1032
      %v1034 = vpop.f32.mrf.mxu0
      %v1035 = vadd.f32 0.0, %v1034
      %1036 = vmatmul.bf16.gmra.mxu0 %v843
      %v1037 = vpop.f32.mrf.mxu0
      %v1038 = vadd.f32 0.0, %v1037
      %v1039 = vpop.f32.mrf.mxu0
      %v1040 = vadd.f32 0.0, %v1039
      %1041 = vmatmul.bf16.gmra.mxu0 %v846
      %v1042 = vpop.f32.mrf.mxu0
      %v1043 = vadd.f32 0.0, %v1042
      %v1044 = vpop.f32.mrf.mxu0
      %v1045 = vadd.f32 0.0, %v1044
      %1046 = vmatmul.bf16.gmra.mxu0 %v849
      %v1047 = vpop.f32.mrf.mxu0
      %v1048 = vadd.f32 0.0, %v1047
      %v1049 = vpop.f32.mrf.mxu0
      %v1050 = vadd.f32 0.0, %v1049
      %1051 = vmatmul.bf16.gmra.mxu0 %v852
      %v1052 = vpop.f32.mrf.mxu0
      %v1053 = vadd.f32 0.0, %v1052
      %v1054 = vpop.f32.mrf.mxu0
      %v1055 = vadd.f32 0.0, %v1054
      %1056 = vmatmul.bf16.gmra.mxu0 %v855
      %v1057 = vpop.f32.mrf.mxu0
      %v1058 = vadd.f32 0.0, %v1057
      %v1059 = vpop.f32.mrf.mxu0
      %v1060 = vadd.f32 0.0, %v1059
      %1061 = vmatmul.bf16.gmra.mxu0 %v858
      %v1062 = vpop.f32.mrf.mxu0
      %v1063 = vadd.f32 0.0, %v1062
      %v1064 = vpop.f32.mrf.mxu0
      %v1065 = vadd.f32 0.0, %v1064
      %1066 = vmatmul.bf16.gmra.mxu0 %v861
      %v1067 = vpop.f32.mrf.mxu0
      %v1068 = vadd.f32 0.0, %v1067
      %v1069 = vpop.f32.mrf.mxu0
      %v1070 = vadd.f32 0.0, %v1069
      %1071 = vmatmul.bf16.gmra.mxu0 %v864
      %v1072 = vpop.f32.mrf.mxu0
      %v1073 = vadd.f32 0.0, %v1072
      %v1074 = vpop.f32.mrf.mxu0
      %v1075 = vadd.f32 0.0, %v1074
      %1076 = vmatmul.bf16.gmra.mxu0 %v867
      %v1077 = vpop.f32.mrf.mxu0
      %v1078 = vadd.f32 0.0, %v1077
      %v1079 = vpop.f32.mrf.mxu0
      %v1080 = vadd.f32 0.0, %v1079
      %1081 = vmatmul.bf16.gmra.mxu0 %v870
      %v1082 = vpop.f32.mrf.mxu0
      %v1083 = vadd.f32 0.0, %v1082
      %v1084 = vpop.f32.mrf.mxu0
      %v1085 = vadd.f32 0.0, %v1084
      %1086 = vmatmul.bf16.gmra.mxu0 %v873
      %v1087 = vpop.f32.mrf.mxu0
      %v1088 = vadd.f32 0.0, %v1087
      %v1089 = vpop.f32.mrf.mxu0
      %v1090 = vadd.f32 0.0, %v1089
      %1091 = vmatmul.bf16.gmra.mxu0 %v876
      %v1092 = vpop.f32.mrf.mxu0
      %v1093 = vadd.f32 0.0, %v1092
      %v1094 = vpop.f32.mrf.mxu0
      %v1095 = vadd.f32 0.0, %v1094
      %1096 = vmatmul.bf16.gmra.mxu0 %v879
      %v1097 = vpop.f32.mrf.mxu0
      %v1098 = vadd.f32 0.0, %v1097
      %v1099 = vpop.f32.mrf.mxu0
      %v1100 = vadd.f32 0.0, %v1099
      %1101 = vmatmul.bf16.gmra.mxu0 %v882
      %v1102 = vpop.f32.mrf.mxu0
      %v1103 = vadd.f32 0.0, %v1102
      %v1104 = vpop.f32.mrf.mxu0
      %v1105 = vadd.f32 0.0, %v1104
      %1106 = vmatmul.bf16.gmra.mxu0 %v885
      %v1107 = vpop.f32.mrf.mxu0
      %v1108 = vadd.f32 0.0, %v1107
      %v1109 = vpop.f32.mrf.mxu0
      %v1110 = vadd.f32 0.0, %v1109
      %1111 = vmatmul.bf16.gmra.mxu0 %v888
      %v1112 = vpop.f32.mrf.mxu0
      %v1113 = vadd.f32 0.0, %v1112
      %v1114 = vpop.f32.mrf.mxu0
      %v1115 = vadd.f32 0.0, %v1114
      %1116 = vmatmul.bf16.gmra.mxu0 %v891
      %v1117 = vpop.f32.mrf.mxu0
      %v1118 = vadd.f32 0.0, %v1117
      %v1119 = vpop.f32.mrf.mxu0
      %v1120 = vadd.f32 0.0, %v1119
      %1121 = vmatmul.bf16.gmra.mxu0 %v894
      %v1122 = vpop.f32.mrf.mxu0
      %v1123 = vadd.f32 0.0, %v1122
      %v1124 = vpop.f32.mrf.mxu0
      %v1125 = vadd.f32 0.0, %v1124
      %1126 = vmatmul.bf16.gmra.mxu0 %v897
      %v1127 = vpop.f32.mrf.mxu0
      %v1128 = vadd.f32 0.0, %v1127
      %v1129 = vpop.f32.mrf.mxu0
      %v1130 = vadd.f32 0.0, %v1129
      %1131 = vmatmul.bf16.gmra.mxu0 %v900
      %v1132 = vpop.f32.mrf.mxu0
      %v1133 = vadd.f32 0.0, %v1132
      %v1134 = vpop.f32.mrf.mxu0
      %v1135 = vadd.f32 0.0, %v1134
      %1136 = vmatmul.bf16.gmra.mxu0 %v903
      %v1137 = vpop.f32.mrf.mxu0
      %v1138 = vadd.f32 0.0, %v1137
      %v1139 = vpop.f32.mrf.mxu0
      %v1140 = vadd.f32 0.0, %v1139
      %1141 = vmatmul.bf16.gmra.mxu0 %v906
      %v1142 = vpop.f32.mrf.mxu0
      %v1143 = vadd.f32 0.0, %v1142
      %v1144 = vpop.f32.mrf.mxu0
      %v1145 = vadd.f32 0.0, %v1144
      %1146 = vdwg.mxu0
      %v1147 = vtanh.pop %v918
      %v1148 = vtanh.pop %v920
      %v1149 = vtanh.pop %v923
      %v1150 = vtanh.pop %v925
      %v1151 = vtanh.pop %v928
      %v1152 = vtanh.pop %v930
      %v1153 = vtanh.pop %v933
      %v1154 = vtanh.pop %v935
      %v1155 = vtanh.pop %v938
      %v1156 = vtanh.pop %v940
      %v1157 = vtanh.pop %v943
      %v1158 = vtanh.pop %v945
      %v1159 = vtanh.pop %v948
      %v1160 = vtanh.pop %v950
      %v1161 = vtanh.pop %v953
      %v1162 = vtanh.pop %v955
      %v1163 = vtanh.pop %v958
      %v1164 = vtanh.pop %v960
      %v1165 = vtanh.pop %v963
      %v1166 = vtanh.pop %v965
      %v1167 = vtanh.pop %v968
      %v1168 = vtanh.pop %v970
      %v1169 = vtanh.pop %v973
      %v1170 = vtanh.pop %v975
      %v1171 = vtanh.pop %v978
      %v1172 = vtanh.pop %v980
      %v1173 = vtanh.pop %v983
      %v1174 = vtanh.pop %v985
      %v1175 = vtanh.pop %v988
      %v1176 = vtanh.pop %v990
      %v1177 = vtanh.pop %v993
      %v1178 = vtanh.pop %v995
      %v1179 = vtanh.pop %v998
      %v1180 = vtanh.pop %v1000
      %v1181 = vtanh.pop %v1003
      %v1182 = vtanh.pop %v1005
      %v1183 = vtanh.pop %v1008
      %v1184 = vtanh.pop %v1010
      %v1185 = vtanh.pop %v1013
      %v1186 = vtanh.pop %v1015
      %v1187 = vtanh.pop %v1018
      %v1188 = vtanh.pop %v1020
      %v1189 = vtanh.pop %v1023
      %v1190 = vtanh.pop %v1025
      %v1191 = vtanh.pop %v1028
      %v1192 = vtanh.pop %v1030
      %v1193 = vtanh.pop %v1033
      %v1194 = vtanh.pop %v1035
      %v1195 = vtanh.pop %v1038
      %v1196 = vtanh.pop %v1040
      %v1197 = vtanh.pop %v1043
      %v1198 = vtanh.pop %v1045
      %v1199 = vtanh.pop %v1048
      %v1200 = vtanh.pop %v1050
      %v1201 = vtanh.pop %v1053
      %v1202 = vtanh.pop %v1055
      %v1203 = vtanh.pop %v1058
      %v1204 = vtanh.pop %v1060
      %v1205 = vtanh.pop %v1063
      %v1206 = vtanh.pop %v1065
      %v1207 = vtanh.pop %v1068
      %v1208 = vtanh.pop %v1070
      %v1209 = vtanh.pop %v1073
      %v1210 = vtanh.pop %v1075
      %v1211 = vtanh.pop %v1078
      %v1212 = vtanh.pop %v1080
      %v1213 = vtanh.pop %v1083
      %v1214 = vtanh.pop %v1085
      %v1215 = vtanh.pop %v1088
      %v1216 = vtanh.pop %v1090
      %v1217 = vtanh.pop %v1093
      %v1218 = vtanh.pop %v1095
      %v1219 = vtanh.pop %v1098
      %v1220 = vtanh.pop %v1100
      %v1221 = vtanh.pop %v1103
      %v1222 = vtanh.pop %v1105
      %v1223 = vtanh.pop %v1108
      %v1224 = vtanh.pop %v1110
      %v1225 = vtanh.pop %v1113
      %v1226 = vtanh.pop %v1115
      %v1227 = vtanh.pop %v1118
      %v1228 = vtanh.pop %v1120
      %v1229 = vtanh.pop %v1123
      %v1230 = vtanh.pop %v1125
      %v1231 = vtanh.pop %v1128
      %v1232 = vtanh.pop %v1130
      %v1233 = vtanh.pop %v1133
      %v1234 = vtanh.pop %v1135
      %v1235 = vtanh.pop %v1138
      %v1236 = vtanh.pop %v1140
      %v1237 = vtanh.pop %v1143
      %v1238 = vtanh.pop %v1145
      %1239 = vst [vmem:[%s236] sm:$0xff] %v1147
      %1240 = vst [vmem:[%s236 + $0x8] sm:$0xff] %v1148
      %1241 = vst [vmem:[%s236 + $0x10] sm:$0xff] %v1149
      %1242 = vst [vmem:[%s236 + $0x18] sm:$0xff] %v1150
      %1243 = vst [vmem:[%s236 + $0x20] sm:$0xff] %v1151
      %1244 = vst [vmem:[%s236 + $0x28] sm:$0xff] %v1152
      %1245 = vst [vmem:[%s236 + $0x30] sm:$0xff] %v1153
      %1246 = vst [vmem:[%s236 + $0x38] sm:$0xff] %v1154
      %1247 = vst [vmem:[%s236 + $0x40] sm:$0xff] %v1155
      %1248 = vst [vmem:[%s236 + $0x48] sm:$0xff] %v1156
      %1249 = vst [vmem:[%s236 + $0x50] sm:$0xff] %v1157
      %1250 = vst [vmem:[%s236 + $0x58] sm:$0xff] %v1158
      %1251 = vst [vmem:[%s236 + $0x60] sm:$0xff] %v1159
      %1252 = vst [vmem:[%s236 + $0x68] sm:$0xff] %v1160
      %1253 = vst [vmem:[%s236 + $0x70] sm:$0xff] %v1161
      %1254 = vst [vmem:[%s236 + $0x78] sm:$0xff] %v1162
      %1255 = vst [vmem:[%s236 + $0x80] sm:$0xff] %v1163
      %1256 = vst [vmem:[%s236 + $0x88] sm:$0xff] %v1164
      %1257 = vst [vmem:[%s236 + $0x90] sm:$0xff] %v1165
      %1258 = vst [vmem:[%s236 + $0x98] sm:$0xff] %v1166
      %1259 = vst [vmem:[%s236 + $0xa0] sm:$0xff] %v1167
      %1260 = vst [vmem:[%s236 + $0xa8] sm:$0xff] %v1168
      %1261 = vst [vmem:[%s236 + $0xb0] sm:$0xff] %v1169
      %1262 = vst [vmem:[%s236 + $0xb8] sm:$0xff] %v1170
      %1263 = vst [vmem:[%s236 + $0xc0] sm:$0xff] %v1171
      %1264 = vst [vmem:[%s236 + $0xc8] sm:$0xff] %v1172
      %1265 = vst [vmem:[%s236 + $0xd0] sm:$0xff] %v1173
      %1266 = vst [vmem:[%s236 + $0xd8] sm:$0xff] %v1174
      %1267 = vst [vmem:[%s236 + $0xe0] sm:$0xff] %v1175
      %1268 = vst [vmem:[%s236 + $0xe8] sm:$0xff] %v1176
      %1269 = vst [vmem:[%s236 + $0xf0] sm:$0xff] %v1177
      %1270 = vst [vmem:[%s236 + $0xf8] sm:$0xff] %v1178
      %1271 = vst [vmem:[%s236 + $0x100] sm:$0xff] %v1179
      %1272 = vst [vmem:[%s236 + $0x108] sm:$0xff] %v1180
      %1273 = vst [vmem:[%s236 + $0x110] sm:$0xff] %v1181
      %1274 = vst [vmem:[%s236 + $0x118] sm:$0xff] %v1182
      %1275 = vst [vmem:[%s236 + $0x120] sm:$0xff] %v1183
      %1276 = vst [vmem:[%s236 + $0x128] sm:$0xff] %v1184
      %1277 = vst [vmem:[%s236 + $0x130] sm:$0xff] %v1185
      %1278 = vst [vmem:[%s236 + $0x138] sm:$0xff] %v1186
      %1279 = vst [vmem:[%s236 + $0x140] sm:$0xff] %v1187
      %1280 = vst [vmem:[%s236 + $0x148] sm:$0xff] %v1188
      %1281 = vst [vmem:[%s236 + $0x150] sm:$0xff] %v1189
      %1282 = vst [vmem:[%s236 + $0x158] sm:$0xff] %v1190
      %1283 = vst [vmem:[%s236 + $0x160] sm:$0xff] %v1191
      %1284 = vst [vmem:[%s236 + $0x168] sm:$0xff] %v1192
      %1285 = vst [vmem:[%s236 + $0x170] sm:$0xff] %v1193
      %1286 = vst [vmem:[%s236 + $0x178] sm:$0xff] %v1194
      %1287 = vst [vmem:[%s236 + $0x180] sm:$0xff] %v1195
      %1288 = vst [vmem:[%s236 + $0x188] sm:$0xff] %v1196
      %1289 = vst [vmem:[%s236 + $0x190] sm:$0xff] %v1197
      %1290 = vst [vmem:[%s236 + $0x198] sm:$0xff] %v1198
      %1291 = vst [vmem:[%s236 + $0x1a0] sm:$0xff] %v1199
      %1292 = vst [vmem:[%s236 + $0x1a8] sm:$0xff] %v1200
      %1293 = vst [vmem:[%s236 + $0x1b0] sm:$0xff] %v1201
      %1294 = vst [vmem:[%s236 + $0x1b8] sm:$0xff] %v1202
      %1295 = vst [vmem:[%s236 + $0x1c0] sm:$0xff] %v1203
      %1296 = vst [vmem:[%s236 + $0x1c8] sm:$0xff] %v1204
      %1297 = vst [vmem:[%s236 + $0x1d0] sm:$0xff] %v1205
      %1298 = vst [vmem:[%s236 + $0x1d8] sm:$0xff] %v1206
      %1299 = vst [vmem:[%s236 + $0x1e0] sm:$0xff] %v1207
      %1300 = vst [vmem:[%s236 + $0x1e8] sm:$0xff] %v1208
      %1301 = vst [vmem:[%s236 + $0x1f0] sm:$0xff] %v1209
      %1302 = vst [vmem:[%s236 + $0x1f8] sm:$0xff] %v1210
      %1303 = vst [vmem:[%s236 + $0x200] sm:$0xff] %v1211
      %1304 = vst [vmem:[%s236 + $0x208] sm:$0xff] %v1212
      %1305 = vst [vmem:[%s236 + $0x210] sm:$0xff] %v1213
      %1306 = vst [vmem:[%s236 + $0x218] sm:$0xff] %v1214
      %1307 = vst [vmem:[%s236 + $0x220] sm:$0xff] %v1215
      %1308 = vst [vmem:[%s236 + $0x228] sm:$0xff] %v1216
      %1309 = vst [vmem:[%s236 + $0x230] sm:$0xff] %v1217
      %1310 = vst [vmem:[%s236 + $0x238] sm:$0xff] %v1218
      %1311 = vst [vmem:[%s236 + $0x240] sm:$0xff] %v1219
      %1312 = vst [vmem:[%s236 + $0x248] sm:$0xff] %v1220
      %1313 = vst [vmem:[%s236 + $0x250] sm:$0xff] %v1221
      %1314 = vst [vmem:[%s236 + $0x258] sm:$0xff] %v1222
      %1315 = vst [vmem:[%s236 + $0x260] sm:$0xff] %v1223
      %1316 = vst [vmem:[%s236 + $0x268] sm:$0xff] %v1224
      %1317 = vst [vmem:[%s236 + $0x270] sm:$0xff] %v1225
      %1318 = vst [vmem:[%s236 + $0x278] sm:$0xff] %v1226
      %1319 = vst [vmem:[%s236 + $0x280] sm:$0xff] %v1227
      %1320 = vst [vmem:[%s236 + $0x288] sm:$0xff] %v1228
      %1321 = vst [vmem:[%s236 + $0x290] sm:$0xff] %v1229
      %1322 = vst [vmem:[%s236 + $0x298] sm:$0xff] %v1230
      %1323 = vst [vmem:[%s236 + $0x2a0] sm:$0xff] %v1231
      %1324 = vst [vmem:[%s236 + $0x2a8] sm:$0xff] %v1232
      %1325 = vst [vmem:[%s236 + $0x2b0] sm:$0xff] %v1233
      %1326 = vst [vmem:[%s236 + $0x2b8] sm:$0xff] %v1234
      %1327 = vst [vmem:[%s236 + $0x2c0] sm:$0xff] %v1235
      %1328 = vst [vmem:[%s236 + $0x2c8] sm:$0xff] %v1236
      %1329 = vst [vmem:[%s236 + $0x2d0] sm:$0xff] %v1237
      %1330 = vst [vmem:[%s236 + $0x2d8] sm:$0xff] %v1238
      %s1331 = smul.u32 92, %s19
      %p1332 = scmp.lt.s32.totalorder %s1331, 275
      %s1333 = scalar_select %p1332, %s1331, 275
      %p1334 = scmp.lt.s32.totalorder %s20, 0
      %s1335 = scalar_select %p1334, %s20, 0
      %s1336 = sadd.s32 %s1335, %s1333
      %s1337 = smul.addr %s1336, 8
      %s1338 = scalar_lea.vmem %s4, %s1337
      // Predicated region
      $region37: #{generator_forward.17} parent=35 // pred_check
        %p1339 = pneg %p141
      $region38: #{generator_forward.17} parent=35 // pred_check_branch
        %1341 = sbr.rel (%p1339) target = $region40
      $region39: #{generator_forward.17} parent=35 // pred_region
        %s1342 = smul.u32 92, %s19
      $region40: #{generator_forward.17} parent=35 // pred_fallthru
        _
    $region36: #{generator_forward.17} parent=5 // pred_fallthru
      _
    %p1343 = scmp.le.s32.totalorder 2, %s10
    // Predicated region
    $region41: #{generator_forward.17} parent=5 // pred_check
      %p1344 = pneg %p1343
    $region42: #{generator_forward.17} parent=5 // pred_check_branch
      %1346 = sbr.rel (%p1344) target = $region44
    $region43: #{generator_forward.17} parent=5 // pred_region
      %s1347 = ssub.s32 %s10, 2
      // Predicated region
      $region45: #{generator_forward.17} parent=43 // pred_check
        %p1348 = pneg %p147
      $region46: #{generator_forward.17} parent=43 // pred_check_branch
        %1350 = sbr.rel (%p1348) target = $region48
      $region47: #{generator_forward.17} parent=43 // pred_region
        %s1351 = smul.u32 92, %s21
        %p1352 = scmp.lt.s32.totalorder %s1351, 275
        %s1353 = scalar_select %p1352, %s1351, 275
        %p1354 = scmp.lt.s32.totalorder %s22, 0
        %s1355 = scalar_select %p1354, %s22, 0
        %s1356 = sadd.s32 %s1355, %s1353
        %s1357 = smul.addr %s1356, 8
        %s1358 = scalar_lea.vmem %s4, %s1357
      $region48: #{generator_forward.17} parent=43 // pred_fallthru
        _
    $region44: #{generator_forward.17} parent=5 // pred_fallthru
      _
  $region6: #{generator_forward.17} parent=0 // loop_footer
    %s14 = sadd.s32 1, %s10
  $region7: #{generator_forward.17} parent=0 // loop_footer_branch
    %9 = sbr.rel target = $region3
  $region8: #{generator_forward.17} parent=0 // loop_exit
    _

</llo_original>
